<compile_context>
chip_gen: v7x
topology: tpu7x:2x2x1
jax: 0.10.0
libtpu: 0.0.40
codegen_flags: <defaults>
</compile_context>

<pallas_src>
import functools

import jax
import jax.numpy as jnp
from jax.experimental import pallas as pl
from jax.experimental.pallas import tpu as pltpu


# ---------------------------------------------------------------------------
# kernels
# ---------------------------------------------------------------------------

def _build_conv_stats_kernel(th, W, IC, OCP, fold):
    """Pass 1: conv row-strip + per-tile per-channel sum / sum-of-squares."""
    TM = th * W

    def kernel(x_ref, w_ref, y_ref, psum_ref, pssq_ref, acc_ref):
        # x_ref: (1, th+2, W+2, IC) halo'd row strip of the zero-padded image.
        win = x_ref[0]

        # Three width-shifted windows, built ONCE per step and reused across kh
        # (3 sublane shifts instead of 9 misaligned tap materializations).
        shifted = [win[:, kw:kw + W, :] for kw in range(3)]

        def accum(first, contrib):
            if first:
                acc_ref[...] = contrib          # first write: no zeros-init sweep
            else:
                acc_ref[...] += contrib         # VMEM-ref (not value-chain) accumulation

        if fold:
            # kw folded into the MXU contraction dim: 3 matmuls with K = 3*IC.
            # IC % 128 == 0 here, so the lane concat is tile-aligned (block copies).
            win3 = jnp.concatenate(shifted, axis=-1)          # (th+2, W, 3*IC)
            for kh in range(3):
                tap = win3[kh:kh + th].reshape(TM, 3 * IC)    # major-dim slice + cheap reshape
                accum(kh == 0,
                      jnp.dot(tap, w_ref[kh],
                              preferred_element_type=jnp.float32))
        else:
            # Small-IC fallback (lane concat would be unaligned): 9 taps with K = IC.
            # TODO(synk): extend kw-folding to IC % 128 != 0 (unaligned lane concat).
            for kh in range(3):
                for kw in range(3):
                    tap = shifted[kw][kh:kh + th].reshape(TM, IC)
                    accum(kh == 0 and kw == 0,
                          jnp.dot(tap, w_ref[kh * 3 + kw],
                                  preferred_element_type=jnp.float32))

        acc = acc_ref[...]
        # Lane-dense conv tile stored in the (narrow) operand dtype; BN statistics
        # are taken from the f32 accumulator, never from the downcast tile.
        y_ref[...] = acc.astype(y_ref.dtype)
        psum_ref[...] = jnp.sum(acc, axis=0, keepdims=True)[None]
        pssq_ref[...] = jnp.sum(acc * acc, axis=0, keepdims=True)[None]

    return kernel


def _bn_apply_kernel(y_ref, scale_ref, shift_ref, o_ref):
    """Pass 2: y -> y * scale + shift  (scale/shift precomputed, all math f32)."""
    y = y_ref[...].astype(jnp.float32)
    o_ref[...] = (y * scale_ref[...] + shift_ref[...]).astype(o_ref.dtype)


# ---------------------------------------------------------------------------
# helpers
# ---------------------------------------------------------------------------

def _round_up(x, m):
    return (x + m - 1) // m * m


def _pick_row_tile(H, W, target_rows=1024):
    """Largest divisor th of H with (th*W) % 8 == 0 and th*W <= target_rows."""
    cands = [t for t in range(1, H + 1) if H % t == 0 and (t * W) % 8 == 0]
    if not cands:
        raise ValueError(f"no legal row tile for H={H}, W={W}")
    small = [t for t in cands if t * W <= target_rows]
    return max(small) if small else min(cands)


def _pick_flat_rows(M, OCP, in_itemsize, target_bytes=8 << 20, max_rows=8192):
    """Largest multiple-of-8 divisor of M fitting the per-block byte budget."""
    bytes_per_row = OCP * (in_itemsize + 4)
    best = 0
    r = 8
    while r <= min(M, max_rows):
        if M % r == 0 and r * bytes_per_row <= target_bytes:
            best = max(best, r)
        r += 8
    if best:
        return best
    r = 8
    while r <= M:
        if M % r == 0:
            return r
        r += 8
    raise ValueError(f"M={M} must be a multiple of 8")


def _pick_vmem_limit():
    """Generation-aware scoped-VMEM limit (≈48 MiB on v7x, ≈96 MiB on v5e/v6e)."""
    try:
        cap = int(pltpu.get_tpu_info().vmem_capacity_bytes)
    except Exception:
        cap = 64 * 1024 * 1024
    return int(min(max(32 * 1024 * 1024, cap * 3 // 4), 96 * 1024 * 1024))


def prepare_params(weight, gamma, beta):
    """One-time parameter prep.

    weight (OC, IC, 3, 3) -> (3, 3*IC, OC_pad) when IC % 128 == 0 (kw folded into K),
    else (9, IC, OC_pad).  gamma/beta padded to OC_pad lanes (f32).
    """
    OC, IC, KH, KW = weight.shape
    assert KH == 3 and KW == 3, "this kernel implements the 3x3/s1/p1 ConvBn2d"
    ocp = _round_up(OC, 128)
    w = jnp.transpose(weight, (2, 3, 1, 0))              # (kh, kw, ic, oc)
    if IC % 128 == 0:
        w_prep = w.reshape(3, 3 * IC, OC)                # K index = kw*IC + ic
    else:
        w_prep = w.reshape(9, IC, OC)                    # one tap per (kh, kw)
    w_prep = jnp.pad(w_prep, ((0, 0), (0, 0), (0, ocp - OC)))
    gamma_p = jnp.pad(gamma.astype(jnp.float32), (0, ocp - OC)).reshape(1, ocp)
    beta_p = jnp.pad(beta.astype(jnp.float32), (0, ocp - OC)).reshape(1, ocp)
    return w_prep, gamma_p, beta_p, ocp


# ---------------------------------------------------------------------------
# wrappers
# ---------------------------------------------------------------------------

def conv_bn_2d_nhwc(x_nhwc, w_prep, gamma_p, beta_p, *, th=None,
                    operand_dtype=jnp.bfloat16, eps=1e-5):
    """Fused Conv3x3(s1,p1,no-bias) + training-mode BatchNorm on NHWC input.

    Returns (N, H, W, OC_pad) float32; slice [..., :OC] outside.
    """
    N, H, W, IC = x_nhwc.shape
    OCP = w_prep.shape[-1]
    fold = (w_prep.shape[0] == 3)
    if fold:
        assert w_prep.shape == (3, 3 * IC, OCP)
    else:
        assert w_prep.shape == (9, IC, OCP)
    assert OCP % 128 == 0
    assert W % 8 == 0, "TODO(synk): support W not a multiple of 8"

    if th is None:
        th = _pick_row_tile(H, W)
    assert H % th == 0 and (th * W) % 8 == 0
    HB = H // th                # row strips per image
    G = N * HB                  # pass-1 grid size
    TM = th * W                 # matmul rows per grid step
    M = N * H * W               # BN reduction size
    Wp = W + 2
    itemsize = jnp.dtype(operand_dtype).itemsize
    vmem_limit = _pick_vmem_limit()

    # Halo'd row strips: input VMEM is O(tile) instead of O(whole padded image),
    # and every strip is fetched exactly once with full double-buffer overlap.
    # TODO(synk): the 1-pixel zero halo is still materialized on the XLA side
    # (pad + strip gather); masking boundary taps in-kernel would remove it.
    x_pad = jnp.pad(x_nhwc, ((0, 0), (1, 1), (1, 1), (0, 0)))
    x_strips = jnp.stack(
        [x_pad[:, j * th:j * th + th + 2] for j in range(HB)], axis=1,
    ).reshape(G, th + 2, Wp, IC).astype(operand_dtype)
    w_prep = w_prep.astype(operand_dtype)

    # ---- pass 1: conv tiles + per-tile channel sum / sumsq ----------------
    conv_kernel = _build_conv_stats_kernel(th, W, IC, OCP, fold)
    p1_bytes = (G * (th + 2) * Wp * IC * itemsize + 9 * IC * OCP * itemsize
                + M * OCP * itemsize + 2 * G * OCP * 4)
    y, psum, pssq = pl.pallas_call(
        conv_kernel,
        out_shape=(
            jax.ShapeDtypeStruct((M, OCP), operand_dtype),    # conv intermediate
            jax.ShapeDtypeStruct((G, 1, OCP), jnp.float32),   # per-tile sum
            jax.ShapeDtypeStruct((G, 1, OCP), jnp.float32),   # per-tile sum of squares
        ),
        grid=(G,),
        in_specs=[
            pl.BlockSpec((1, th + 2, Wp, IC), lambda i: (i, 0, 0, 0)),
            pl.BlockSpec(w_prep.shape, lambda i: (0, 0, 0)),
        ],
        out_specs=(
            pl.BlockSpec((TM, OCP), lambda i: (i, 0)),
            pl.BlockSpec((1, 1, OCP), lambda i: (i, 0, 0)),
            pl.BlockSpec((1, 1, OCP), lambda i: (i, 0, 0)),
        ),
        scratch_shapes=[pltpu.VMEM((TM, OCP), jnp.float32)],
        compiler_params=pltpu.CompilerParams(
            dimension_semantics=("parallel",),    # no resident accumulator: megacore-OK
            vmem_limit_bytes=vmem_limit),
        cost_estimate=pl.CostEstimate(
            flops=2 * M * 9 * IC * OCP, transcendentals=0,
            bytes_accessed=int(p1_bytes)),
    )(x_strips, w_prep)

    # ---- tiny (1, OCP) stats reduction + affine fold (plain JAX) ----------
    inv_m = 1.0 / float(M)
    ch_sum = jnp.sum(psum, axis=0)                      # (1, OCP)
    ch_ssq = jnp.sum(pssq, axis=0)
    mean = ch_sum * inv_m
    # NOTE: E[x^2] - mean^2 in f32 (biased var, as BatchNorm normalization uses);
    # adequate here, consider a shifted/Welford accumulation for huge N*H*W.
    var = jnp.maximum(ch_ssq * inv_m - mean * mean, 0.0)
    scale = gamma_p * jax.lax.rsqrt(var + eps)
    shift = beta_p - mean * scale

    # ---- pass 2: normalize; block size decoupled from the conv tile -------
    R2 = _pick_flat_rows(M, OCP, itemsize)
    p2_bytes = M * OCP * (itemsize + 4) + 2 * OCP * 4
    out = pl.pallas_call(
        _bn_apply_kernel,
        out_shape=jax.ShapeDtypeStruct((M, OCP), jnp.float32),
        grid=(M // R2,),
        in_specs=[
            pl.BlockSpec((R2, OCP), lambda i: (i, 0)),
            pl.BlockSpec((1, OCP), lambda i: (0, 0)),
            pl.BlockSpec((1, OCP), lambda i: (0, 0)),
        ],
        out_specs=pl.BlockSpec((R2, OCP), lambda i: (i, 0)),
        compiler_params=pltpu.CompilerParams(
            dimension_semantics=("parallel",),
            vmem_limit_bytes=vmem_limit),
        cost_estimate=pl.CostEstimate(
            flops=2 * M * OCP, transcendentals=0,
            bytes_accessed=int(p2_bytes)),
    )(y, scale, shift)

    # TODO(synk): for late layers where M*OCP fits in VMEM, fuse the two passes
    # into one pallas_call (revisit grid) and skip the HBM round trip entirely.
    return out.reshape(N, H, W, OCP)


def conv_bn_2d(x, weight, gamma, beta, *, th=None, operand_dtype=jnp.bfloat16):
    """NCHW-compatible wrapper matching the PyTorch ConvBn2d forward.

    x: (N, C, H, W) f32;  weight: (OC, IC, 3, 3);  gamma/beta: (OC,).
    In a real network keep activations NHWC end-to-end and call `prepare_params`
    once per layer; the transposes here are interface glue only.
    """
    N, C, H, W = x.shape
    OC = weight.shape[0]
    assert weight.shape[1] == C
    w_prep, gamma_p, beta_p, _ = prepare_params(weight, gamma, beta)
    x_nhwc = jnp.transpose(x, (0, 2, 3, 1))
    y = conv_bn_2d_nhwc(x_nhwc, w_prep, gamma_p, beta_p, th=th,
                        operand_dtype=operand_dtype)
    y = y[..., :OC]                                        # drop lane padding
    return jnp.transpose(y, (0, 3, 1, 2)).astype(x.dtype)  # back to NCHW
    # TODO(synk): BatchNorm2d's training-mode running_mean/var buffer update is a
    # side effect that does not affect the forward output and is not modeled here.


# ---------------------------------------------------------------------------
# reference + self-test
# ---------------------------------------------------------------------------

def _reference(x, weight, gamma, beta, eps=1e-5):
    y = jax.lax.conv_general_dilated(
        x, weight, window_strides=(1, 1), padding=((1, 1), (1, 1)),
        dimension_numbers=("NCHW", "OIHW", "NCHW"))
    mean = jnp.mean(y, axis=(0, 2, 3), keepdims=True)
    var = jnp.mean((y - mean) ** 2, axis=(0, 2, 3), keepdims=True)
    g = gamma.reshape(1, -1, 1, 1)
    b = beta.reshape(1, -1, 1, 1)
    return (y - mean) * jax.lax.rsqrt(var + eps) * g + b


if __name__ == "__main__":
    key = jax.random.PRNGKey(0)
    kx, kw_, kg, kb, kx2, kw2 = jax.random.split(key, 6)

    # ---- small-IC path (9-tap fallback), shapes from the module spec -------
    N, IC, OC, H, W = 2, 4, 8, 16, 16
    x = jax.random.normal(kx, (N, IC, H, W), dtype=jnp.float32)
    weight = jax.random.normal(kw_, (OC, IC, 3, 3), dtype=jnp.float32) * 0.1
    gamma = 1.0 + 0.1 * jax.random.normal(kg, (OC,), dtype=jnp.float32)
    beta = 0.1 * jax.random.normal(kb, (OC,), dtype=jnp.float32)
    ref = _reference(x, weight, gamma, beta)

    # f32 operands & f32 intermediate: tight check (th=8 -> multi-step grid).
    run_f32 = jax.jit(functools.partial(conv_bn_2d, th=8, operand_dtype=jnp.float32))
    out_f32 = jax.block_until_ready(run_f32(x, weight, gamma, beta))
    if out_f32.shape != (N, OC, H, W):
        raise AssertionError(f"bad output shape {out_f32.shape}")
    if not jnp.allclose(out_f32, ref, atol=1e-4, rtol=1e-4):
        raise AssertionError("Pallas ConvBn2d (f32, small IC) does not match reference")

    # bf16 operands + bf16 stored intermediate (BN math stays f32), default tiling.
    run_bf16 = jax.jit(functools.partial(conv_bn_2d, operand_dtype=jnp.bfloat16))
    out_bf16 = jax.block_until_ready(run_bf16(x, weight, gamma, beta))
    if not jnp.allclose(out_bf16, ref, atol=3e-2, rtol=3e-2):
        raise AssertionError("Pallas ConvBn2d (bf16, small IC) does not match reference")

    # ---- kw-folded path (IC % 128 == 0): K = 3*IC matmuls ------------------
    N2, IC2, OC2, H2, W2 = 2, 128, 8, 8, 8
    x2 = jax.random.normal(kx2, (N2, IC2, H2, W2), dtype=jnp.float32)
    weight2 = jax.random.normal(kw2, (OC2, IC2, 3, 3), dtype=jnp.float32) * 0.05
    ref2 = _reference(x2, weight2, gamma, beta)

    out2_f32 = jax.block_until_ready(
        jax.jit(functools.partial(conv_bn_2d, operand_dtype=jnp.float32))(
            x2, weight2, gamma, beta))
    if not jnp.allclose(out2_f32, ref2, atol=1e-4, rtol=1e-4):
        raise AssertionError("Pallas ConvBn2d (f32, folded K) does not match reference")

    out2_bf16 = jax.block_until_ready(
        jax.jit(functools.partial(conv_bn_2d, operand_dtype=jnp.bfloat16))(
            x2, weight2, gamma, beta))
    if not jnp.allclose(out2_bf16, ref2, atol=3e-2, rtol=3e-2):
        raise AssertionError("Pallas ConvBn2d (bf16, folded K) does not match reference")

    print("KERNEL_OK")
</pallas_src>

<mosaic_0001>
module attributes {stable_mosaic.version = 11 : i64} {
  func.func @kernel(%arg0: i32, %arg1: memref<1x10x18x4xf32, #tpu.memory_space<vmem>>, %arg2: memref<9x4x128xf32, #tpu.memory_space<vmem>>, %arg3: memref<128x128xf32, #tpu.memory_space<vmem>>, %arg4: memref<1x1x128xf32, #tpu.memory_space<vmem>>, %arg5: memref<1x1x128xf32, #tpu.memory_space<vmem>>, %arg6: memref<128x128xf32, #tpu.memory_space<vmem>>) attributes {dimension_semantics = [#tpu.dimension_semantics<parallel>], iteration_bounds = array<i64: 4>, scalar_prefetch = 0 : i64, scratch_operands = 1 : i64, tpu.core_type = #tpu.core_type<tc>, window_params = [{transform_indices = @transform_0, window_bounds = array<i64: 1, 10, 18, 4>}, {pipeline_mode = #tpu.pipeline_mode<synchronous>, transform_indices = @transform_1, window_bounds = array<i64: 9, 4, 128>}, {transform_indices = @transform_2, window_bounds = array<i64: 128, 128>}, {transform_indices = @transform_3, window_bounds = array<i64: 1, 1, 128>}, {transform_indices = @transform_4, window_bounds = array<i64: 1, 1, 128>}]} {
    %c0 = arith.constant 0 : index
    %c0_0 = arith.constant 0 : index
    %c0_1 = arith.constant 0 : index
    %c0_2 = arith.constant 0 : index
    %0 = vector.load %arg1[%c0, %c0_0, %c0_1, %c0_2] : memref<1x10x18x4xf32, #tpu.memory_space<vmem>>, vector<1x10x18x4xf32>
    %1 = vector.shape_cast %0 : vector<1x10x18x4xf32> to vector<10x18x4xf32>
    %2 = vector.extract_strided_slice %1 {offsets = [0, 0, 0], sizes = [10, 16, 4], strides = [1, 1, 1]} : vector<10x18x4xf32> to vector<10x16x4xf32>
    %3 = vector.extract_strided_slice %1 {offsets = [0, 1, 0], sizes = [10, 16, 4], strides = [1, 1, 1]} : vector<10x18x4xf32> to vector<10x16x4xf32>
    %4 = vector.extract_strided_slice %1 {offsets = [0, 2, 0], sizes = [10, 16, 4], strides = [1, 1, 1]} : vector<10x18x4xf32> to vector<10x16x4xf32>
    %5 = vector.extract_strided_slice %2 {offsets = [0, 0, 0], sizes = [8, 16, 4], strides = [1, 1, 1]} : vector<10x16x4xf32> to vector<8x16x4xf32>
    %6 = vector.shape_cast %5 : vector<8x16x4xf32> to vector<128x4xf32>
    %c0_3 = arith.constant 0 : index
    %c0_4 = arith.constant 0 : index
    %c0_5 = arith.constant 0 : index
    %7 = vector.load %arg2[%c0_3, %c0_4, %c0_5] : memref<9x4x128xf32, #tpu.memory_space<vmem>>, vector<1x4x128xf32>
    %8 = vector.shape_cast %7 : vector<1x4x128xf32> to vector<4x128xf32>
    %cst = arith.constant dense<0.000000e+00> : vector<128x128xf32>
    %9 = tpu.matmul %6, %8, %cst {dimension_numbers = #tpu.dot_dimension_numbers<[1], [0], [0], [1], [0, 0, 1, 1], [], []>} : vector<128x4xf32>, vector<4x128xf32>, vector<128x128xf32> -> vector<128x128xf32>
    %c0_6 = arith.constant 0 : index
    %c0_7 = arith.constant 0 : index
    %10 = vector.load %arg6[%c0_6, %c0_7] : memref<128x128xf32, #tpu.memory_space<vmem>>, vector<128x128xf32>
    tpu.vector_store %arg6[%c0_6, %c0_7], %9 {strides = array<i32>} : memref<128x128xf32, #tpu.memory_space<vmem>>, vector<128x128xf32>,
    %11 = vector.extract_strided_slice %3 {offsets = [0, 0, 0], sizes = [8, 16, 4], strides = [1, 1, 1]} : vector<10x16x4xf32> to vector<8x16x4xf32>
    %12 = vector.shape_cast %11 : vector<8x16x4xf32> to vector<128x4xf32>
    %c1 = arith.constant 1 : index
    %c0_8 = arith.constant 0 : index
    %c0_9 = arith.constant 0 : index
    %13 = vector.load %arg2[%c1, %c0_8, %c0_9] : memref<9x4x128xf32, #tpu.memory_space<vmem>>, vector<1x4x128xf32>
    %14 = vector.shape_cast %13 : vector<1x4x128xf32> to vector<4x128xf32>
    %cst_10 = arith.constant dense<0.000000e+00> : vector<128x128xf32>
    %15 = tpu.matmul %12, %14, %cst_10 {dimension_numbers = #tpu.dot_dimension_numbers<[1], [0], [0], [1], [0, 0, 1, 1], [], []>} : vector<128x4xf32>, vector<4x128xf32>, vector<128x128xf32> -> vector<128x128xf32>
    %c0_11 = arith.constant 0 : index
    %c0_12 = arith.constant 0 : index
    %16 = vector.load %arg6[%c0_11, %c0_12] : memref<128x128xf32, #tpu.memory_space<vmem>>, vector<128x128xf32>
    %17 = arith.addf %16, %15 : vector<128x128xf32>
    %c0_13 = arith.constant 0 : index
    %c0_14 = arith.constant 0 : index
    %18 = vector.load %arg6[%c0_13, %c0_14] : memref<128x128xf32, #tpu.memory_space<vmem>>, vector<128x128xf32>
    tpu.vector_store %arg6[%c0_13, %c0_14], %17 {strides = array<i32>} : memref<128x128xf32, #tpu.memory_space<vmem>>, vector<128x128xf32>,
    %19 = vector.extract_strided_slice %4 {offsets = [0, 0, 0], sizes = [8, 16, 4], strides = [1, 1, 1]} : vector<10x16x4xf32> to vector<8x16x4xf32>
    %20 = vector.shape_cast %19 : vector<8x16x4xf32> to vector<128x4xf32>
    %c2 = arith.constant 2 : index
    %c0_15 = arith.constant 0 : index
    %c0_16 = arith.constant 0 : index
    %21 = vector.load %arg2[%c2, %c0_15, %c0_16] : memref<9x4x128xf32, #tpu.memory_space<vmem>>, vector<1x4x128xf32>
    %22 = vector.shape_cast %21 : vector<1x4x128xf32> to vector<4x128xf32>
    %cst_17 = arith.constant dense<0.000000e+00> : vector<128x128xf32>
    %23 = tpu.matmul %20, %22, %cst_17 {dimension_numbers = #tpu.dot_dimension_numbers<[1], [0], [0], [1], [0, 0, 1, 1], [], []>} : vector<128x4xf32>, vector<4x128xf32>, vector<128x128xf32> -> vector<128x128xf32>
    %c0_18 = arith.constant 0 : index
    %c0_19 = arith.constant 0 : index
    %24 = vector.load %arg6[%c0_18, %c0_19] : memref<128x128xf32, #tpu.memory_space<vmem>>, vector<128x128xf32>
    %25 = arith.addf %24, %23 : vector<128x128xf32>
    %c0_20 = arith.constant 0 : index
    %c0_21 = arith.constant 0 : index
    %26 = vector.load %arg6[%c0_20, %c0_21] : memref<128x128xf32, #tpu.memory_space<vmem>>, vector<128x128xf32>
    tpu.vector_store %arg6[%c0_20, %c0_21], %25 {strides = array<i32>} : memref<128x128xf32, #tpu.memory_space<vmem>>, vector<128x128xf32>,
    %27 = vector.extract_strided_slice %2 {offsets = [1, 0, 0], sizes = [8, 16, 4], strides = [1, 1, 1]} : vector<10x16x4xf32> to vector<8x16x4xf32>
    %28 = vector.shape_cast %27 : vector<8x16x4xf32> to vector<128x4xf32>
    %c3 = arith.constant 3 : index
    %c0_22 = arith.constant 0 : index
    %c0_23 = arith.constant 0 : index
    %29 = vector.load %arg2[%c3, %c0_22, %c0_23] : memref<9x4x128xf32, #tpu.memory_space<vmem>>, vector<1x4x128xf32>
    %30 = vector.shape_cast %29 : vector<1x4x128xf32> to vector<4x128xf32>
    %cst_24 = arith.constant dense<0.000000e+00> : vector<128x128xf32>
    %31 = tpu.matmul %28, %30, %cst_24 {dimension_numbers = #tpu.dot_dimension_numbers<[1], [0], [0], [1], [0, 0, 1, 1], [], []>} : vector<128x4xf32>, vector<4x128xf32>, vector<128x128xf32> -> vector<128x128xf32>
    %c0_25 = arith.constant 0 : index
    %c0_26 = arith.constant 0 : index
    %32 = vector.load %arg6[%c0_25, %c0_26] : memref<128x128xf32, #tpu.memory_space<vmem>>, vector<128x128xf32>
    %33 = arith.addf %32, %31 : vector<128x128xf32>
    %c0_27 = arith.constant 0 : index
    %c0_28 = arith.constant 0 : index
    %34 = vector.load %arg6[%c0_27, %c0_28] : memref<128x128xf32, #tpu.memory_space<vmem>>, vector<128x128xf32>
    tpu.vector_store %arg6[%c0_27, %c0_28], %33 {strides = array<i32>} : memref<128x128xf32, #tpu.memory_space<vmem>>, vector<128x128xf32>,
    %35 = vector.extract_strided_slice %3 {offsets = [1, 0, 0], sizes = [8, 16, 4], strides = [1, 1, 1]} : vector<10x16x4xf32> to vector<8x16x4xf32>
    %36 = vector.shape_cast %35 : vector<8x16x4xf32> to vector<128x4xf32>
    %c4 = arith.constant 4 : index
    %c0_29 = arith.constant 0 : index
    %c0_30 = arith.constant 0 : index
    %37 = vector.load %arg2[%c4, %c0_29, %c0_30] : memref<9x4x128xf32, #tpu.memory_space<vmem>>, vector<1x4x128xf32>
    %38 = vector.shape_cast %37 : vector<1x4x128xf32> to vector<4x128xf32>
    %cst_31 = arith.constant dense<0.000000e+00> : vector<128x128xf32>
    %39 = tpu.matmul %36, %38, %cst_31 {dimension_numbers = #tpu.dot_dimension_numbers<[1], [0], [0], [1], [0, 0, 1, 1], [], []>} : vector<128x4xf32>, vector<4x128xf32>, vector<128x128xf32> -> vector<128x128xf32>
    %c0_32 = arith.constant 0 : index
    %c0_33 = arith.constant 0 : index
    %40 = vector.load %arg6[%c0_32, %c0_33] : memref<128x128xf32, #tpu.memory_space<vmem>>, vector<128x128xf32>
    %41 = arith.addf %40, %39 : vector<128x128xf32>
    %c0_34 = arith.constant 0 : index
    %c0_35 = arith.constant 0 : index
    %42 = vector.load %arg6[%c0_34, %c0_35] : memref<128x128xf32, #tpu.memory_space<vmem>>, vector<128x128xf32>
    tpu.vector_store %arg6[%c0_34, %c0_35], %41 {strides = array<i32>} : memref<128x128xf32, #tpu.memory_space<vmem>>, vector<128x128xf32>,
    %43 = vector.extract_strided_slice %4 {offsets = [1, 0, 0], sizes = [8, 16, 4], strides = [1, 1, 1]} : vector<10x16x4xf32> to vector<8x16x4xf32>
    %44 = vector.shape_cast %43 : vector<8x16x4xf32> to vector<128x4xf32>
    %c5 = arith.constant 5 : index
    %c0_36 = arith.constant 0 : index
    %c0_37 = arith.constant 0 : index
    %45 = vector.load %arg2[%c5, %c0_36, %c0_37] : memref<9x4x128xf32, #tpu.memory_space<vmem>>, vector<1x4x128xf32>
    %46 = vector.shape_cast %45 : vector<1x4x128xf32> to vector<4x128xf32>
    %cst_38 = arith.constant dense<0.000000e+00> : vector<128x128xf32>
    %47 = tpu.matmul %44, %46, %cst_38 {dimension_numbers = #tpu.dot_dimension_numbers<[1], [0], [0], [1], [0, 0, 1, 1], [], []>} : vector<128x4xf32>, vector<4x128xf32>, vector<128x128xf32> -> vector<128x128xf32>
    %c0_39 = arith.constant 0 : index
    %c0_40 = arith.constant 0 : index
    %48 = vector.load %arg6[%c0_39, %c0_40] : memref<128x128xf32, #tpu.memory_space<vmem>>, vector<128x128xf32>
    %49 = arith.addf %48, %47 : vector<128x128xf32>
    %c0_41 = arith.constant 0 : index
    %c0_42 = arith.constant 0 : index
    %50 = vector.load %arg6[%c0_41, %c0_42] : memref<128x128xf32, #tpu.memory_space<vmem>>, vector<128x128xf32>
    tpu.vector_store %arg6[%c0_41, %c0_42], %49 {strides = array<i32>} : memref<128x128xf32, #tpu.memory_space<vmem>>, vector<128x128xf32>,
    %51 = vector.extract_strided_slice %2 {offsets = [2, 0, 0], sizes = [8, 16, 4], strides = [1, 1, 1]} : vector<10x16x4xf32> to vector<8x16x4xf32>
    %52 = vector.shape_cast %51 : vector<8x16x4xf32> to vector<128x4xf32>
    %c6 = arith.constant 6 : index
    %c0_43 = arith.constant 0 : index
    %c0_44 = arith.constant 0 : index
    %53 = vector.load %arg2[%c6, %c0_43, %c0_44] : memref<9x4x128xf32, #tpu.memory_space<vmem>>, vector<1x4x128xf32>
    %54 = vector.shape_cast %53 : vector<1x4x128xf32> to vector<4x128xf32>
    %cst_45 = arith.constant dense<0.000000e+00> : vector<128x128xf32>
    %55 = tpu.matmul %52, %54, %cst_45 {dimension_numbers = #tpu.dot_dimension_numbers<[1], [0], [0], [1], [0, 0, 1, 1], [], []>} : vector<128x4xf32>, vector<4x128xf32>, vector<128x128xf32> -> vector<128x128xf32>
    %c0_46 = arith.constant 0 : index
    %c0_47 = arith.constant 0 : index
    %56 = vector.load %arg6[%c0_46, %c0_47] : memref<128x128xf32, #tpu.memory_space<vmem>>, vector<128x128xf32>
    %57 = arith.addf %56, %55 : vector<128x128xf32>
    %c0_48 = arith.constant 0 : index
    %c0_49 = arith.constant 0 : index
    %58 = vector.load %arg6[%c0_48, %c0_49] : memref<128x128xf32, #tpu.memory_space<vmem>>, vector<128x128xf32>
    tpu.vector_store %arg6[%c0_48, %c0_49], %57 {strides = array<i32>} : memref<128x128xf32, #tpu.memory_space<vmem>>, vector<128x128xf32>,
    %59 = vector.extract_strided_slice %3 {offsets = [2, 0, 0], sizes = [8, 16, 4], strides = [1, 1, 1]} : vector<10x16x4xf32> to vector<8x16x4xf32>
    %60 = vector.shape_cast %59 : vector<8x16x4xf32> to vector<128x4xf32>
    %c7 = arith.constant 7 : index
    %c0_50 = arith.constant 0 : index
    %c0_51 = arith.constant 0 : index
    %61 = vector.load %arg2[%c7, %c0_50, %c0_51] : memref<9x4x128xf32, #tpu.memory_space<vmem>>, vector<1x4x128xf32>
    %62 = vector.shape_cast %61 : vector<1x4x128xf32> to vector<4x128xf32>
    %cst_52 = arith.constant dense<0.000000e+00> : vector<128x128xf32>
    %63 = tpu.matmul %60, %62, %cst_52 {dimension_numbers = #tpu.dot_dimension_numbers<[1], [0], [0], [1], [0, 0, 1, 1], [], []>} : vector<128x4xf32>, vector<4x128xf32>, vector<128x128xf32> -> vector<128x128xf32>
    %c0_53 = arith.constant 0 : index
    %c0_54 = arith.constant 0 : index
    %64 = vector.load %arg6[%c0_53, %c0_54] : memref<128x128xf32, #tpu.memory_space<vmem>>, vector<128x128xf32>
    %65 = arith.addf %64, %63 : vector<128x128xf32>
    %c0_55 = arith.constant 0 : index
    %c0_56 = arith.constant 0 : index
    %66 = vector.load %arg6[%c0_55, %c0_56] : memref<128x128xf32, #tpu.memory_space<vmem>>, vector<128x128xf32>
    tpu.vector_store %arg6[%c0_55, %c0_56], %65 {strides = array<i32>} : memref<128x128xf32, #tpu.memory_space<vmem>>, vector<128x128xf32>,
    %67 = vector.extract_strided_slice %4 {offsets = [2, 0, 0], sizes = [8, 16, 4], strides = [1, 1, 1]} : vector<10x16x4xf32> to vector<8x16x4xf32>
    %68 = vector.shape_cast %67 : vector<8x16x4xf32> to vector<128x4xf32>
    %c8 = arith.constant 8 : index
    %c0_57 = arith.constant 0 : index
    %c0_58 = arith.constant 0 : index
    %69 = vector.load %arg2[%c8, %c0_57, %c0_58] : memref<9x4x128xf32, #tpu.memory_space<vmem>>, vector<1x4x128xf32>
    %70 = vector.shape_cast %69 : vector<1x4x128xf32> to vector<4x128xf32>
    %cst_59 = arith.constant dense<0.000000e+00> : vector<128x128xf32>
    %71 = tpu.matmul %68, %70, %cst_59 {dimension_numbers = #tpu.dot_dimension_numbers<[1], [0], [0], [1], [0, 0, 1, 1], [], []>} : vector<128x4xf32>, vector<4x128xf32>, vector<128x128xf32> -> vector<128x128xf32>
    %c0_60 = arith.constant 0 : index
    %c0_61 = arith.constant 0 : index
    %72 = vector.load %arg6[%c0_60, %c0_61] : memref<128x128xf32, #tpu.memory_space<vmem>>, vector<128x128xf32>
    %73 = arith.addf %72, %71 : vector<128x128xf32>
    %c0_62 = arith.constant 0 : index
    %c0_63 = arith.constant 0 : index
    %74 = vector.load %arg6[%c0_62, %c0_63] : memref<128x128xf32, #tpu.memory_space<vmem>>, vector<128x128xf32>
    tpu.vector_store %arg6[%c0_62, %c0_63], %73 {strides = array<i32>} : memref<128x128xf32, #tpu.memory_space<vmem>>, vector<128x128xf32>,
    %c0_64 = arith.constant 0 : index
    %c0_65 = arith.constant 0 : index
    %75 = vector.load %arg6[%c0_64, %c0_65] : memref<128x128xf32, #tpu.memory_space<vmem>>, vector<128x128xf32>
    %c0_66 = arith.constant 0 : index
    %c0_67 = arith.constant 0 : index
    %76 = vector.load %arg3[%c0_66, %c0_67] : memref<128x128xf32, #tpu.memory_space<vmem>>, vector<128x128xf32>
    tpu.vector_store %arg3[%c0_66, %c0_67], %75 {strides = array<i32>} : memref<128x128xf32, #tpu.memory_space<vmem>>, vector<128x128xf32>,
    %cst_68 = arith.constant dense<0.000000e+00> : vector<128xf32>
    %77 = vector.multi_reduction <add>, %75, %cst_68 [0] : vector<128x128xf32> to vector<128xf32>
    %78 = vector.shape_cast %77 : vector<128xf32> to vector<1x128xf32>
    %79 = vector.shape_cast %78 : vector<1x128xf32> to vector<1x1x128xf32>
    %c0_69 = arith.constant 0 : index
    %c0_70 = arith.constant 0 : index
    %c0_71 = arith.constant 0 : index
    %80 = vector.load %arg4[%c0_69, %c0_70, %c0_71] : memref<1x1x128xf32, #tpu.memory_space<vmem>>, vector<1x1x128xf32>
    tpu.vector_store %arg4[%c0_69, %c0_70, %c0_71], %79 {strides = array<i32>} : memref<1x1x128xf32, #tpu.memory_space<vmem>>, vector<1x1x128xf32>,
    %81 = arith.mulf %75, %75 : vector<128x128xf32>
    %cst_72 = arith.constant dense<0.000000e+00> : vector<128xf32>
    %82 = vector.multi_reduction <add>, %81, %cst_72 [0] : vector<128x128xf32> to vector<128xf32>
    %83 = vector.shape_cast %82 : vector<128xf32> to vector<1x128xf32>
    %84 = vector.shape_cast %83 : vector<1x128xf32> to vector<1x1x128xf32>
    %c0_73 = arith.constant 0 : index
    %c0_74 = arith.constant 0 : index
    %c0_75 = arith.constant 0 : index
    %85 = vector.load %arg5[%c0_73, %c0_74, %c0_75] : memref<1x1x128xf32, #tpu.memory_space<vmem>>, vector<1x1x128xf32>
    tpu.vector_store %arg5[%c0_73, %c0_74, %c0_75], %84 {strides = array<i32>} : memref<1x1x128xf32, #tpu.memory_space<vmem>>, vector<1x1x128xf32>,
    return
  }
  func.func @transform_0(%arg0: i32) -> (i32, i32, i32, i32) {
    %c0_i32 = arith.constant 0 : i32
    %c0_i32_0 = arith.constant 0 : i32
    %c0_i32_1 = arith.constant 0 : i32
    %c0_i32_2 = arith.constant 0 : i32
    return %arg0, %c0_i32, %c0_i32_0, %c0_i32_1 : i32, i32, i32, i32
  }
  func.func @transform_1(%arg0: i32) -> (i32, i32, i32) {
    %c0_i32 = arith.constant 0 : i32
    %c0_i32_0 = arith.constant 0 : i32
    %c0_i32_1 = arith.constant 0 : i32
    %c0_i32_2 = arith.constant 0 : i32
    return %c0_i32, %c0_i32_0, %c0_i32_1 : i32, i32, i32
  }
  func.func @transform_2(%arg0: i32) -> (i32, i32) {
    %c0_i32 = arith.constant 0 : i32
    %c0_i32_0 = arith.constant 0 : i32
    return %arg0, %c0_i32 : i32, i32
  }
  func.func @transform_3(%arg0: i32) -> (i32, i32, i32) {
    %c0_i32 = arith.constant 0 : i32
    %c0_i32_0 = arith.constant 0 : i32
    %c0_i32_1 = arith.constant 0 : i32
    return %arg0, %c0_i32, %c0_i32_0 : i32, i32, i32
  }
  func.func @transform_4(%arg0: i32) -> (i32, i32, i32) {
    %c0_i32 = arith.constant 0 : i32
    %c0_i32_0 = arith.constant 0 : i32
    %c0_i32_1 = arith.constant 0 : i32
    return %arg0, %c0_i32, %c0_i32_0 : i32, i32, i32
  }
}

module attributes {stable_mosaic.version = 11 : i64} {
  func.func @_bn_apply_kernel(%arg0: i32, %arg1: memref<512x128xf32, #tpu.memory_space<vmem>>, %arg2: memref<1x128xf32, #tpu.memory_space<vmem>>, %arg3: memref<1x128xf32, #tpu.memory_space<vmem>>, %arg4: memref<512x128xf32, #tpu.memory_space<vmem>>) attributes {dimension_semantics = [#tpu.dimension_semantics<parallel>], iteration_bounds = array<i64: 1>, scalar_prefetch = 0 : i64, scratch_operands = 0 : i64, tpu.core_type = #tpu.core_type<tc>, window_params = [{transform_indices = @transform_0, window_bounds = array<i64: 512, 128>}, {pipeline_mode = #tpu.pipeline_mode<synchronous>, transform_indices = @transform_1, window_bounds = array<i64: 1, 128>}, {pipeline_mode = #tpu.pipeline_mode<synchronous>, transform_indices = @transform_2, window_bounds = array<i64: 1, 128>}, {transform_indices = @transform_3, window_bounds = array<i64: 512, 128>}]} {
    %c0 = arith.constant 0 : index
    %c0_0 = arith.constant 0 : index
    %0 = vector.load %arg1[%c0, %c0_0] : memref<512x128xf32, #tpu.memory_space<vmem>>, vector<512x128xf32>
    %c0_1 = arith.constant 0 : index
    %c0_2 = arith.constant 0 : index
    %1 = vector.load %arg2[%c0_1, %c0_2] : memref<1x128xf32, #tpu.memory_space<vmem>>, vector<1x128xf32>
    %2 = vector.broadcast %1 : vector<1x128xf32> to vector<512x128xf32>
    %3 = arith.mulf %0, %2 : vector<512x128xf32>
    %c0_3 = arith.constant 0 : index
    %c0_4 = arith.constant 0 : index
    %4 = vector.load %arg3[%c0_3, %c0_4] : memref<1x128xf32, #tpu.memory_space<vmem>>, vector<1x128xf32>
    %5 = vector.broadcast %4 : vector<1x128xf32> to vector<512x128xf32>
    %6 = arith.addf %3, %5 : vector<512x128xf32>
    %c0_5 = arith.constant 0 : index
    %c0_6 = arith.constant 0 : index
    %7 = vector.load %arg4[%c0_5, %c0_6] : memref<512x128xf32, #tpu.memory_space<vmem>>, vector<512x128xf32>
    tpu.vector_store %arg4[%c0_5, %c0_6], %6 {strides = array<i32>} : memref<512x128xf32, #tpu.memory_space<vmem>>, vector<512x128xf32>,
    return
  }
  func.func @transform_0(%arg0: i32) -> (i32, i32) {
    %c0_i32 = arith.constant 0 : i32
    %c0_i32_0 = arith.constant 0 : i32
    return %arg0, %c0_i32 : i32, i32
  }
  func.func @transform_1(%arg0: i32) -> (i32, i32) {
    %c0_i32 = arith.constant 0 : i32
    %c0_i32_0 = arith.constant 0 : i32
    %c0_i32_1 = arith.constant 0 : i32
    return %c0_i32, %c0_i32_0 : i32, i32
  }
  func.func @transform_2(%arg0: i32) -> (i32, i32) {
    %c0_i32 = arith.constant 0 : i32
    %c0_i32_0 = arith.constant 0 : i32
    %c0_i32_1 = arith.constant 0 : i32
    return %c0_i32, %c0_i32_0 : i32, i32
  }
  func.func @transform_3(%arg0: i32) -> (i32, i32) {
    %c0_i32 = arith.constant 0 : i32
    %c0_i32_0 = arith.constant 0 : i32
    return %arg0, %c0_i32 : i32, i32
  }
}

</mosaic_0001>

<llo_original>
// kernel: conv_bn_2d.3
$region0: #{conv_bn_2d.3}
  #allocation0 [shape = 'u32[]', space=smem, size = 0x4, offset = 0x4, fixed_abs, tag = 'smem constant byte address 0x4 - core index']
  #allocation1 [shape = 'u32[144,128]{1,0:T(1,128)}', space=vmem, size = 0x12000, scoped, tag = 'internal scratch']
  %s0 = inlined_call_operand.vmem [shape: f32[512,128], index: 0, kind: input, shape index: {}]
  %s1 = inlined_call_operand.vmem [shape: f32[1,128], index: 1, kind: input, shape index: {}]
  %s2 = inlined_call_operand.vmem [shape: f32[1,128], index: 2, kind: input, shape index: {}]
  %s3 = inlined_call_operand.vmem [shape: f32[512,128], index: 3, kind: output, shape index: {}]
  %s4 = sld [smem:[#allocation0]]
  $region22: #{conv_bn_2d.3} parent=0
    _
  %s6 = ssub.s32 1, %s4
  %s7 = scalar_select 0, %s6, %s4
  // Predicated region
  $region2: #{conv_bn_2d.3} parent=0 // pred_check
    _
  $region3: #{conv_bn_2d.3} parent=0 // pred_check_branch
    %9 = sbr.rel (0) target = $region5
  $region4: #{conv_bn_2d.3} parent=0 // pred_region
    _
  $region5: #{conv_bn_2d.3} parent=0 // pred_fallthru
    _
  // Predicated region
  $region6: #{conv_bn_2d.3} parent=0 // pred_check
    _
  $region7: #{conv_bn_2d.3} parent=0 // pred_check_branch
    %11 = sbr.rel (0) target = $region9
  $region8: #{conv_bn_2d.3} parent=0 // pred_region
    _
  $region9: #{conv_bn_2d.3} parent=0 // pred_fallthru
    _
  // Predicated region
  $region10: #{conv_bn_2d.3} parent=0 // pred_check
    _
  $region11: #{conv_bn_2d.3} parent=0 // pred_check_branch
    %13 = sbr.rel (0) target = $region13
  $region12: #{conv_bn_2d.3} parent=0 // pred_region
    _
  $region13: #{conv_bn_2d.3} parent=0 // pred_fallthru
    _
  %v14 = vld [vmem:[%s0] sm:$0xff]
  %v15 = vld [vmem:[%s0 + $0x8] sm:$0xff]
  %v16 = vld [vmem:[%s0 + $0x10] sm:$0xff]
  %v17 = vld [vmem:[%s0 + $0x18] sm:$0xff]
  %v18 = vld [vmem:[%s0 + $0x20] sm:$0xff]
  %v19 = vld [vmem:[%s0 + $0x28] sm:$0xff]
  %v20 = vld [vmem:[%s0 + $0x30] sm:$0xff]
  %v21 = vld [vmem:[%s0 + $0x38] sm:$0xff]
  %v22 = vld [vmem:[%s0 + $0x40] sm:$0xff]
  %v23 = vld [vmem:[%s0 + $0x48] sm:$0xff]
  %v24 = vld [vmem:[%s0 + $0x50] sm:$0xff]
  %v25 = vld [vmem:[%s0 + $0x58] sm:$0xff]
  %v26 = vld [vmem:[%s0 + $0x60] sm:$0xff]
  %v27 = vld [vmem:[%s0 + $0x68] sm:$0xff]
  %v28 = vld [vmem:[%s0 + $0x70] sm:$0xff]
  %v29 = vld [vmem:[%s0 + $0x78] sm:$0xff]
  %v30 = vld [vmem:[%s0 + $0x80] sm:$0xff]
  %v31 = vld [vmem:[%s0 + $0x88] sm:$0xff]
  %v32 = vld [vmem:[%s0 + $0x90] sm:$0xff]
  %v33 = vld [vmem:[%s0 + $0x98] sm:$0xff]
  %v34 = vld [vmem:[%s0 + $0xa0] sm:$0xff]
  %v35 = vld [vmem:[%s0 + $0xa8] sm:$0xff]
  %v36 = vld [vmem:[%s0 + $0xb0] sm:$0xff]
  %v37 = vld [vmem:[%s0 + $0xb8] sm:$0xff]
  %v38 = vld [vmem:[%s0 + $0xc0] sm:$0xff]
  %v39 = vld [vmem:[%s0 + $0xc8] sm:$0xff]
  %v40 = vld [vmem:[%s0 + $0xd0] sm:$0xff]
  %v41 = vld [vmem:[%s0 + $0xd8] sm:$0xff]
  %v42 = vld [vmem:[%s0 + $0xe0] sm:$0xff]
  %v43 = vld [vmem:[%s0 + $0xe8] sm:$0xff]
  %v44 = vld [vmem:[%s0 + $0xf0] sm:$0xff]
  %v45 = vld [vmem:[%s0 + $0xf8] sm:$0xff]
  %v46 = vld [vmem:[%s0 + $0x100] sm:$0xff]
  %v47 = vld [vmem:[%s0 + $0x108] sm:$0xff]
  %v48 = vld [vmem:[%s0 + $0x110] sm:$0xff]
  %v49 = vld [vmem:[%s0 + $0x118] sm:$0xff]
  %v50 = vld [vmem:[%s0 + $0x120] sm:$0xff]
  %v51 = vld [vmem:[%s0 + $0x128] sm:$0xff]
  %v52 = vld [vmem:[%s0 + $0x130] sm:$0xff]
  %v53 = vld [vmem:[%s0 + $0x138] sm:$0xff]
  %v54 = vld [vmem:[%s0 + $0x140] sm:$0xff]
  %v55 = vld [vmem:[%s0 + $0x148] sm:$0xff]
  %v56 = vld [vmem:[%s0 + $0x150] sm:$0xff]
  %v57 = vld [vmem:[%s0 + $0x158] sm:$0xff]
  %v58 = vld [vmem:[%s0 + $0x160] sm:$0xff]
  %v59 = vld [vmem:[%s0 + $0x168] sm:$0xff]
  %v60 = vld [vmem:[%s0 + $0x170] sm:$0xff]
  %v61 = vld [vmem:[%s0 + $0x178] sm:$0xff]
  %v62 = vld [vmem:[%s0 + $0x180] sm:$0xff]
  %v63 = vld [vmem:[%s0 + $0x188] sm:$0xff]
  %v64 = vld [vmem:[%s0 + $0x190] sm:$0xff]
  %v65 = vld [vmem:[%s0 + $0x198] sm:$0xff]
  %v66 = vld [vmem:[%s0 + $0x1a0] sm:$0xff]
  %v67 = vld [vmem:[%s0 + $0x1a8] sm:$0xff]
  %v68 = vld [vmem:[%s0 + $0x1b0] sm:$0xff]
  %v69 = vld [vmem:[%s0 + $0x1b8] sm:$0xff]
  %v70 = vld [vmem:[%s0 + $0x1c0] sm:$0xff]
  %v71 = vld [vmem:[%s0 + $0x1c8] sm:$0xff]
  %v72 = vld [vmem:[%s0 + $0x1d0] sm:$0xff]
  %v73 = vld [vmem:[%s0 + $0x1d8] sm:$0xff]
  %v74 = vld [vmem:[%s0 + $0x1e0] sm:$0xff]
  %v75 = vld [vmem:[%s0 + $0x1e8] sm:$0xff]
  %v76 = vld [vmem:[%s0 + $0x1f0] sm:$0xff]
  %v77 = vld [vmem:[%s0 + $0x1f8] sm:$0xff]
  %v78 = vld [vmem:[%s1] sm:$0x1]
  %v80 = vlaneseq
  %v81 = vshrl.u32 %v80, 7
  %v82 = vsub.s32 0, %v81
  %v83 = vrot.slane %v78, %v82
  %v85 = vmul.f32 %v14, %v83
  %v86 = vmul.f32 %v15, %v83
  %v87 = vmul.f32 %v16, %v83
  %v88 = vmul.f32 %v17, %v83
  %v89 = vmul.f32 %v18, %v83
  %v90 = vmul.f32 %v19, %v83
  %v91 = vmul.f32 %v20, %v83
  %v92 = vmul.f32 %v21, %v83
  %v93 = vmul.f32 %v22, %v83
  %v94 = vmul.f32 %v23, %v83
  %v95 = vmul.f32 %v24, %v83
  %v96 = vmul.f32 %v25, %v83
  %v97 = vmul.f32 %v26, %v83
  %v98 = vmul.f32 %v27, %v83
  %v99 = vmul.f32 %v28, %v83
  %v100 = vmul.f32 %v29, %v83
  %v101 = vmul.f32 %v30, %v83
  %v102 = vmul.f32 %v31, %v83
  %v103 = vmul.f32 %v32, %v83
  %v104 = vmul.f32 %v33, %v83
  %v105 = vmul.f32 %v34, %v83
  %v106 = vmul.f32 %v35, %v83
  %v107 = vmul.f32 %v36, %v83
  %v108 = vmul.f32 %v37, %v83
  %v109 = vmul.f32 %v38, %v83
  %v110 = vmul.f32 %v39, %v83
  %v111 = vmul.f32 %v40, %v83
  %v112 = vmul.f32 %v41, %v83
  %v113 = vmul.f32 %v42, %v83
  %v114 = vmul.f32 %v43, %v83
  %v115 = vmul.f32 %v44, %v83
  %v116 = vmul.f32 %v45, %v83
  %v117 = vmul.f32 %v46, %v83
  %v118 = vmul.f32 %v47, %v83
  %v119 = vmul.f32 %v48, %v83
  %v120 = vmul.f32 %v49, %v83
  %v121 = vmul.f32 %v50, %v83
  %v122 = vmul.f32 %v51, %v83
  %v123 = vmul.f32 %v52, %v83
  %v124 = vmul.f32 %v53, %v83
  %v125 = vmul.f32 %v54, %v83
  %v126 = vmul.f32 %v55, %v83
  %v127 = vmul.f32 %v56, %v83
  %v128 = vmul.f32 %v57, %v83
  %v129 = vmul.f32 %v58, %v83
  %v130 = vmul.f32 %v59, %v83
  %v131 = vmul.f32 %v60, %v83
  %v132 = vmul.f32 %v61, %v83
  %v133 = vmul.f32 %v62, %v83
  %v134 = vmul.f32 %v63, %v83
  %v135 = vmul.f32 %v64, %v83
  %v136 = vmul.f32 %v65, %v83
  %v137 = vmul.f32 %v66, %v83
  %v138 = vmul.f32 %v67, %v83
  %v139 = vmul.f32 %v68, %v83
  %v140 = vmul.f32 %v69, %v83
  %v141 = vmul.f32 %v70, %v83
  %v142 = vmul.f32 %v71, %v83
  %v143 = vmul.f32 %v72, %v83
  %v144 = vmul.f32 %v73, %v83
  %v145 = vmul.f32 %v74, %v83
  %v146 = vmul.f32 %v75, %v83
  %v147 = vmul.f32 %v76, %v83
  %v148 = vmul.f32 %v77, %v83
  %v149 = vld [vmem:[%s2] sm:$0x1]
  %v151 = vlaneseq
  %v152 = vshrl.u32 %v151, 7
  %v153 = vsub.s32 0, %v152
  %v154 = vrot.slane %v149, %v153
  %v156 = vadd.f32 %v85, %v154
  %v157 = vadd.f32 %v86, %v154
  %v158 = vadd.f32 %v87, %v154
  %v159 = vadd.f32 %v88, %v154
  %v160 = vadd.f32 %v89, %v154
  %v161 = vadd.f32 %v90, %v154
  %v162 = vadd.f32 %v91, %v154
  %v163 = vadd.f32 %v92, %v154
  %v164 = vadd.f32 %v93, %v154
  %v165 = vadd.f32 %v94, %v154
  %v166 = vadd.f32 %v95, %v154
  %v167 = vadd.f32 %v96, %v154
  %v168 = vadd.f32 %v97, %v154
  %v169 = vadd.f32 %v98, %v154
  %v170 = vadd.f32 %v99, %v154
  %v171 = vadd.f32 %v100, %v154
  %v172 = vadd.f32 %v101, %v154
  %v173 = vadd.f32 %v102, %v154
  %v174 = vadd.f32 %v103, %v154
  %v175 = vadd.f32 %v104, %v154
  %v176 = vadd.f32 %v105, %v154
  %v177 = vadd.f32 %v106, %v154
  %v178 = vadd.f32 %v107, %v154
  %v179 = vadd.f32 %v108, %v154
  %v180 = vadd.f32 %v109, %v154
  %v181 = vadd.f32 %v110, %v154
  %v182 = vadd.f32 %v111, %v154
  %v183 = vadd.f32 %v112, %v154
  %v184 = vadd.f32 %v113, %v154
  %v185 = vadd.f32 %v114, %v154
  %v186 = vadd.f32 %v115, %v154
  %v187 = vadd.f32 %v116, %v154
  %v188 = vadd.f32 %v117, %v154
  %v189 = vadd.f32 %v118, %v154
  %v190 = vadd.f32 %v119, %v154
  %v191 = vadd.f32 %v120, %v154
  %v192 = vadd.f32 %v121, %v154
  %v193 = vadd.f32 %v122, %v154
  %v194 = vadd.f32 %v123, %v154
  %v195 = vadd.f32 %v124, %v154
  %v196 = vadd.f32 %v125, %v154
  %v197 = vadd.f32 %v126, %v154
  %v198 = vadd.f32 %v127, %v154
  %v199 = vadd.f32 %v128, %v154
  %v200 = vadd.f32 %v129, %v154
  %v201 = vadd.f32 %v130, %v154
  %v202 = vadd.f32 %v131, %v154
  %v203 = vadd.f32 %v132, %v154
  %v204 = vadd.f32 %v133, %v154
  %v205 = vadd.f32 %v134, %v154
  %v206 = vadd.f32 %v135, %v154
  %v207 = vadd.f32 %v136, %v154
  %v208 = vadd.f32 %v137, %v154
  %v209 = vadd.f32 %v138, %v154
  %v210 = vadd.f32 %v139, %v154
  %v211 = vadd.f32 %v140, %v154
  %v212 = vadd.f32 %v141, %v154
  %v213 = vadd.f32 %v142, %v154
  %v214 = vadd.f32 %v143, %v154
  %v215 = vadd.f32 %v144, %v154
  %v216 = vadd.f32 %v145, %v154
  %v217 = vadd.f32 %v146, %v154
  %v218 = vadd.f32 %v147, %v154
  %v219 = vadd.f32 %v148, %v154
  %220 = vst [vmem:[%s3] sm:$0xff] %v156
  %221 = vst [vmem:[%s3 + $0x8] sm:$0xff] %v157
  %222 = vst [vmem:[%s3 + $0x10] sm:$0xff] %v158
  %223 = vst [vmem:[%s3 + $0x18] sm:$0xff] %v159
  %224 = vst [vmem:[%s3 + $0x20] sm:$0xff] %v160
  %225 = vst [vmem:[%s3 + $0x28] sm:$0xff] %v161
  %226 = vst [vmem:[%s3 + $0x30] sm:$0xff] %v162
  %227 = vst [vmem:[%s3 + $0x38] sm:$0xff] %v163
  %228 = vst [vmem:[%s3 + $0x40] sm:$0xff] %v164
  %229 = vst [vmem:[%s3 + $0x48] sm:$0xff] %v165
  %230 = vst [vmem:[%s3 + $0x50] sm:$0xff] %v166
  %231 = vst [vmem:[%s3 + $0x58] sm:$0xff] %v167
  %232 = vst [vmem:[%s3 + $0x60] sm:$0xff] %v168
  %233 = vst [vmem:[%s3 + $0x68] sm:$0xff] %v169
  %234 = vst [vmem:[%s3 + $0x70] sm:$0xff] %v170
  %235 = vst [vmem:[%s3 + $0x78] sm:$0xff] %v171
  %236 = vst [vmem:[%s3 + $0x80] sm:$0xff] %v172
  %237 = vst [vmem:[%s3 + $0x88] sm:$0xff] %v173
  %238 = vst [vmem:[%s3 + $0x90] sm:$0xff] %v174
  %239 = vst [vmem:[%s3 + $0x98] sm:$0xff] %v175
  %240 = vst [vmem:[%s3 + $0xa0] sm:$0xff] %v176
  %241 = vst [vmem:[%s3 + $0xa8] sm:$0xff] %v177
  %242 = vst [vmem:[%s3 + $0xb0] sm:$0xff] %v178
  %243 = vst [vmem:[%s3 + $0xb8] sm:$0xff] %v179
  %244 = vst [vmem:[%s3 + $0xc0] sm:$0xff] %v180
  %245 = vst [vmem:[%s3 + $0xc8] sm:$0xff] %v181
  %246 = vst [vmem:[%s3 + $0xd0] sm:$0xff] %v182
  %247 = vst [vmem:[%s3 + $0xd8] sm:$0xff] %v183
  %248 = vst [vmem:[%s3 + $0xe0] sm:$0xff] %v184
  %249 = vst [vmem:[%s3 + $0xe8] sm:$0xff] %v185
  %250 = vst [vmem:[%s3 + $0xf0] sm:$0xff] %v186
  %251 = vst [vmem:[%s3 + $0xf8] sm:$0xff] %v187
  %252 = vst [vmem:[%s3 + $0x100] sm:$0xff] %v188
  %253 = vst [vmem:[%s3 + $0x108] sm:$0xff] %v189
  %254 = vst [vmem:[%s3 + $0x110] sm:$0xff] %v190
  %255 = vst [vmem:[%s3 + $0x118] sm:$0xff] %v191
  %256 = vst [vmem:[%s3 + $0x120] sm:$0xff] %v192
  %257 = vst [vmem:[%s3 + $0x128] sm:$0xff] %v193
  %258 = vst [vmem:[%s3 + $0x130] sm:$0xff] %v194
  %259 = vst [vmem:[%s3 + $0x138] sm:$0xff] %v195
  %260 = vst [vmem:[%s3 + $0x140] sm:$0xff] %v196
  %261 = vst [vmem:[%s3 + $0x148] sm:$0xff] %v197
  %262 = vst [vmem:[%s3 + $0x150] sm:$0xff] %v198
  %263 = vst [vmem:[%s3 + $0x158] sm:$0xff] %v199
  %264 = vst [vmem:[%s3 + $0x160] sm:$0xff] %v200
  %265 = vst [vmem:[%s3 + $0x168] sm:$0xff] %v201
  %266 = vst [vmem:[%s3 + $0x170] sm:$0xff] %v202
  %267 = vst [vmem:[%s3 + $0x178] sm:$0xff] %v203
  %268 = vst [vmem:[%s3 + $0x180] sm:$0xff] %v204
  %269 = vst [vmem:[%s3 + $0x188] sm:$0xff] %v205
  %270 = vst [vmem:[%s3 + $0x190] sm:$0xff] %v206
  %271 = vst [vmem:[%s3 + $0x198] sm:$0xff] %v207
  %272 = vst [vmem:[%s3 + $0x1a0] sm:$0xff] %v208
  %273 = vst [vmem:[%s3 + $0x1a8] sm:$0xff] %v209
  %274 = vst [vmem:[%s3 + $0x1b0] sm:$0xff] %v210
  %275 = vst [vmem:[%s3 + $0x1b8] sm:$0xff] %v211
  %276 = vst [vmem:[%s3 + $0x1c0] sm:$0xff] %v212
  %277 = vst [vmem:[%s3 + $0x1c8] sm:$0xff] %v213
  %278 = vst [vmem:[%s3 + $0x1d0] sm:$0xff] %v214
  %279 = vst [vmem:[%s3 + $0x1d8] sm:$0xff] %v215
  %280 = vst [vmem:[%s3 + $0x1e0] sm:$0xff] %v216
  %281 = vst [vmem:[%s3 + $0x1e8] sm:$0xff] %v217
  %282 = vst [vmem:[%s3 + $0x1f0] sm:$0xff] %v218
  %283 = vst [vmem:[%s3 + $0x1f8] sm:$0xff] %v219
  // Predicated region
  $region14: #{conv_bn_2d.3} parent=0 // pred_check
    _
  $region15: #{conv_bn_2d.3} parent=0 // pred_check_branch
    %285 = sbr.rel (0) target = $region17
  $region16: #{conv_bn_2d.3} parent=0 // pred_region
    _
  $region17: #{conv_bn_2d.3} parent=0 // pred_fallthru
    _
  // Predicated region
  $region18: #{conv_bn_2d.3} parent=0 // pred_check
    _
  $region19: #{conv_bn_2d.3} parent=0 // pred_check_branch
    %287 = sbr.rel (0) target = $region21
  $region20: #{conv_bn_2d.3} parent=0 // pred_region
    _
  $region21: #{conv_bn_2d.3} parent=0 // pred_fallthru
    _

// kernel: conv_bn_2d.2
$region0: #{conv_bn_2d.2}
  #allocation0 [shape = 'u32[]', space=smem, size = 0x4, offset = 0x4, fixed_abs, tag = 'smem constant byte address 0x4 - core index']
  #allocation1 [shape = 'u32[144,128]{1,0:T(1,128)}', space=vmem, size = 0x12000, scoped, tag = 'internal scratch']
  #allocation2 [shape = 'f32[128,128]{1,0:T(8,128)}', space=vmem, size = 0x10000, scoped, tag = 'scratch operand']
  %s0 = inlined_call_operand.vmem [shape: f32[4,10,18,4], index: 0, kind: input, shape index: {}]
  %s1 = inlined_call_operand.vmem [shape: f32[9,4,128], index: 1, kind: input, shape index: {}]
  %s2 = inlined_call_operand.vmem [shape: f32[512,128], index: 2, kind: output, shape index: {0}]
  %s3 = inlined_call_operand.vmem [shape: f32[4,1,128], index: 3, kind: output, shape index: {1}]
  %s4 = inlined_call_operand.vmem [shape: f32[4,1,128], index: 4, kind: output, shape index: {2}]
  %5 = xla_tuple %s2, %s3, %s4
  %s6 = sld [smem:[#allocation0]]
  $region57: #{conv_bn_2d.2} parent=0
    _
  %s8 = ssub.s32 1, %s6
  %s9 = scalar_select 0, %s8, %s6
  loop: start=0, step=1, limit=6
  $region2: #{conv_bn_2d.2} parent=0 // loop_pre_header
    _
  $region3: #{conv_bn_2d.2} parent=0 // loop_header
    %s11 = sphi 0, %s15
    %p12 = scmp.ge.s32.totalorder %s11, 6
    %s21 = sphi 0, %s23
    %s24 = sphi 0, %s21
    %s25 = sphi 0, %s24
    %s41 = sphi 0, %s25
    %s45 = sphi 0, %s45
    %s47 = sphi 0, %s45
    %s48 = sphi 0, %s47
    %s62 = sphi 0, %s48
    %s68 = sphi 0, %s70
    %s71 = sphi 0, %s68
    %s72 = sphi 0, %s71
    %s88 = sphi 0, %s72
    %s94 = sphi 0, %s96
    %s97 = sphi 0, %s94
    %s98 = sphi 0, %s97
    %s114 = sphi 0, %s98
    %s120 = sphi 0, %s122
    %s123 = sphi 0, %s120
    %s124 = sphi 0, %s123
    %s140 = sphi 0, %s124
  $region4: #{conv_bn_2d.2} parent=0 // loop_header_branch
    %14 = sbr.rel (%p12) target = $region8
  $region5: #{conv_bn_2d.2} parent=0 // loop_body
    %s16 = ssub.s32 %s11, 1
    %s17 = ssub.s32 %s11, 2
    %s18 = sadd.s32 %s11, 1
    %s19 = ssub.s32 %s11, %s18
    %p20 = scmp.eq.s32.totalorder %s19, 0
    %s22 = sadd.s32 %s21, 1
    %s23 = scalar_select %p20, %s21, %s22
    %p26 = pneg %p20
    %p27 = scmp.eq.s32.totalorder %s11, 3
    %p28 = por %p26, %p27
    %p29 = scmp.ne.s32.totalorder %s21, %s24
    %p30 = scmp.eq.s32.totalorder %s11, 0
    %p31 = por %p29, %p30
    %p32 = scmp.ne.s32.totalorder %s21, %s24
    %p33 = scmp.eq.s32.totalorder %s16, 3
    %p34 = por %p32, %p33
    %p35 = scmp.ne.s32.totalorder %s24, %s25
    %p36 = scmp.eq.s32.totalorder %s16, 0
    %p37 = por %p35, %p36
    %p38 = scmp.ne.s32.totalorder %s24, %s25
    %p39 = scmp.eq.s32.totalorder %s17, 3
    %p40 = por %p38, %p39
    %p42 = scmp.ne.s32.totalorder %s25, %s41
    %p43 = scmp.eq.s32.totalorder %s17, 0
    %p44 = por %p42, %p43
    %s46 = sadd.s32 %s45, 1
    %p49 = scmp.eq.s32.totalorder %s11, 3
    %p50 = scmp.ne.s32.totalorder %s45, %s47
    %p51 = scmp.eq.s32.totalorder %s11, 0
    %p52 = por %p50, %p51
    %p53 = scmp.ne.s32.totalorder %s45, %s47
    %p54 = scmp.eq.s32.totalorder %s16, 3
    %p55 = por %p53, %p54
    %p56 = scmp.ne.s32.totalorder %s47, %s48
    %p57 = scmp.eq.s32.totalorder %s16, 0
    %p58 = por %p56, %p57
    %p59 = scmp.ne.s32.totalorder %s47, %s48
    %p60 = scmp.eq.s32.totalorder %s17, 3
    %p61 = por %p59, %p60
    %p63 = scmp.ne.s32.totalorder %s48, %s62
    %p64 = scmp.eq.s32.totalorder %s17, 0
    %p65 = por %p63, %p64
    %s66 = ssub.s32 %s11, %s18
    %p67 = scmp.eq.s32.totalorder %s66, 0
    %s69 = sadd.s32 %s68, 1
    %s70 = scalar_select %p67, %s68, %s69
    %p73 = pneg %p67
    %p74 = scmp.eq.s32.totalorder %s11, 3
    %p75 = por %p73, %p74
    %p76 = scmp.ne.s32.totalorder %s68, %s71
    %p77 = scmp.eq.s32.totalorder %s11, 0
    %p78 = por %p76, %p77
    %p79 = scmp.ne.s32.totalorder %s68, %s71
    %p80 = scmp.eq.s32.totalorder %s16, 3
    %p81 = por %p79, %p80
    %p82 = scmp.ne.s32.totalorder %s71, %s72
    %p83 = scmp.eq.s32.totalorder %s16, 0
    %p84 = por %p82, %p83
    %p85 = scmp.ne.s32.totalorder %s71, %s72
    %p86 = scmp.eq.s32.totalorder %s17, 3
    %p87 = por %p85, %p86
    %p89 = scmp.ne.s32.totalorder %s72, %s88
    %p90 = scmp.eq.s32.totalorder %s17, 0
    %p91 = por %p89, %p90
    %s92 = ssub.s32 %s11, %s18
    %p93 = scmp.eq.s32.totalorder %s92, 0
    %s95 = sadd.s32 %s94, 1
    %s96 = scalar_select %p93, %s94, %s95
    %p99 = pneg %p93
    %p100 = scmp.eq.s32.totalorder %s11, 3
    %p101 = por %p99, %p100
    %p102 = scmp.ne.s32.totalorder %s94, %s97
    %p103 = scmp.eq.s32.totalorder %s11, 0
    %p104 = por %p102, %p103
    %p105 = scmp.ne.s32.totalorder %s94, %s97
    %p106 = scmp.eq.s32.totalorder %s16, 3
    %p107 = por %p105, %p106
    %p108 = scmp.ne.s32.totalorder %s97, %s98
    %p109 = scmp.eq.s32.totalorder %s16, 0
    %p110 = por %p108, %p109
    %p111 = scmp.ne.s32.totalorder %s97, %s98
    %p112 = scmp.eq.s32.totalorder %s17, 3
    %p113 = por %p111, %p112
    %p115 = scmp.ne.s32.totalorder %s98, %s114
    %p116 = scmp.eq.s32.totalorder %s17, 0
    %p117 = por %p115, %p116
    %s118 = ssub.s32 %s11, %s18
    %p119 = scmp.eq.s32.totalorder %s118, 0
    %s121 = sadd.s32 %s120, 1
    %s122 = scalar_select %p119, %s120, %s121
    %p125 = pneg %p119
    %p126 = scmp.eq.s32.totalorder %s11, 3
    %p127 = por %p125, %p126
    %p128 = scmp.ne.s32.totalorder %s120, %s123
    %p129 = scmp.eq.s32.totalorder %s11, 0
    %p130 = por %p128, %p129
    %p131 = scmp.ne.s32.totalorder %s120, %s123
    %p132 = scmp.eq.s32.totalorder %s16, 3
    %p133 = por %p131, %p132
    %p134 = scmp.ne.s32.totalorder %s123, %s124
    %p135 = scmp.eq.s32.totalorder %s16, 0
    %p136 = por %p134, %p135
    %p137 = scmp.ne.s32.totalorder %s123, %s124
    %p138 = scmp.eq.s32.totalorder %s17, 3
    %p139 = por %p137, %p138
    %p141 = scmp.ne.s32.totalorder %s124, %s140
    %p142 = scmp.eq.s32.totalorder %s17, 0
    %p143 = por %p141, %p142
    %p144 = scmp.le.s32.totalorder 1, %s11
    %p145 = scmp.lt.s32.totalorder %s11, 5
    %p146 = pnand %p144, %p145
    %p147 = pneg %p146
    // Predicated region
    $region9: #{conv_bn_2d.2} parent=5 // pred_check
      _
    $region10: #{conv_bn_2d.2} parent=5 // pred_check_branch
      %149 = sbr.rel (%p146) target = $region12
    $region11: #{conv_bn_2d.2} parent=5 // pred_region
      %s150 = ssub.s32 %s11, 1
      // Predicated region
      $region13: #{conv_bn_2d.2} parent=11 // pred_check
        %p151 = pneg %p58
      $region14: #{conv_bn_2d.2} parent=11 // pred_check_branch
        %153 = sbr.rel (%p151) target = $region16
      $region15: #{conv_bn_2d.2} parent=11 // pred_region
        _
      $region16: #{conv_bn_2d.2} parent=11 // pred_fallthru
        _
    $region12: #{conv_bn_2d.2} parent=5 // pred_fallthru
      _
    %p154 = scmp.lt.s32.totalorder %s11, 4
    // Predicated region
    $region17: #{conv_bn_2d.2} parent=5 // pred_check
      %p155 = pneg %p154
    $region18: #{conv_bn_2d.2} parent=5 // pred_check_branch
      %157 = sbr.rel (%p155) target = $region20
    $region19: #{conv_bn_2d.2} parent=5 // pred_region
      // Predicated region
      $region21: #{conv_bn_2d.2} parent=19 // pred_check
        %p158 = pneg %p31
      $region22: #{conv_bn_2d.2} parent=19 // pred_check_branch
        %160 = sbr.rel (%p158) target = $region24
      $region23: #{conv_bn_2d.2} parent=19 // pred_region
        %p161 = scmp.lt.s32.totalorder %s11, 3
        %s162 = scalar_select %p161, %s11, 3
        %s163 = smul.addr %s162, 30
        %s164 = smul.addr %s163, 8
        %s165 = scalar_lea.vmem %s0, %s164
      $region24: #{conv_bn_2d.2} parent=19 // pred_fallthru
        _
    $region20: #{conv_bn_2d.2} parent=5 // pred_fallthru
      _
    %p166 = scmp.le.s32.totalorder 1, %s11
    %p167 = scmp.lt.s32.totalorder %s11, 5
    %p168 = pnand %p166, %p167
    %p169 = pneg %p168
    // Predicated region
    $region25: #{conv_bn_2d.2} parent=5 // pred_check
      _
    $region26: #{conv_bn_2d.2} parent=5 // pred_check_branch
      %171 = sbr.rel (%p168) target = $region28
    $region27: #{conv_bn_2d.2} parent=5 // pred_region
      %s172 = ssub.s32 %s11, 1
      %p173 = scmp.lt.s32.totalorder %s16, 3
      %s174 = scalar_select %p173, %s16, 3
      %s175 = smul.addr %s174, 30
      %s176 = smul.addr %s175, 8
      %s177 = scalar_lea.vmem %s0, %s176
      %p178 = pneg %p37
      %p179 = pneg %p34
      %p180 = pneg %p58
      %p181 = pneg %p55
      %p182 = pneg %p84
      %p183 = pneg %p81
      %s184 = smul.u32 16, %s16
      %p185 = scmp.lt.s32.totalorder %s184, 63
      %s186 = scalar_select %p185, %s184, 63
      %s187 = smul.addr %s186, 8
      %s188 = scalar_lea.vmem %s2, %s187
      %p189 = pneg %p110
      %p190 = pneg %p107
      %p191 = scmp.lt.s32.totalorder %s16, 3
      %s192 = scalar_select %p191, %s16, 3
      %s193 = scalar_lea.vmem %s3, %s192
      %p194 = pneg %p136
      %p195 = pneg %p133
      %p196 = scmp.lt.s32.totalorder %s16, 3
      %s197 = scalar_select %p196, %s16, 3
      %s198 = scalar_lea.vmem %s4, %s197
      %p199 = scmp.lt.s32.totalorder %s16, 3
      %s200 = scalar_select %p199, %s16, 3
      %s201 = smul.addr %s200, 30
      %s202 = smul.addr %s201, 8
      %s203 = scalar_lea.vmem %s0, %s202
      %s204 = smul.u32 16, %s16
      %p205 = scmp.lt.s32.totalorder %s204, 63
      %s206 = scalar_select %p205, %s204, 63
      %s207 = smul.addr %s206, 8
      %s208 = scalar_lea.vmem %s2, %s207
      %s209 = smul.u32 16, %s16
      %p210 = scmp.lt.s32.totalorder %s16, 3
      %s211 = scalar_select %p210, %s16, 3
      %s212 = scalar_lea.vmem %s3, %s211
      %p213 = scmp.lt.s32.totalorder %s16, 3
      %s214 = scalar_select %p213, %s16, 3
      %s215 = scalar_lea.vmem %s4, %s214
      %v216 = vld [vmem:[%s203] sm:$0xff]
      %v217 = vld [vmem:[%s203 + $0x8] sm:$0xff]
      %v218 = vld [vmem:[%s203 + $0x10] sm:$0x3]
      %v219 = vld [vmem:[%s203 + $0x18] sm:$0xff]
      %v220 = vld [vmem:[%s203 + $0x20] sm:$0xff]
      %v221 = vld [vmem:[%s203 + $0x28] sm:$0x3]
      %v222 = vld [vmem:[%s203 + $0x30] sm:$0xff]
      %v223 = vld [vmem:[%s203 + $0x38] sm:$0xff]
      %v224 = vld [vmem:[%s203 + $0x40] sm:$0x3]
      %v225 = vld [vmem:[%s203 + $0x48] sm:$0xff]
      %v226 = vld [vmem:[%s203 + $0x50] sm:$0xff]
      %v227 = vld [vmem:[%s203 + $0x58] sm:$0x3]
      %v228 = vld [vmem:[%s203 + $0x60] sm:$0xff]
      %v229 = vld [vmem:[%s203 + $0x68] sm:$0xff]
      %v230 = vld [vmem:[%s203 + $0x70] sm:$0x3]
      %v231 = vld [vmem:[%s203 + $0x78] sm:$0xff]
      %v232 = vld [vmem:[%s203 + $0x80] sm:$0xff]
      %v233 = vld [vmem:[%s203 + $0x88] sm:$0x3]
      %v234 = vld [vmem:[%s203 + $0x90] sm:$0xff]
      %v235 = vld [vmem:[%s203 + $0x98] sm:$0xff]
      %v236 = vld [vmem:[%s203 + $0xa0] sm:$0x3]
      %v237 = vld [vmem:[%s203 + $0xa8] sm:$0xff]
      %v238 = vld [vmem:[%s203 + $0xb0] sm:$0xff]
      %v239 = vld [vmem:[%s203 + $0xb8] sm:$0x3]
      %v240 = vld [vmem:[%s203 + $0xc0] sm:$0xff]
      %v241 = vld [vmem:[%s203 + $0xc8] sm:$0xff]
      %v242 = vld [vmem:[%s203 + $0xd0] sm:$0x3]
      %v243 = vld [vmem:[%s203 + $0xd8] sm:$0xff]
      %v244 = vld [vmem:[%s203 + $0xe0] sm:$0xff]
      %v245 = vld [vmem:[%s203 + $0xe8] sm:$0x3]
      %v246 = vld [vmem:[%s1] sm:$0xf]
      %vm247 = vcmask 31744
      %v249 = vsel %vm247, %v216, 0
      %v252 = vsel %vm247, %v217, 0
      %v255 = vsel %vm247, %v219, 0
      %v258 = vsel %vm247, %v220, 0
      %v261 = vsel %vm247, %v222, 0
      %v264 = vsel %vm247, %v223, 0
      %v267 = vsel %vm247, %v225, 0
      %v270 = vsel %vm247, %v226, 0
      %v273 = vsel %vm247, %v228, 0
      %v276 = vsel %vm247, %v229, 0
      %v279 = vsel %vm247, %v231, 0
      %v282 = vsel %vm247, %v232, 0
      %v285 = vsel %vm247, %v234, 0
      %v288 = vsel %vm247, %v235, 0
      %v291 = vsel %vm247, %v237, 0
      %v294 = vsel %vm247, %v238, 0
      %vm296 = vcmask 1043456
      %v298 = vsel %vm296, %v246, 0
      %300 = vmatprep.subr.mxu0 0.0
      %301 = vmatpush1.msra.mxu0 %v298
      %302 = vmatprep.subr.mxu0 0.0
      %303 = vmatpush1.msra.mxu0 0.0
      %304 = vmatprep.subr.mxu0 0.0
      %305 = vmatpush1.msra.mxu0 0.0
      %306 = vmatprep.subr.mxu0 0.0
      %307 = vmatpush1.msra.mxu0 0.0
      %308 = vmatprep.subr.mxu0 0.0
      %309 = vmatpush1.msra.mxu0 0.0
      %310 = vmatprep.subr.mxu0 0.0
      %311 = vmatpush1.msra.mxu0 0.0
      %312 = vmatprep.subr.mxu0 0.0
      %313 = vmatpush1.msra.mxu0 0.0
      %314 = vmatprep.subr.mxu0 0.0
      %315 = vmatpush1.msra.mxu0 0.0
      %316 = vmatprep.subr.mxu0 0.0
      %317 = vmatpush1.msra.mxu0 0.0
      %318 = vmatprep.subr.mxu0 0.0
      %319 = vmatpush1.msra.mxu0 0.0
      %320 = vmatprep.subr.mxu0 0.0
      %321 = vmatpush1.msra.mxu0 0.0
      %322 = vmatprep.subr.mxu0 0.0
      %323 = vmatpush1.msra.mxu0 0.0
      %324 = vmatprep.subr.mxu0 0.0
      %325 = vmatpush1.msra.mxu0 0.0
      %326 = vmatprep.subr.mxu0 0.0
      %327 = vmatpush1.msra.mxu0 0.0
      %328 = vmatprep.subr.mxu0 0.0
      %329 = vmatpush1.msra.mxu0 0.0
      %330 = vmatprep.subr.mxu0 0.0
      %331 = vmatpush1.msra.mxu0 0.0
      %332 = vmatprep.subr.mxu0 0.0
      %333 = vmatpush1.msra.mxu0 0.0
      %334 = vmatprep.subr.mxu0 0.0
      %335 = vmatpush1.msra.mxu0 0.0
      %336 = vmatprep.subr.mxu0 0.0
      %337 = vmatpush1.msra.mxu0 0.0
      %338 = vmatprep.subr.mxu0 0.0
      %339 = vmatpush1.msra.mxu0 0.0
      %340 = vmatprep.subr.mxu0 0.0
      %341 = vmatpush1.msra.mxu0 0.0
      %342 = vmatprep.subr.mxu0 0.0
      %343 = vmatpush1.msra.mxu0 0.0
      %344 = vmatprep.subr.mxu0 0.0
      %345 = vmatpush1.msra.mxu0 0.0
      %346 = vmatprep.subr.mxu0 0.0
      %347 = vmatpush1.msra.mxu0 0.0
      %348 = vmatprep.subr.mxu0 0.0
      %349 = vmatpush1.msra.mxu0 0.0
      %350 = vmatprep.subr.mxu0 0.0
      %351 = vmatpush1.msra.mxu0 0.0
      %352 = vmatprep.subr.mxu0 0.0
      %353 = vmatpush1.msra.mxu0 0.0
      %354 = vmatprep.subr.mxu0 0.0
      %355 = vmatpush1.msra.mxu0 0.0
      %356 = vmatprep.subr.mxu0 0.0
      %357 = vmatpush1.msra.mxu0 0.0
      %358 = vmatprep.subr.mxu0 0.0
      %359 = vmatpush1.msra.mxu0 0.0
      %360 = vmatprep.subr.mxu0 0.0
      %361 = vmatpush1.msra.mxu0 0.0
      %362 = vmatprep.subr.mxu0 0.0
      %363 = vmatpush1.msra.mxu0 0.0
      %364 = vmatprep.mubr.f32.mxu0 0.0
      %365 = vmatmul.mubr.f32.gmra.mrb[0].mxu0 %v249
      %v366 = vpop.f32.mrb[0].mxu0
      %v367 = vadd.f32 0.0, %v366
      %v368 = vpop.f32.mrb[0].mxu0
      %369 = vmatprep.mubr.f32.mxu0 0.0
      %370 = vmatmul.mubr.f32.gmra.mrb[0].mxu0 %v252
      %v371 = vpop.f32.mrb[0].mxu0
      %v372 = vadd.f32 0.0, %v371
      %v373 = vpop.f32.mrb[0].mxu0
      %374 = vmatprep.mubr.f32.mxu0 0.0
      %375 = vmatmul.mubr.f32.gmra.mrb[0].mxu0 %v255
      %v376 = vpop.f32.mrb[0].mxu0
      %v377 = vadd.f32 0.0, %v376
      %v378 = vpop.f32.mrb[0].mxu0
      %379 = vmatprep.mubr.f32.mxu0 0.0
      %380 = vmatmul.mubr.f32.gmra.mrb[0].mxu0 %v258
      %v381 = vpop.f32.mrb[0].mxu0
      %v382 = vadd.f32 0.0, %v381
      %v383 = vpop.f32.mrb[0].mxu0
      %384 = vmatprep.mubr.f32.mxu0 0.0
      %385 = vmatmul.mubr.f32.gmra.mrb[0].mxu0 %v261
      %v386 = vpop.f32.mrb[0].mxu0
      %v387 = vadd.f32 0.0, %v386
      %v388 = vpop.f32.mrb[0].mxu0
      %389 = vmatprep.mubr.f32.mxu0 0.0
      %390 = vmatmul.mubr.f32.gmra.mrb[0].mxu0 %v264
      %v391 = vpop.f32.mrb[0].mxu0
      %v392 = vadd.f32 0.0, %v391
      %v393 = vpop.f32.mrb[0].mxu0
      %394 = vmatprep.mubr.f32.mxu0 0.0
      %395 = vmatmul.mubr.f32.gmra.mrb[0].mxu0 %v267
      %v396 = vpop.f32.mrb[0].mxu0
      %v397 = vadd.f32 0.0, %v396
      %v398 = vpop.f32.mrb[0].mxu0
      %399 = vmatprep.mubr.f32.mxu0 0.0
      %400 = vmatmul.mubr.f32.gmra.mrb[0].mxu0 %v270
      %v401 = vpop.f32.mrb[0].mxu0
      %v402 = vadd.f32 0.0, %v401
      %v403 = vpop.f32.mrb[0].mxu0
      %404 = vmatprep.mubr.f32.mxu0 0.0
      %405 = vmatmul.mubr.f32.gmra.mrb[0].mxu0 %v273
      %v406 = vpop.f32.mrb[0].mxu0
      %v407 = vadd.f32 0.0, %v406
      %v408 = vpop.f32.mrb[0].mxu0
      %409 = vmatprep.mubr.f32.mxu0 0.0
      %410 = vmatmul.mubr.f32.gmra.mrb[0].mxu0 %v276
      %v411 = vpop.f32.mrb[0].mxu0
      %v412 = vadd.f32 0.0, %v411
      %v413 = vpop.f32.mrb[0].mxu0
      %414 = vmatprep.mubr.f32.mxu0 0.0
      %415 = vmatmul.mubr.f32.gmra.mrb[0].mxu0 %v279
      %v416 = vpop.f32.mrb[0].mxu0
      %v417 = vadd.f32 0.0, %v416
      %v418 = vpop.f32.mrb[0].mxu0
      %419 = vmatprep.mubr.f32.mxu0 0.0
      %420 = vmatmul.mubr.f32.gmra.mrb[0].mxu0 %v282
      %v421 = vpop.f32.mrb[0].mxu0
      %v422 = vadd.f32 0.0, %v421
      %v423 = vpop.f32.mrb[0].mxu0
      %424 = vmatprep.mubr.f32.mxu0 0.0
      %425 = vmatmul.mubr.f32.gmra.mrb[0].mxu0 %v285
      %v426 = vpop.f32.mrb[0].mxu0
      %v427 = vadd.f32 0.0, %v426
      %v428 = vpop.f32.mrb[0].mxu0
      %429 = vmatprep.mubr.f32.mxu0 0.0
      %430 = vmatmul.mubr.f32.gmra.mrb[0].mxu0 %v288
      %v431 = vpop.f32.mrb[0].mxu0
      %v432 = vadd.f32 0.0, %v431
      %v433 = vpop.f32.mrb[0].mxu0
      %434 = vmatprep.mubr.f32.mxu0 0.0
      %435 = vmatmul.mubr.f32.gmra.mrb[0].mxu0 %v291
      %v436 = vpop.f32.mrb[0].mxu0
      %v437 = vadd.f32 0.0, %v436
      %v438 = vpop.f32.mrb[0].mxu0
      %439 = vmatprep.mubr.f32.mxu0 0.0
      %440 = vmatmul.mubr.f32.gmra.mrb[0].mxu0 %v294
      %v441 = vpop.f32.mrb[0].mxu0
      %v442 = vadd.f32 0.0, %v441
      %v443 = vpop.f32.mrb[0].mxu0
      %444 = vdwg.mxu0
      %445 = vst [vmem:[#allocation2] sm:$0xff] %v367
      %446 = vst [vmem:[#allocation2 + $0x8] sm:$0xff] %v372
      %447 = vst [vmem:[#allocation2 + $0x10] sm:$0xff] %v377
      %448 = vst [vmem:[#allocation2 + $0x18] sm:$0xff] %v382
      %449 = vst [vmem:[#allocation2 + $0x20] sm:$0xff] %v387
      %450 = vst [vmem:[#allocation2 + $0x28] sm:$0xff] %v392
      %451 = vst [vmem:[#allocation2 + $0x30] sm:$0xff] %v397
      %452 = vst [vmem:[#allocation2 + $0x38] sm:$0xff] %v402
      %453 = vst [vmem:[#allocation2 + $0x40] sm:$0xff] %v407
      %454 = vst [vmem:[#allocation2 + $0x48] sm:$0xff] %v412
      %455 = vst [vmem:[#allocation2 + $0x50] sm:$0xff] %v417
      %456 = vst [vmem:[#allocation2 + $0x58] sm:$0xff] %v422
      %457 = vst [vmem:[#allocation2 + $0x60] sm:$0xff] %v427
      %458 = vst [vmem:[#allocation2 + $0x68] sm:$0xff] %v432
      %459 = vst [vmem:[#allocation2 + $0x70] sm:$0xff] %v437
      %460 = vst [vmem:[#allocation2 + $0x78] sm:$0xff] %v442
      %vm469 = vcmask 1046528
      %v470 = vrot.slane %v216, 1
      %v471 = vrot.slane %v217, 1
      %v472 = vsel %vm469, %v470, %v471
      %v473 = vrot.slane %v218, 1
      %v474 = vsel %vm469, %v471, %v473
      %v475 = vrot.slane %v219, 1
      %v476 = vrot.slane %v220, 1
      %v477 = vsel %vm469, %v475, %v476
      %v478 = vrot.slane %v221, 1
      %v479 = vsel %vm469, %v476, %v478
      %v480 = vrot.slane %v222, 1
      %v481 = vrot.slane %v223, 1
      %v482 = vsel %vm469, %v480, %v481
      %v483 = vrot.slane %v224, 1
      %v484 = vsel %vm469, %v481, %v483
      %v485 = vrot.slane %v225, 1
      %v486 = vrot.slane %v226, 1
      %v487 = vsel %vm469, %v485, %v486
      %v488 = vrot.slane %v227, 1
      %v489 = vsel %vm469, %v486, %v488
      %v490 = vrot.slane %v228, 1
      %v491 = vrot.slane %v229, 1
      %v492 = vsel %vm469, %v490, %v491
      %v493 = vrot.slane %v230, 1
      %v494 = vsel %vm469, %v491, %v493
      %v495 = vrot.slane %v231, 1
      %v496 = vrot.slane %v232, 1
      %v497 = vsel %vm469, %v495, %v496
      %v498 = vrot.slane %v233, 1
      %v499 = vsel %vm469, %v496, %v498
      %v500 = vrot.slane %v234, 1
      %v501 = vrot.slane %v235, 1
      %v502 = vsel %vm469, %v500, %v501
      %v503 = vrot.slane %v236, 1
      %v504 = vsel %vm469, %v501, %v503
      %v505 = vrot.slane %v237, 1
      %v506 = vrot.slane %v238, 1
      %v507 = vsel %vm469, %v505, %v506
      %v508 = vrot.slane %v239, 1
      %v509 = vsel %vm469, %v506, %v508
      %s510 = scalar_lea.vmem %s1, 4
      %v511 = vld [vmem:[%s510] sm:$0xf]
      %v512 = vsel %vm247, %v472, 0
      %v514 = vsel %vm247, %v474, 0
      %v516 = vsel %vm247, %v477, 0
      %v518 = vsel %vm247, %v479, 0
      %v520 = vsel %vm247, %v482, 0
      %v522 = vsel %vm247, %v484, 0
      %v524 = vsel %vm247, %v487, 0
      %v526 = vsel %vm247, %v489, 0
      %v528 = vsel %vm247, %v492, 0
      %v530 = vsel %vm247, %v494, 0
      %v532 = vsel %vm247, %v497, 0
      %v534 = vsel %vm247, %v499, 0
      %v536 = vsel %vm247, %v502, 0
      %v538 = vsel %vm247, %v504, 0
      %v540 = vsel %vm247, %v507, 0
      %v542 = vsel %vm247, %v509, 0
      %v545 = vsel %vm296, %v511, 0
      %547 = vmatprep.subr.mxu0 0.0
      %548 = vmatpush1.msra.mxu0 %v545
      %549 = vmatprep.subr.mxu0 0.0
      %550 = vmatpush1.msra.mxu0 0.0
      %551 = vmatprep.subr.mxu0 0.0
      %552 = vmatpush1.msra.mxu0 0.0
      %553 = vmatprep.subr.mxu0 0.0
      %554 = vmatpush1.msra.mxu0 0.0
      %555 = vmatprep.subr.mxu0 0.0
      %556 = vmatpush1.msra.mxu0 0.0
      %557 = vmatprep.subr.mxu0 0.0
      %558 = vmatpush1.msra.mxu0 0.0
      %559 = vmatprep.subr.mxu0 0.0
      %560 = vmatpush1.msra.mxu0 0.0
      %561 = vmatprep.subr.mxu0 0.0
      %562 = vmatpush1.msra.mxu0 0.0
      %563 = vmatprep.subr.mxu0 0.0
      %564 = vmatpush1.msra.mxu0 0.0
      %565 = vmatprep.subr.mxu0 0.0
      %566 = vmatpush1.msra.mxu0 0.0
      %567 = vmatprep.subr.mxu0 0.0
      %568 = vmatpush1.msra.mxu0 0.0
      %569 = vmatprep.subr.mxu0 0.0
      %570 = vmatpush1.msra.mxu0 0.0
      %571 = vmatprep.subr.mxu0 0.0
      %572 = vmatpush1.msra.mxu0 0.0
      %573 = vmatprep.subr.mxu0 0.0
      %574 = vmatpush1.msra.mxu0 0.0
      %575 = vmatprep.subr.mxu0 0.0
      %576 = vmatpush1.msra.mxu0 0.0
      %577 = vmatprep.subr.mxu0 0.0
      %578 = vmatpush1.msra.mxu0 0.0
      %579 = vmatprep.subr.mxu0 0.0
      %580 = vmatpush1.msra.mxu0 0.0
      %581 = vmatprep.subr.mxu0 0.0
      %582 = vmatpush1.msra.mxu0 0.0
      %583 = vmatprep.subr.mxu0 0.0
      %584 = vmatpush1.msra.mxu0 0.0
      %585 = vmatprep.subr.mxu0 0.0
      %586 = vmatpush1.msra.mxu0 0.0
      %587 = vmatprep.subr.mxu0 0.0
      %588 = vmatpush1.msra.mxu0 0.0
      %589 = vmatprep.subr.mxu0 0.0
      %590 = vmatpush1.msra.mxu0 0.0
      %591 = vmatprep.subr.mxu0 0.0
      %592 = vmatpush1.msra.mxu0 0.0
      %593 = vmatprep.subr.mxu0 0.0
      %594 = vmatpush1.msra.mxu0 0.0
      %595 = vmatprep.subr.mxu0 0.0
      %596 = vmatpush1.msra.mxu0 0.0
      %597 = vmatprep.subr.mxu0 0.0
      %598 = vmatpush1.msra.mxu0 0.0
      %599 = vmatprep.subr.mxu0 0.0
      %600 = vmatpush1.msra.mxu0 0.0
      %601 = vmatprep.subr.mxu0 0.0
      %602 = vmatpush1.msra.mxu0 0.0
      %603 = vmatprep.subr.mxu0 0.0
      %604 = vmatpush1.msra.mxu0 0.0
      %605 = vmatprep.subr.mxu0 0.0
      %606 = vmatpush1.msra.mxu0 0.0
      %607 = vmatprep.subr.mxu0 0.0
      %608 = vmatpush1.msra.mxu0 0.0
      %609 = vmatprep.subr.mxu0 0.0
      %610 = vmatpush1.msra.mxu0 0.0
      %611 = vmatprep.mubr.f32.mxu0 0.0
      %612 = vmatmul.mubr.f32.gmra.mrb[0].mxu0 %v512
      %v613 = vpop.f32.mrb[0].mxu0
      %v614 = vadd.f32 0.0, %v613
      %v615 = vpop.f32.mrb[0].mxu0
      %616 = vmatprep.mubr.f32.mxu0 0.0
      %617 = vmatmul.mubr.f32.gmra.mrb[0].mxu0 %v514
      %v618 = vpop.f32.mrb[0].mxu0
      %v619 = vadd.f32 0.0, %v618
      %v620 = vpop.f32.mrb[0].mxu0
      %621 = vmatprep.mubr.f32.mxu0 0.0
      %622 = vmatmul.mubr.f32.gmra.mrb[0].mxu0 %v516
      %v623 = vpop.f32.mrb[0].mxu0
      %v624 = vadd.f32 0.0, %v623
      %v625 = vpop.f32.mrb[0].mxu0
      %626 = vmatprep.mubr.f32.mxu0 0.0
      %627 = vmatmul.mubr.f32.gmra.mrb[0].mxu0 %v518
      %v628 = vpop.f32.mrb[0].mxu0
      %v629 = vadd.f32 0.0, %v628
      %v630 = vpop.f32.mrb[0].mxu0
      %631 = vmatprep.mubr.f32.mxu0 0.0
      %632 = vmatmul.mubr.f32.gmra.mrb[0].mxu0 %v520
      %v633 = vpop.f32.mrb[0].mxu0
      %v634 = vadd.f32 0.0, %v633
      %v635 = vpop.f32.mrb[0].mxu0
      %636 = vmatprep.mubr.f32.mxu0 0.0
      %637 = vmatmul.mubr.f32.gmra.mrb[0].mxu0 %v522
      %v638 = vpop.f32.mrb[0].mxu0
      %v639 = vadd.f32 0.0, %v638
      %v640 = vpop.f32.mrb[0].mxu0
      %641 = vmatprep.mubr.f32.mxu0 0.0
      %642 = vmatmul.mubr.f32.gmra.mrb[0].mxu0 %v524
      %v643 = vpop.f32.mrb[0].mxu0
      %v644 = vadd.f32 0.0, %v643
      %v645 = vpop.f32.mrb[0].mxu0
      %646 = vmatprep.mubr.f32.mxu0 0.0
      %647 = vmatmul.mubr.f32.gmra.mrb[0].mxu0 %v526
      %v648 = vpop.f32.mrb[0].mxu0
      %v649 = vadd.f32 0.0, %v648
      %v650 = vpop.f32.mrb[0].mxu0
      %651 = vmatprep.mubr.f32.mxu0 0.0
      %652 = vmatmul.mubr.f32.gmra.mrb[0].mxu0 %v528
      %v653 = vpop.f32.mrb[0].mxu0
      %v654 = vadd.f32 0.0, %v653
      %v655 = vpop.f32.mrb[0].mxu0
      %656 = vmatprep.mubr.f32.mxu0 0.0
      %657 = vmatmul.mubr.f32.gmra.mrb[0].mxu0 %v530
      %v658 = vpop.f32.mrb[0].mxu0
      %v659 = vadd.f32 0.0, %v658
      %v660 = vpop.f32.mrb[0].mxu0
      %661 = vmatprep.mubr.f32.mxu0 0.0
      %662 = vmatmul.mubr.f32.gmra.mrb[0].mxu0 %v532
      %v663 = vpop.f32.mrb[0].mxu0
      %v664 = vadd.f32 0.0, %v663
      %v665 = vpop.f32.mrb[0].mxu0
      %666 = vmatprep.mubr.f32.mxu0 0.0
      %667 = vmatmul.mubr.f32.gmra.mrb[0].mxu0 %v534
      %v668 = vpop.f32.mrb[0].mxu0
      %v669 = vadd.f32 0.0, %v668
      %v670 = vpop.f32.mrb[0].mxu0
      %671 = vmatprep.mubr.f32.mxu0 0.0
      %672 = vmatmul.mubr.f32.gmra.mrb[0].mxu0 %v536
      %v673 = vpop.f32.mrb[0].mxu0
      %v674 = vadd.f32 0.0, %v673
      %v675 = vpop.f32.mrb[0].mxu0
      %676 = vmatprep.mubr.f32.mxu0 0.0
      %677 = vmatmul.mubr.f32.gmra.mrb[0].mxu0 %v538
      %v678 = vpop.f32.mrb[0].mxu0
      %v679 = vadd.f32 0.0, %v678
      %v680 = vpop.f32.mrb[0].mxu0
      %681 = vmatprep.mubr.f32.mxu0 0.0
      %682 = vmatmul.mubr.f32.gmra.mrb[0].mxu0 %v540
      %v683 = vpop.f32.mrb[0].mxu0
      %v684 = vadd.f32 0.0, %v683
      %v685 = vpop.f32.mrb[0].mxu0
      %686 = vmatprep.mubr.f32.mxu0 0.0
      %687 = vmatmul.mubr.f32.gmra.mrb[0].mxu0 %v542
      %v688 = vpop.f32.mrb[0].mxu0
      %v689 = vadd.f32 0.0, %v688
      %v690 = vpop.f32.mrb[0].mxu0
      %691 = vdwg.mxu0
      %v692 = vld [vmem:[#allocation2] sm:$0xff]
      %v693 = vld [vmem:[#allocation2 + $0x8] sm:$0xff]
      %v694 = vld [vmem:[#allocation2 + $0x10] sm:$0xff]
      %v695 = vld [vmem:[#allocation2 + $0x18] sm:$0xff]
      %v696 = vld [vmem:[#allocation2 + $0x20] sm:$0xff]
      %v697 = vld [vmem:[#allocation2 + $0x28] sm:$0xff]
      %v698 = vld [vmem:[#allocation2 + $0x30] sm:$0xff]
      %v699 = vld [vmem:[#allocation2 + $0x38] sm:$0xff]
      %v700 = vld [vmem:[#allocation2 + $0x40] sm:$0xff]
      %v701 = vld [vmem:[#allocation2 + $0x48] sm:$0xff]
      %v702 = vld [vmem:[#allocation2 + $0x50] sm:$0xff]
      %v703 = vld [vmem:[#allocation2 + $0x58] sm:$0xff]
      %v704 = vld [vmem:[#allocation2 + $0x60] sm:$0xff]
      %v705 = vld [vmem:[#allocation2 + $0x68] sm:$0xff]
      %v706 = vld [vmem:[#allocation2 + $0x70] sm:$0xff]
      %v707 = vld [vmem:[#allocation2 + $0x78] sm:$0xff]
      %v708 = vadd.f32 %v692, %v614
      %v709 = vadd.f32 %v693, %v619
      %v710 = vadd.f32 %v694, %v624
      %v711 = vadd.f32 %v695, %v629
      %v712 = vadd.f32 %v696, %v634
      %v713 = vadd.f32 %v697, %v639
      %v714 = vadd.f32 %v698, %v644
      %v715 = vadd.f32 %v699, %v649
      %v716 = vadd.f32 %v700, %v654
      %v717 = vadd.f32 %v701, %v659
      %v718 = vadd.f32 %v702, %v664
      %v719 = vadd.f32 %v703, %v669
      %v720 = vadd.f32 %v704, %v674
      %v721 = vadd.f32 %v705, %v679
      %v722 = vadd.f32 %v706, %v684
      %v723 = vadd.f32 %v707, %v689
      %724 = vst [vmem:[#allocation2] sm:$0xff] %v708
      %725 = vst [vmem:[#allocation2 + $0x8] sm:$0xff] %v709
      %726 = vst [vmem:[#allocation2 + $0x10] sm:$0xff] %v710
      %727 = vst [vmem:[#allocation2 + $0x18] sm:$0xff] %v711
      %728 = vst [vmem:[#allocation2 + $0x20] sm:$0xff] %v712
      %729 = vst [vmem:[#allocation2 + $0x28] sm:$0xff] %v713
      %730 = vst [vmem:[#allocation2 + $0x30] sm:$0xff] %v714
      %731 = vst [vmem:[#allocation2 + $0x38] sm:$0xff] %v715
      %732 = vst [vmem:[#allocation2 + $0x40] sm:$0xff] %v716
      %733 = vst [vmem:[#allocation2 + $0x48] sm:$0xff] %v717
      %734 = vst [vmem:[#allocation2 + $0x50] sm:$0xff] %v718
      %735 = vst [vmem:[#allocation2 + $0x58] sm:$0xff] %v719
      %736 = vst [vmem:[#allocation2 + $0x60] sm:$0xff] %v720
      %737 = vst [vmem:[#allocation2 + $0x68] sm:$0xff] %v721
      %738 = vst [vmem:[#allocation2 + $0x70] sm:$0xff] %v722
      %739 = vst [vmem:[#allocation2 + $0x78] sm:$0xff] %v723
      %vm740 = vcmask 1045504
      %v741 = vrot.slane %v216, 2
      %v742 = vrot.slane %v217, 2
      %v743 = vsel %vm740, %v741, %v742
      %v744 = vrot.slane %v218, 2
      %v745 = vsel %vm740, %v742, %v744
      %v746 = vrot.slane %v219, 2
      %v747 = vrot.slane %v220, 2
      %v748 = vsel %vm740, %v746, %v747
      %v749 = vrot.slane %v221, 2
      %v750 = vsel %vm740, %v747, %v749
      %v751 = vrot.slane %v222, 2
      %v752 = vrot.slane %v223, 2
      %v753 = vsel %vm740, %v751, %v752
      %v754 = vrot.slane %v224, 2
      %v755 = vsel %vm740, %v752, %v754
      %v756 = vrot.slane %v225, 2
      %v757 = vrot.slane %v226, 2
      %v758 = vsel %vm740, %v756, %v757
      %v759 = vrot.slane %v227, 2
      %v760 = vsel %vm740, %v757, %v759
      %v761 = vrot.slane %v228, 2
      %v762 = vrot.slane %v229, 2
      %v763 = vsel %vm740, %v761, %v762
      %v764 = vrot.slane %v230, 2
      %v765 = vsel %vm740, %v762, %v764
      %v766 = vrot.slane %v231, 2
      %v767 = vrot.slane %v232, 2
      %v768 = vsel %vm740, %v766, %v767
      %v769 = vrot.slane %v233, 2
      %v770 = vsel %vm740, %v767, %v769
      %v771 = vrot.slane %v234, 2
      %v772 = vrot.slane %v235, 2
      %v773 = vsel %vm740, %v771, %v772
      %v774 = vrot.slane %v236, 2
      %v775 = vsel %vm740, %v772, %v774
      %v776 = vrot.slane %v237, 2
      %v777 = vrot.slane %v238, 2
      %v778 = vsel %vm740, %v776, %v777
      %v779 = vrot.slane %v239, 2
      %v780 = vsel %vm740, %v777, %v779
      %s781 = scalar_lea.vmem %s1, 8
      %v782 = vld [vmem:[%s781] sm:$0xf]
      %v783 = vsel %vm247, %v743, 0
      %v785 = vsel %vm247, %v745, 0
      %v787 = vsel %vm247, %v748, 0
      %v789 = vsel %vm247, %v750, 0
      %v791 = vsel %vm247, %v753, 0
      %v793 = vsel %vm247, %v755, 0
      %v795 = vsel %vm247, %v758, 0
      %v797 = vsel %vm247, %v760, 0
      %v799 = vsel %vm247, %v763, 0
      %v801 = vsel %vm247, %v765, 0
      %v803 = vsel %vm247, %v768, 0
      %v805 = vsel %vm247, %v770, 0
      %v807 = vsel %vm247, %v773, 0
      %v809 = vsel %vm247, %v775, 0
      %v811 = vsel %vm247, %v778, 0
      %v813 = vsel %vm247, %v780, 0
      %v816 = vsel %vm296, %v782, 0
      %818 = vmatprep.subr.mxu0 0.0
      %819 = vmatpush1.msra.mxu0 %v816
      %820 = vmatprep.subr.mxu0 0.0
      %821 = vmatpush1.msra.mxu0 0.0
      %822 = vmatprep.subr.mxu0 0.0
      %823 = vmatpush1.msra.mxu0 0.0
      %824 = vmatprep.subr.mxu0 0.0
      %825 = vmatpush1.msra.mxu0 0.0
      %826 = vmatprep.subr.mxu0 0.0
      %827 = vmatpush1.msra.mxu0 0.0
      %828 = vmatprep.subr.mxu0 0.0
      %829 = vmatpush1.msra.mxu0 0.0
      %830 = vmatprep.subr.mxu0 0.0
      %831 = vmatpush1.msra.mxu0 0.0
      %832 = vmatprep.subr.mxu0 0.0
      %833 = vmatpush1.msra.mxu0 0.0
      %834 = vmatprep.subr.mxu0 0.0
      %835 = vmatpush1.msra.mxu0 0.0
      %836 = vmatprep.subr.mxu0 0.0
      %837 = vmatpush1.msra.mxu0 0.0
      %838 = vmatprep.subr.mxu0 0.0
      %839 = vmatpush1.msra.mxu0 0.0
      %840 = vmatprep.subr.mxu0 0.0
      %841 = vmatpush1.msra.mxu0 0.0
      %842 = vmatprep.subr.mxu0 0.0
      %843 = vmatpush1.msra.mxu0 0.0
      %844 = vmatprep.subr.mxu0 0.0
      %845 = vmatpush1.msra.mxu0 0.0
      %846 = vmatprep.subr.mxu0 0.0
      %847 = vmatpush1.msra.mxu0 0.0
      %848 = vmatprep.subr.mxu0 0.0
      %849 = vmatpush1.msra.mxu0 0.0
      %850 = vmatprep.subr.mxu0 0.0
      %851 = vmatpush1.msra.mxu0 0.0
      %852 = vmatprep.subr.mxu0 0.0
      %853 = vmatpush1.msra.mxu0 0.0
      %854 = vmatprep.subr.mxu0 0.0
      %855 = vmatpush1.msra.mxu0 0.0
      %856 = vmatprep.subr.mxu0 0.0
      %857 = vmatpush1.msra.mxu0 0.0
      %858 = vmatprep.subr.mxu0 0.0
      %859 = vmatpush1.msra.mxu0 0.0
      %860 = vmatprep.subr.mxu0 0.0
      %861 = vmatpush1.msra.mxu0 0.0
      %862 = vmatprep.subr.mxu0 0.0
      %863 = vmatpush1.msra.mxu0 0.0
      %864 = vmatprep.subr.mxu0 0.0
      %865 = vmatpush1.msra.mxu0 0.0
      %866 = vmatprep.subr.mxu0 0.0
      %867 = vmatpush1.msra.mxu0 0.0
      %868 = vmatprep.subr.mxu0 0.0
      %869 = vmatpush1.msra.mxu0 0.0
      %870 = vmatprep.subr.mxu0 0.0
      %871 = vmatpush1.msra.mxu0 0.0
      %872 = vmatprep.subr.mxu0 0.0
      %873 = vmatpush1.msra.mxu0 0.0
      %874 = vmatprep.subr.mxu0 0.0
      %875 = vmatpush1.msra.mxu0 0.0
      %876 = vmatprep.subr.mxu0 0.0
      %877 = vmatpush1.msra.mxu0 0.0
      %878 = vmatprep.subr.mxu0 0.0
      %879 = vmatpush1.msra.mxu0 0.0
      %880 = vmatprep.subr.mxu0 0.0
      %881 = vmatpush1.msra.mxu0 0.0
      %882 = vmatprep.mubr.f32.mxu0 0.0
      %883 = vmatmul.mubr.f32.gmra.mrb[0].mxu0 %v783
      %v884 = vpop.f32.mrb[0].mxu0
      %v885 = vadd.f32 0.0, %v884
      %v886 = vpop.f32.mrb[0].mxu0
      %887 = vmatprep.mubr.f32.mxu0 0.0
      %888 = vmatmul.mubr.f32.gmra.mrb[0].mxu0 %v785
      %v889 = vpop.f32.mrb[0].mxu0
      %v890 = vadd.f32 0.0, %v889
      %v891 = vpop.f32.mrb[0].mxu0
      %892 = vmatprep.mubr.f32.mxu0 0.0
      %893 = vmatmul.mubr.f32.gmra.mrb[0].mxu0 %v787
      %v894 = vpop.f32.mrb[0].mxu0
      %v895 = vadd.f32 0.0, %v894
      %v896 = vpop.f32.mrb[0].mxu0
      %897 = vmatprep.mubr.f32.mxu0 0.0
      %898 = vmatmul.mubr.f32.gmra.mrb[0].mxu0 %v789
      %v899 = vpop.f32.mrb[0].mxu0
      %v900 = vadd.f32 0.0, %v899
      %v901 = vpop.f32.mrb[0].mxu0
      %902 = vmatprep.mubr.f32.mxu0 0.0
      %903 = vmatmul.mubr.f32.gmra.mrb[0].mxu0 %v791
      %v904 = vpop.f32.mrb[0].mxu0
      %v905 = vadd.f32 0.0, %v904
      %v906 = vpop.f32.mrb[0].mxu0
      %907 = vmatprep.mubr.f32.mxu0 0.0
      %908 = vmatmul.mubr.f32.gmra.mrb[0].mxu0 %v793
      %v909 = vpop.f32.mrb[0].mxu0
      %v910 = vadd.f32 0.0, %v909
      %v911 = vpop.f32.mrb[0].mxu0
      %912 = vmatprep.mubr.f32.mxu0 0.0
      %913 = vmatmul.mubr.f32.gmra.mrb[0].mxu0 %v795
      %v914 = vpop.f32.mrb[0].mxu0
      %v915 = vadd.f32 0.0, %v914
      %v916 = vpop.f32.mrb[0].mxu0
      %917 = vmatprep.mubr.f32.mxu0 0.0
      %918 = vmatmul.mubr.f32.gmra.mrb[0].mxu0 %v797
      %v919 = vpop.f32.mrb[0].mxu0
      %v920 = vadd.f32 0.0, %v919
      %v921 = vpop.f32.mrb[0].mxu0
      %922 = vmatprep.mubr.f32.mxu0 0.0
      %923 = vmatmul.mubr.f32.gmra.mrb[0].mxu0 %v799
      %v924 = vpop.f32.mrb[0].mxu0
      %v925 = vadd.f32 0.0, %v924
      %v926 = vpop.f32.mrb[0].mxu0
      %927 = vmatprep.mubr.f32.mxu0 0.0
      %928 = vmatmul.mubr.f32.gmra.mrb[0].mxu0 %v801
      %v929 = vpop.f32.mrb[0].mxu0
      %v930 = vadd.f32 0.0, %v929
      %v931 = vpop.f32.mrb[0].mxu0
      %932 = vmatprep.mubr.f32.mxu0 0.0
      %933 = vmatmul.mubr.f32.gmra.mrb[0].mxu0 %v803
      %v934 = vpop.f32.mrb[0].mxu0
      %v935 = vadd.f32 0.0, %v934
      %v936 = vpop.f32.mrb[0].mxu0
      %937 = vmatprep.mubr.f32.mxu0 0.0
      %938 = vmatmul.mubr.f32.gmra.mrb[0].mxu0 %v805
      %v939 = vpop.f32.mrb[0].mxu0
      %v940 = vadd.f32 0.0, %v939
      %v941 = vpop.f32.mrb[0].mxu0
      %942 = vmatprep.mubr.f32.mxu0 0.0
      %943 = vmatmul.mubr.f32.gmra.mrb[0].mxu0 %v807
      %v944 = vpop.f32.mrb[0].mxu0
      %v945 = vadd.f32 0.0, %v944
      %v946 = vpop.f32.mrb[0].mxu0
      %947 = vmatprep.mubr.f32.mxu0 0.0
      %948 = vmatmul.mubr.f32.gmra.mrb[0].mxu0 %v809
      %v949 = vpop.f32.mrb[0].mxu0
      %v950 = vadd.f32 0.0, %v949
      %v951 = vpop.f32.mrb[0].mxu0
      %952 = vmatprep.mubr.f32.mxu0 0.0
      %953 = vmatmul.mubr.f32.gmra.mrb[0].mxu0 %v811
      %v954 = vpop.f32.mrb[0].mxu0
      %v955 = vadd.f32 0.0, %v954
      %v956 = vpop.f32.mrb[0].mxu0
      %957 = vmatprep.mubr.f32.mxu0 0.0
      %958 = vmatmul.mubr.f32.gmra.mrb[0].mxu0 %v813
      %v959 = vpop.f32.mrb[0].mxu0
      %v960 = vadd.f32 0.0, %v959
      %v961 = vpop.f32.mrb[0].mxu0
      %962 = vdwg.mxu0
      %v963 = vld [vmem:[#allocation2] sm:$0xff]
      %v964 = vld [vmem:[#allocation2 + $0x8] sm:$0xff]
      %v965 = vld [vmem:[#allocation2 + $0x10] sm:$0xff]
      %v966 = vld [vmem:[#allocation2 + $0x18] sm:$0xff]
      %v967 = vld [vmem:[#allocation2 + $0x20] sm:$0xff]
      %v968 = vld [vmem:[#allocation2 + $0x28] sm:$0xff]
      %v969 = vld [vmem:[#allocation2 + $0x30] sm:$0xff]
      %v970 = vld [vmem:[#allocation2 + $0x38] sm:$0xff]
      %v971 = vld [vmem:[#allocation2 + $0x40] sm:$0xff]
      %v972 = vld [vmem:[#allocation2 + $0x48] sm:$0xff]
      %v973 = vld [vmem:[#allocation2 + $0x50] sm:$0xff]
      %v974 = vld [vmem:[#allocation2 + $0x58] sm:$0xff]
      %v975 = vld [vmem:[#allocation2 + $0x60] sm:$0xff]
      %v976 = vld [vmem:[#allocation2 + $0x68] sm:$0xff]
      %v977 = vld [vmem:[#allocation2 + $0x70] sm:$0xff]
      %v978 = vld [vmem:[#allocation2 + $0x78] sm:$0xff]
      %v979 = vadd.f32 %v963, %v885
      %v980 = vadd.f32 %v964, %v890
      %v981 = vadd.f32 %v965, %v895
      %v982 = vadd.f32 %v966, %v900
      %v983 = vadd.f32 %v967, %v905
      %v984 = vadd.f32 %v968, %v910
      %v985 = vadd.f32 %v969, %v915
      %v986 = vadd.f32 %v970, %v920
      %v987 = vadd.f32 %v971, %v925
      %v988 = vadd.f32 %v972, %v930
      %v989 = vadd.f32 %v973, %v935
      %v990 = vadd.f32 %v974, %v940
      %v991 = vadd.f32 %v975, %v945
      %v992 = vadd.f32 %v976, %v950
      %v993 = vadd.f32 %v977, %v955
      %v994 = vadd.f32 %v978, %v960
      %995 = vst [vmem:[#allocation2] sm:$0xff] %v979
      %996 = vst [vmem:[#allocation2 + $0x8] sm:$0xff] %v980
      %997 = vst [vmem:[#allocation2 + $0x10] sm:$0xff] %v981
      %998 = vst [vmem:[#allocation2 + $0x18] sm:$0xff] %v982
      %999 = vst [vmem:[#allocation2 + $0x20] sm:$0xff] %v983
      %1000 = vst [vmem:[#allocation2 + $0x28] sm:$0xff] %v984
      %1001 = vst [vmem:[#allocation2 + $0x30] sm:$0xff] %v985
      %1002 = vst [vmem:[#allocation2 + $0x38] sm:$0xff] %v986
      %1003 = vst [vmem:[#allocation2 + $0x40] sm:$0xff] %v987
      %1004 = vst [vmem:[#allocation2 + $0x48] sm:$0xff] %v988
      %1005 = vst [vmem:[#allocation2 + $0x50] sm:$0xff] %v989
      %1006 = vst [vmem:[#allocation2 + $0x58] sm:$0xff] %v990
      %1007 = vst [vmem:[#allocation2 + $0x60] sm:$0xff] %v991
      %1008 = vst [vmem:[#allocation2 + $0x68] sm:$0xff] %v992
      %1009 = vst [vmem:[#allocation2 + $0x70] sm:$0xff] %v993
      %1010 = vst [vmem:[#allocation2 + $0x78] sm:$0xff] %v994
      %s1011 = scalar_lea.vmem %s1, 12
      %v1012 = vld [vmem:[%s1011] sm:$0xf]
      %v1014 = vsel %vm247, %v240, 0
      %v1017 = vsel %vm247, %v241, 0
      %v1020 = vsel %vm296, %v1012, 0
      %1022 = vmatprep.subr.mxu0 0.0
      %1023 = vmatpush1.msra.mxu0 %v1020
      %1024 = vmatprep.subr.mxu0 0.0
      %1025 = vmatpush1.msra.mxu0 0.0
      %1026 = vmatprep.subr.mxu0 0.0
      %1027 = vmatpush1.msra.mxu0 0.0
      %1028 = vmatprep.subr.mxu0 0.0
      %1029 = vmatpush1.msra.mxu0 0.0
      %1030 = vmatprep.subr.mxu0 0.0
      %1031 = vmatpush1.msra.mxu0 0.0
      %1032 = vmatprep.subr.mxu0 0.0
      %1033 = vmatpush1.msra.mxu0 0.0
      %1034 = vmatprep.subr.mxu0 0.0
      %1035 = vmatpush1.msra.mxu0 0.0
      %1036 = vmatprep.subr.mxu0 0.0
      %1037 = vmatpush1.msra.mxu0 0.0
      %1038 = vmatprep.subr.mxu0 0.0
      %1039 = vmatpush1.msra.mxu0 0.0
      %1040 = vmatprep.subr.mxu0 0.0
      %1041 = vmatpush1.msra.mxu0 0.0
      %1042 = vmatprep.subr.mxu0 0.0
      %1043 = vmatpush1.msra.mxu0 0.0
      %1044 = vmatprep.subr.mxu0 0.0
      %1045 = vmatpush1.msra.mxu0 0.0
      %1046 = vmatprep.subr.mxu0 0.0
      %1047 = vmatpush1.msra.mxu0 0.0
      %1048 = vmatprep.subr.mxu0 0.0
      %1049 = vmatpush1.msra.mxu0 0.0
      %1050 = vmatprep.subr.mxu0 0.0
      %1051 = vmatpush1.msra.mxu0 0.0
      %1052 = vmatprep.subr.mxu0 0.0
      %1053 = vmatpush1.msra.mxu0 0.0
      %1054 = vmatprep.subr.mxu0 0.0
      %1055 = vmatpush1.msra.mxu0 0.0
      %1056 = vmatprep.subr.mxu0 0.0
      %1057 = vmatpush1.msra.mxu0 0.0
      %1058 = vmatprep.subr.mxu0 0.0
      %1059 = vmatpush1.msra.mxu0 0.0
      %1060 = vmatprep.subr.mxu0 0.0
      %1061 = vmatpush1.msra.mxu0 0.0
      %1062 = vmatprep.subr.mxu0 0.0
      %1063 = vmatpush1.msra.mxu0 0.0
      %1064 = vmatprep.subr.mxu0 0.0
      %1065 = vmatpush1.msra.mxu0 0.0
      %1066 = vmatprep.subr.mxu0 0.0
      %1067 = vmatpush1.msra.mxu0 0.0
      %1068 = vmatprep.subr.mxu0 0.0
      %1069 = vmatpush1.msra.mxu0 0.0
      %1070 = vmatprep.subr.mxu0 0.0
      %1071 = vmatpush1.msra.mxu0 0.0
      %1072 = vmatprep.subr.mxu0 0.0
      %1073 = vmatpush1.msra.mxu0 0.0
      %1074 = vmatprep.subr.mxu0 0.0
      %1075 = vmatpush1.msra.mxu0 0.0
      %1076 = vmatprep.subr.mxu0 0.0
      %1077 = vmatpush1.msra.mxu0 0.0
      %1078 = vmatprep.subr.mxu0 0.0
      %1079 = vmatpush1.msra.mxu0 0.0
      %1080 = vmatprep.subr.mxu0 0.0
      %1081 = vmatpush1.msra.mxu0 0.0
      %1082 = vmatprep.subr.mxu0 0.0
      %1083 = vmatpush1.msra.mxu0 0.0
      %1084 = vmatprep.subr.mxu0 0.0
      %1085 = vmatpush1.msra.mxu0 0.0
      %1086 = vmatprep.mubr.f32.mxu0 0.0
      %1087 = vmatmul.mubr.f32.gmra.mrb[0].mxu0 %v255
      %v1088 = vpop.f32.mrb[0].mxu0
      %v1089 = vadd.f32 0.0, %v1088
      %v1090 = vpop.f32.mrb[0].mxu0
      %1091 = vmatprep.mubr.f32.mxu0 0.0
      %1092 = vmatmul.mubr.f32.gmra.mrb[0].mxu0 %v258
      %v1093 = vpop.f32.mrb[0].mxu0
      %v1094 = vadd.f32 0.0, %v1093
      %v1095 = vpop.f32.mrb[0].mxu0
      %1096 = vmatprep.mubr.f32.mxu0 0.0
      %1097 = vmatmul.mubr.f32.gmra.mrb[0].mxu0 %v261
      %v1098 = vpop.f32.mrb[0].mxu0
      %v1099 = vadd.f32 0.0, %v1098
      %v1100 = vpop.f32.mrb[0].mxu0
      %1101 = vmatprep.mubr.f32.mxu0 0.0
      %1102 = vmatmul.mubr.f32.gmra.mrb[0].mxu0 %v264
      %v1103 = vpop.f32.mrb[0].mxu0
      %v1104 = vadd.f32 0.0, %v1103
      %v1105 = vpop.f32.mrb[0].mxu0
      %1106 = vmatprep.mubr.f32.mxu0 0.0
      %1107 = vmatmul.mubr.f32.gmra.mrb[0].mxu0 %v267
      %v1108 = vpop.f32.mrb[0].mxu0
      %v1109 = vadd.f32 0.0, %v1108
      %v1110 = vpop.f32.mrb[0].mxu0
      %1111 = vmatprep.mubr.f32.mxu0 0.0
      %1112 = vmatmul.mubr.f32.gmra.mrb[0].mxu0 %v270
      %v1113 = vpop.f32.mrb[0].mxu0
      %v1114 = vadd.f32 0.0, %v1113
      %v1115 = vpop.f32.mrb[0].mxu0
      %1116 = vmatprep.mubr.f32.mxu0 0.0
      %1117 = vmatmul.mubr.f32.gmra.mrb[0].mxu0 %v273
      %v1118 = vpop.f32.mrb[0].mxu0
      %v1119 = vadd.f32 0.0, %v1118
      %v1120 = vpop.f32.mrb[0].mxu0
      %1121 = vmatprep.mubr.f32.mxu0 0.0
      %1122 = vmatmul.mubr.f32.gmra.mrb[0].mxu0 %v276
      %v1123 = vpop.f32.mrb[0].mxu0
      %v1124 = vadd.f32 0.0, %v1123
      %v1125 = vpop.f32.mrb[0].mxu0
      %1126 = vmatprep.mubr.f32.mxu0 0.0
      %1127 = vmatmul.mubr.f32.gmra.mrb[0].mxu0 %v279
      %v1128 = vpop.f32.mrb[0].mxu0
      %v1129 = vadd.f32 0.0, %v1128
      %v1130 = vpop.f32.mrb[0].mxu0
      %1131 = vmatprep.mubr.f32.mxu0 0.0
      %1132 = vmatmul.mubr.f32.gmra.mrb[0].mxu0 %v282
      %v1133 = vpop.f32.mrb[0].mxu0
      %v1134 = vadd.f32 0.0, %v1133
      %v1135 = vpop.f32.mrb[0].mxu0
      %1136 = vmatprep.mubr.f32.mxu0 0.0
      %1137 = vmatmul.mubr.f32.gmra.mrb[0].mxu0 %v285
      %v1138 = vpop.f32.mrb[0].mxu0
      %v1139 = vadd.f32 0.0, %v1138
      %v1140 = vpop.f32.mrb[0].mxu0
      %1141 = vmatprep.mubr.f32.mxu0 0.0
      %1142 = vmatmul.mubr.f32.gmra.mrb[0].mxu0 %v288
      %v1143 = vpop.f32.mrb[0].mxu0
      %v1144 = vadd.f32 0.0, %v1143
      %v1145 = vpop.f32.mrb[0].mxu0
      %1146 = vmatprep.mubr.f32.mxu0 0.0
      %1147 = vmatmul.mubr.f32.gmra.mrb[0].mxu0 %v291
      %v1148 = vpop.f32.mrb[0].mxu0
      %v1149 = vadd.f32 0.0, %v1148
      %v1150 = vpop.f32.mrb[0].mxu0
      %1151 = vmatprep.mubr.f32.mxu0 0.0
      %1152 = vmatmul.mubr.f32.gmra.mrb[0].mxu0 %v294
      %v1153 = vpop.f32.mrb[0].mxu0
      %v1154 = vadd.f32 0.0, %v1153
      %v1155 = vpop.f32.mrb[0].mxu0
      %1156 = vmatprep.mubr.f32.mxu0 0.0
      %1157 = vmatmul.mubr.f32.gmra.mrb[0].mxu0 %v1014
      %v1158 = vpop.f32.mrb[0].mxu0
      %v1159 = vadd.f32 0.0, %v1158
      %v1160 = vpop.f32.mrb[0].mxu0
      %1161 = vmatprep.mubr.f32.mxu0 0.0
      %1162 = vmatmul.mubr.f32.gmra.mrb[0].mxu0 %v1017
      %v1163 = vpop.f32.mrb[0].mxu0
      %v1164 = vadd.f32 0.0, %v1163
      %v1165 = vpop.f32.mrb[0].mxu0
      %1166 = vdwg.mxu0
      %v1167 = vld [vmem:[#allocation2] sm:$0xff]
      %v1168 = vld [vmem:[#allocation2 + $0x8] sm:$0xff]
      %v1169 = vld [vmem:[#allocation2 + $0x10] sm:$0xff]
      %v1170 = vld [vmem:[#allocation2 + $0x18] sm:$0xff]
      %v1171 = vld [vmem:[#allocation2 + $0x20] sm:$0xff]
      %v1172 = vld [vmem:[#allocation2 + $0x28] sm:$0xff]
      %v1173 = vld [vmem:[#allocation2 + $0x30] sm:$0xff]
      %v1174 = vld [vmem:[#allocation2 + $0x38] sm:$0xff]
      %v1175 = vld [vmem:[#allocation2 + $0x40] sm:$0xff]
      %v1176 = vld [vmem:[#allocation2 + $0x48] sm:$0xff]
      %v1177 = vld [vmem:[#allocation2 + $0x50] sm:$0xff]
      %v1178 = vld [vmem:[#allocation2 + $0x58] sm:$0xff]
      %v1179 = vld [vmem:[#allocation2 + $0x60] sm:$0xff]
      %v1180 = vld [vmem:[#allocation2 + $0x68] sm:$0xff]
      %v1181 = vld [vmem:[#allocation2 + $0x70] sm:$0xff]
      %v1182 = vld [vmem:[#allocation2 + $0x78] sm:$0xff]
      %v1183 = vadd.f32 %v1167, %v1089
      %v1184 = vadd.f32 %v1168, %v1094
      %v1185 = vadd.f32 %v1169, %v1099
      %v1186 = vadd.f32 %v1170, %v1104
      %v1187 = vadd.f32 %v1171, %v1109
      %v1188 = vadd.f32 %v1172, %v1114
      %v1189 = vadd.f32 %v1173, %v1119
      %v1190 = vadd.f32 %v1174, %v1124
      %v1191 = vadd.f32 %v1175, %v1129
      %v1192 = vadd.f32 %v1176, %v1134
      %v1193 = vadd.f32 %v1177, %v1139
      %v1194 = vadd.f32 %v1178, %v1144
      %v1195 = vadd.f32 %v1179, %v1149
      %v1196 = vadd.f32 %v1180, %v1154
      %v1197 = vadd.f32 %v1181, %v1159
      %v1198 = vadd.f32 %v1182, %v1164
      %1199 = vst [vmem:[#allocation2] sm:$0xff] %v1183
      %1200 = vst [vmem:[#allocation2 + $0x8] sm:$0xff] %v1184
      %1201 = vst [vmem:[#allocation2 + $0x10] sm:$0xff] %v1185
      %1202 = vst [vmem:[#allocation2 + $0x18] sm:$0xff] %v1186
      %1203 = vst [vmem:[#allocation2 + $0x20] sm:$0xff] %v1187
      %1204 = vst [vmem:[#allocation2 + $0x28] sm:$0xff] %v1188
      %1205 = vst [vmem:[#allocation2 + $0x30] sm:$0xff] %v1189
      %1206 = vst [vmem:[#allocation2 + $0x38] sm:$0xff] %v1190
      %1207 = vst [vmem:[#allocation2 + $0x40] sm:$0xff] %v1191
      %1208 = vst [vmem:[#allocation2 + $0x48] sm:$0xff] %v1192
      %1209 = vst [vmem:[#allocation2 + $0x50] sm:$0xff] %v1193
      %1210 = vst [vmem:[#allocation2 + $0x58] sm:$0xff] %v1194
      %1211 = vst [vmem:[#allocation2 + $0x60] sm:$0xff] %v1195
      %1212 = vst [vmem:[#allocation2 + $0x68] sm:$0xff] %v1196
      %1213 = vst [vmem:[#allocation2 + $0x70] sm:$0xff] %v1197
      %1214 = vst [vmem:[#allocation2 + $0x78] sm:$0xff] %v1198
      %v1216 = vrot.slane %v240, 1
      %v1217 = vrot.slane %v241, 1
      %v1218 = vsel %vm469, %v1216, %v1217
      %v1219 = vrot.slane %v242, 1
      %v1220 = vsel %vm469, %v1217, %v1219
      %s1221 = scalar_lea.vmem %s1, 16
      %v1222 = vld [vmem:[%s1221] sm:$0xf]
      %v1223 = vsel %vm247, %v1218, 0
      %v1225 = vsel %vm247, %v1220, 0
      %v1228 = vsel %vm296, %v1222, 0
      %1230 = vmatprep.subr.mxu0 0.0
      %1231 = vmatpush1.msra.mxu0 %v1228
      %1232 = vmatprep.subr.mxu0 0.0
      %1233 = vmatpush1.msra.mxu0 0.0
      %1234 = vmatprep.subr.mxu0 0.0
      %1235 = vmatpush1.msra.mxu0 0.0
      %1236 = vmatprep.subr.mxu0 0.0
      %1237 = vmatpush1.msra.mxu0 0.0
      %1238 = vmatprep.subr.mxu0 0.0
      %1239 = vmatpush1.msra.mxu0 0.0
      %1240 = vmatprep.subr.mxu0 0.0
      %1241 = vmatpush1.msra.mxu0 0.0
      %1242 = vmatprep.subr.mxu0 0.0
      %1243 = vmatpush1.msra.mxu0 0.0
      %1244 = vmatprep.subr.mxu0 0.0
      %1245 = vmatpush1.msra.mxu0 0.0
      %1246 = vmatprep.subr.mxu0 0.0
      %1247 = vmatpush1.msra.mxu0 0.0
      %1248 = vmatprep.subr.mxu0 0.0
      %1249 = vmatpush1.msra.mxu0 0.0
      %1250 = vmatprep.subr.mxu0 0.0
      %1251 = vmatpush1.msra.mxu0 0.0
      %1252 = vmatprep.subr.mxu0 0.0
      %1253 = vmatpush1.msra.mxu0 0.0
      %1254 = vmatprep.subr.mxu0 0.0
      %1255 = vmatpush1.msra.mxu0 0.0
      %1256 = vmatprep.subr.mxu0 0.0
      %1257 = vmatpush1.msra.mxu0 0.0
      %1258 = vmatprep.subr.mxu0 0.0
      %1259 = vmatpush1.msra.mxu0 0.0
      %1260 = vmatprep.subr.mxu0 0.0
      %1261 = vmatpush1.msra.mxu0 0.0
      %1262 = vmatprep.subr.mxu0 0.0
      %1263 = vmatpush1.msra.mxu0 0.0
      %1264 = vmatprep.subr.mxu0 0.0
      %1265 = vmatpush1.msra.mxu0 0.0
      %1266 = vmatprep.subr.mxu0 0.0
      %1267 = vmatpush1.msra.mxu0 0.0
      %1268 = vmatprep.subr.mxu0 0.0
      %1269 = vmatpush1.msra.mxu0 0.0
      %1270 = vmatprep.subr.mxu0 0.0
      %1271 = vmatpush1.msra.mxu0 0.0
      %1272 = vmatprep.subr.mxu0 0.0
      %1273 = vmatpush1.msra.mxu0 0.0
      %1274 = vmatprep.subr.mxu0 0.0
      %1275 = vmatpush1.msra.mxu0 0.0
      %1276 = vmatprep.subr.mxu0 0.0
      %1277 = vmatpush1.msra.mxu0 0.0
      %1278 = vmatprep.subr.mxu0 0.0
      %1279 = vmatpush1.msra.mxu0 0.0
      %1280 = vmatprep.subr.mxu0 0.0
      %1281 = vmatpush1.msra.mxu0 0.0
      %1282 = vmatprep.subr.mxu0 0.0
      %1283 = vmatpush1.msra.mxu0 0.0
      %1284 = vmatprep.subr.mxu0 0.0
      %1285 = vmatpush1.msra.mxu0 0.0
      %1286 = vmatprep.subr.mxu0 0.0
      %1287 = vmatpush1.msra.mxu0 0.0
      %1288 = vmatprep.subr.mxu0 0.0
      %1289 = vmatpush1.msra.mxu0 0.0
      %1290 = vmatprep.subr.mxu0 0.0
      %1291 = vmatpush1.msra.mxu0 0.0
      %1292 = vmatprep.subr.mxu0 0.0
      %1293 = vmatpush1.msra.mxu0 0.0
      %1294 = vmatprep.mubr.f32.mxu0 0.0
      %1295 = vmatmul.mubr.f32.gmra.mrb[0].mxu0 %v516
      %v1296 = vpop.f32.mrb[0].mxu0
      %v1297 = vadd.f32 0.0, %v1296
      %v1298 = vpop.f32.mrb[0].mxu0
      %1299 = vmatprep.mubr.f32.mxu0 0.0
      %1300 = vmatmul.mubr.f32.gmra.mrb[0].mxu0 %v518
      %v1301 = vpop.f32.mrb[0].mxu0
      %v1302 = vadd.f32 0.0, %v1301
      %v1303 = vpop.f32.mrb[0].mxu0
      %1304 = vmatprep.mubr.f32.mxu0 0.0
      %1305 = vmatmul.mubr.f32.gmra.mrb[0].mxu0 %v520
      %v1306 = vpop.f32.mrb[0].mxu0
      %v1307 = vadd.f32 0.0, %v1306
      %v1308 = vpop.f32.mrb[0].mxu0
      %1309 = vmatprep.mubr.f32.mxu0 0.0
      %1310 = vmatmul.mubr.f32.gmra.mrb[0].mxu0 %v522
      %v1311 = vpop.f32.mrb[0].mxu0
      %v1312 = vadd.f32 0.0, %v1311
      %v1313 = vpop.f32.mrb[0].mxu0
      %1314 = vmatprep.mubr.f32.mxu0 0.0
      %1315 = vmatmul.mubr.f32.gmra.mrb[0].mxu0 %v524
      %v1316 = vpop.f32.mrb[0].mxu0
      %v1317 = vadd.f32 0.0, %v1316
      %v1318 = vpop.f32.mrb[0].mxu0
      %1319 = vmatprep.mubr.f32.mxu0 0.0
      %1320 = vmatmul.mubr.f32.gmra.mrb[0].mxu0 %v526
      %v1321 = vpop.f32.mrb[0].mxu0
      %v1322 = vadd.f32 0.0, %v1321
      %v1323 = vpop.f32.mrb[0].mxu0
      %1324 = vmatprep.mubr.f32.mxu0 0.0
      %1325 = vmatmul.mubr.f32.gmra.mrb[0].mxu0 %v528
      %v1326 = vpop.f32.mrb[0].mxu0
      %v1327 = vadd.f32 0.0, %v1326
      %v1328 = vpop.f32.mrb[0].mxu0
      %1329 = vmatprep.mubr.f32.mxu0 0.0
      %1330 = vmatmul.mubr.f32.gmra.mrb[0].mxu0 %v530
      %v1331 = vpop.f32.mrb[0].mxu0
      %v1332 = vadd.f32 0.0, %v1331
      %v1333 = vpop.f32.mrb[0].mxu0
      %1334 = vmatprep.mubr.f32.mxu0 0.0
      %1335 = vmatmul.mubr.f32.gmra.mrb[0].mxu0 %v532
      %v1336 = vpop.f32.mrb[0].mxu0
      %v1337 = vadd.f32 0.0, %v1336
      %v1338 = vpop.f32.mrb[0].mxu0
      %1339 = vmatprep.mubr.f32.mxu0 0.0
      %1340 = vmatmul.mubr.f32.gmra.mrb[0].mxu0 %v534
      %v1341 = vpop.f32.mrb[0].mxu0
      %v1342 = vadd.f32 0.0, %v1341
      %v1343 = vpop.f32.mrb[0].mxu0
      %1344 = vmatprep.mubr.f32.mxu0 0.0
      %1345 = vmatmul.mubr.f32.gmra.mrb[0].mxu0 %v536
      %v1346 = vpop.f32.mrb[0].mxu0
      %v1347 = vadd.f32 0.0, %v1346
      %v1348 = vpop.f32.mrb[0].mxu0
      %1349 = vmatprep.mubr.f32.mxu0 0.0
      %1350 = vmatmul.mubr.f32.gmra.mrb[0].mxu0 %v538
      %v1351 = vpop.f32.mrb[0].mxu0
      %v1352 = vadd.f32 0.0, %v1351
      %v1353 = vpop.f32.mrb[0].mxu0
      %1354 = vmatprep.mubr.f32.mxu0 0.0
      %1355 = vmatmul.mubr.f32.gmra.mrb[0].mxu0 %v540
      %v1356 = vpop.f32.mrb[0].mxu0
      %v1357 = vadd.f32 0.0, %v1356
      %v1358 = vpop.f32.mrb[0].mxu0
      %1359 = vmatprep.mubr.f32.mxu0 0.0
      %1360 = vmatmul.mubr.f32.gmra.mrb[0].mxu0 %v542
      %v1361 = vpop.f32.mrb[0].mxu0
      %v1362 = vadd.f32 0.0, %v1361
      %v1363 = vpop.f32.mrb[0].mxu0
      %1364 = vmatprep.mubr.f32.mxu0 0.0
      %1365 = vmatmul.mubr.f32.gmra.mrb[0].mxu0 %v1223
      %v1366 = vpop.f32.mrb[0].mxu0
      %v1367 = vadd.f32 0.0, %v1366
      %v1368 = vpop.f32.mrb[0].mxu0
      %1369 = vmatprep.mubr.f32.mxu0 0.0
      %1370 = vmatmul.mubr.f32.gmra.mrb[0].mxu0 %v1225
      %v1371 = vpop.f32.mrb[0].mxu0
      %v1372 = vadd.f32 0.0, %v1371
      %v1373 = vpop.f32.mrb[0].mxu0
      %1374 = vdwg.mxu0
      %v1375 = vld [vmem:[#allocation2] sm:$0xff]
      %v1376 = vld [vmem:[#allocation2 + $0x8] sm:$0xff]
      %v1377 = vld [vmem:[#allocation2 + $0x10] sm:$0xff]
      %v1378 = vld [vmem:[#allocation2 + $0x18] sm:$0xff]
      %v1379 = vld [vmem:[#allocation2 + $0x20] sm:$0xff]
      %v1380 = vld [vmem:[#allocation2 + $0x28] sm:$0xff]
      %v1381 = vld [vmem:[#allocation2 + $0x30] sm:$0xff]
      %v1382 = vld [vmem:[#allocation2 + $0x38] sm:$0xff]
      %v1383 = vld [vmem:[#allocation2 + $0x40] sm:$0xff]
      %v1384 = vld [vmem:[#allocation2 + $0x48] sm:$0xff]
      %v1385 = vld [vmem:[#allocation2 + $0x50] sm:$0xff]
      %v1386 = vld [vmem:[#allocation2 + $0x58] sm:$0xff]
      %v1387 = vld [vmem:[#allocation2 + $0x60] sm:$0xff]
      %v1388 = vld [vmem:[#allocation2 + $0x68] sm:$0xff]
      %v1389 = vld [vmem:[#allocation2 + $0x70] sm:$0xff]
      %v1390 = vld [vmem:[#allocation2 + $0x78] sm:$0xff]
      %v1391 = vadd.f32 %v1375, %v1297
      %v1392 = vadd.f32 %v1376, %v1302
      %v1393 = vadd.f32 %v1377, %v1307
      %v1394 = vadd.f32 %v1378, %v1312
      %v1395 = vadd.f32 %v1379, %v1317
      %v1396 = vadd.f32 %v1380, %v1322
      %v1397 = vadd.f32 %v1381, %v1327
      %v1398 = vadd.f32 %v1382, %v1332
      %v1399 = vadd.f32 %v1383, %v1337
      %v1400 = vadd.f32 %v1384, %v1342
      %v1401 = vadd.f32 %v1385, %v1347
      %v1402 = vadd.f32 %v1386, %v1352
      %v1403 = vadd.f32 %v1387, %v1357
      %v1404 = vadd.f32 %v1388, %v1362
      %v1405 = vadd.f32 %v1389, %v1367
      %v1406 = vadd.f32 %v1390, %v1372
      %1407 = vst [vmem:[#allocation2] sm:$0xff] %v1391
      %1408 = vst [vmem:[#allocation2 + $0x8] sm:$0xff] %v1392
      %1409 = vst [vmem:[#allocation2 + $0x10] sm:$0xff] %v1393
      %1410 = vst [vmem:[#allocation2 + $0x18] sm:$0xff] %v1394
      %1411 = vst [vmem:[#allocation2 + $0x20] sm:$0xff] %v1395
      %1412 = vst [vmem:[#allocation2 + $0x28] sm:$0xff] %v1396
      %1413 = vst [vmem:[#allocation2 + $0x30] sm:$0xff] %v1397
      %1414 = vst [vmem:[#allocation2 + $0x38] sm:$0xff] %v1398
      %1415 = vst [vmem:[#allocation2 + $0x40] sm:$0xff] %v1399
      %1416 = vst [vmem:[#allocation2 + $0x48] sm:$0xff] %v1400
      %1417 = vst [vmem:[#allocation2 + $0x50] sm:$0xff] %v1401
      %1418 = vst [vmem:[#allocation2 + $0x58] sm:$0xff] %v1402
      %1419 = vst [vmem:[#allocation2 + $0x60] sm:$0xff] %v1403
      %1420 = vst [vmem:[#allocation2 + $0x68] sm:$0xff] %v1404
      %1421 = vst [vmem:[#allocation2 + $0x70] sm:$0xff] %v1405
      %1422 = vst [vmem:[#allocation2 + $0x78] sm:$0xff] %v1406
      %v1423 = vrot.slane %v240, 2
      %v1424 = vrot.slane %v241, 2
      %v1425 = vsel %vm740, %v1423, %v1424
      %v1426 = vrot.slane %v242, 2
      %v1427 = vsel %vm740, %v1424, %v1426
      %s1428 = scalar_lea.vmem %s1, 20
      %v1429 = vld [vmem:[%s1428] sm:$0xf]
      %v1430 = vsel %vm247, %v1425, 0
      %v1432 = vsel %vm247, %v1427, 0
      %v1435 = vsel %vm296, %v1429, 0
      %1437 = vmatprep.subr.mxu0 0.0
      %1438 = vmatpush1.msra.mxu0 %v1435
      %1439 = vmatprep.subr.mxu0 0.0
      %1440 = vmatpush1.msra.mxu0 0.0
      %1441 = vmatprep.subr.mxu0 0.0
      %1442 = vmatpush1.msra.mxu0 0.0
      %1443 = vmatprep.subr.mxu0 0.0
      %1444 = vmatpush1.msra.mxu0 0.0
      %1445 = vmatprep.subr.mxu0 0.0
      %1446 = vmatpush1.msra.mxu0 0.0
      %1447 = vmatprep.subr.mxu0 0.0
      %1448 = vmatpush1.msra.mxu0 0.0
      %1449 = vmatprep.subr.mxu0 0.0
      %1450 = vmatpush1.msra.mxu0 0.0
      %1451 = vmatprep.subr.mxu0 0.0
      %1452 = vmatpush1.msra.mxu0 0.0
      %1453 = vmatprep.subr.mxu0 0.0
      %1454 = vmatpush1.msra.mxu0 0.0
      %1455 = vmatprep.subr.mxu0 0.0
      %1456 = vmatpush1.msra.mxu0 0.0
      %1457 = vmatprep.subr.mxu0 0.0
      %1458 = vmatpush1.msra.mxu0 0.0
      %1459 = vmatprep.subr.mxu0 0.0
      %1460 = vmatpush1.msra.mxu0 0.0
      %1461 = vmatprep.subr.mxu0 0.0
      %1462 = vmatpush1.msra.mxu0 0.0
      %1463 = vmatprep.subr.mxu0 0.0
      %1464 = vmatpush1.msra.mxu0 0.0
      %1465 = vmatprep.subr.mxu0 0.0
      %1466 = vmatpush1.msra.mxu0 0.0
      %1467 = vmatprep.subr.mxu0 0.0
      %1468 = vmatpush1.msra.mxu0 0.0
      %1469 = vmatprep.subr.mxu0 0.0
      %1470 = vmatpush1.msra.mxu0 0.0
      %1471 = vmatprep.subr.mxu0 0.0
      %1472 = vmatpush1.msra.mxu0 0.0
      %1473 = vmatprep.subr.mxu0 0.0
      %1474 = vmatpush1.msra.mxu0 0.0
      %1475 = vmatprep.subr.mxu0 0.0
      %1476 = vmatpush1.msra.mxu0 0.0
      %1477 = vmatprep.subr.mxu0 0.0
      %1478 = vmatpush1.msra.mxu0 0.0
      %1479 = vmatprep.subr.mxu0 0.0
      %1480 = vmatpush1.msra.mxu0 0.0
      %1481 = vmatprep.subr.mxu0 0.0
      %1482 = vmatpush1.msra.mxu0 0.0
      %1483 = vmatprep.subr.mxu0 0.0
      %1484 = vmatpush1.msra.mxu0 0.0
      %1485 = vmatprep.subr.mxu0 0.0
      %1486 = vmatpush1.msra.mxu0 0.0
      %1487 = vmatprep.subr.mxu0 0.0
      %1488 = vmatpush1.msra.mxu0 0.0
      %1489 = vmatprep.subr.mxu0 0.0
      %1490 = vmatpush1.msra.mxu0 0.0
      %1491 = vmatprep.subr.mxu0 0.0
      %1492 = vmatpush1.msra.mxu0 0.0
      %1493 = vmatprep.subr.mxu0 0.0
      %1494 = vmatpush1.msra.mxu0 0.0
      %1495 = vmatprep.subr.mxu0 0.0
      %1496 = vmatpush1.msra.mxu0 0.0
      %1497 = vmatprep.subr.mxu0 0.0
      %1498 = vmatpush1.msra.mxu0 0.0
      %1499 = vmatprep.subr.mxu0 0.0
      %1500 = vmatpush1.msra.mxu0 0.0
      %1501 = vmatprep.mubr.f32.mxu0 0.0
      %1502 = vmatmul.mubr.f32.gmra.mrb[0].mxu0 %v787
      %v1503 = vpop.f32.mrb[0].mxu0
      %v1504 = vadd.f32 0.0, %v1503
      %v1505 = vpop.f32.mrb[0].mxu0
      %1506 = vmatprep.mubr.f32.mxu0 0.0
      %1507 = vmatmul.mubr.f32.gmra.mrb[0].mxu0 %v789
      %v1508 = vpop.f32.mrb[0].mxu0
      %v1509 = vadd.f32 0.0, %v1508
      %v1510 = vpop.f32.mrb[0].mxu0
      %1511 = vmatprep.mubr.f32.mxu0 0.0
      %1512 = vmatmul.mubr.f32.gmra.mrb[0].mxu0 %v791
      %v1513 = vpop.f32.mrb[0].mxu0
      %v1514 = vadd.f32 0.0, %v1513
      %v1515 = vpop.f32.mrb[0].mxu0
      %1516 = vmatprep.mubr.f32.mxu0 0.0
      %1517 = vmatmul.mubr.f32.gmra.mrb[0].mxu0 %v793
      %v1518 = vpop.f32.mrb[0].mxu0
      %v1519 = vadd.f32 0.0, %v1518
      %v1520 = vpop.f32.mrb[0].mxu0
      %1521 = vmatprep.mubr.f32.mxu0 0.0
      %1522 = vmatmul.mubr.f32.gmra.mrb[0].mxu0 %v795
      %v1523 = vpop.f32.mrb[0].mxu0
      %v1524 = vadd.f32 0.0, %v1523
      %v1525 = vpop.f32.mrb[0].mxu0
      %1526 = vmatprep.mubr.f32.mxu0 0.0
      %1527 = vmatmul.mubr.f32.gmra.mrb[0].mxu0 %v797
      %v1528 = vpop.f32.mrb[0].mxu0
      %v1529 = vadd.f32 0.0, %v1528
      %v1530 = vpop.f32.mrb[0].mxu0
      %1531 = vmatprep.mubr.f32.mxu0 0.0
      %1532 = vmatmul.mubr.f32.gmra.mrb[0].mxu0 %v799
      %v1533 = vpop.f32.mrb[0].mxu0
      %v1534 = vadd.f32 0.0, %v1533
      %v1535 = vpop.f32.mrb[0].mxu0
      %1536 = vmatprep.mubr.f32.mxu0 0.0
      %1537 = vmatmul.mubr.f32.gmra.mrb[0].mxu0 %v801
      %v1538 = vpop.f32.mrb[0].mxu0
      %v1539 = vadd.f32 0.0, %v1538
      %v1540 = vpop.f32.mrb[0].mxu0
      %1541 = vmatprep.mubr.f32.mxu0 0.0
      %1542 = vmatmul.mubr.f32.gmra.mrb[0].mxu0 %v803
      %v1543 = vpop.f32.mrb[0].mxu0
      %v1544 = vadd.f32 0.0, %v1543
      %v1545 = vpop.f32.mrb[0].mxu0
      %1546 = vmatprep.mubr.f32.mxu0 0.0
      %1547 = vmatmul.mubr.f32.gmra.mrb[0].mxu0 %v805
      %v1548 = vpop.f32.mrb[0].mxu0
      %v1549 = vadd.f32 0.0, %v1548
      %v1550 = vpop.f32.mrb[0].mxu0
      %1551 = vmatprep.mubr.f32.mxu0 0.0
      %1552 = vmatmul.mubr.f32.gmra.mrb[0].mxu0 %v807
      %v1553 = vpop.f32.mrb[0].mxu0
      %v1554 = vadd.f32 0.0, %v1553
      %v1555 = vpop.f32.mrb[0].mxu0
      %1556 = vmatprep.mubr.f32.mxu0 0.0
      %1557 = vmatmul.mubr.f32.gmra.mrb[0].mxu0 %v809
      %v1558 = vpop.f32.mrb[0].mxu0
      %v1559 = vadd.f32 0.0, %v1558
      %v1560 = vpop.f32.mrb[0].mxu0
      %1561 = vmatprep.mubr.f32.mxu0 0.0
      %1562 = vmatmul.mubr.f32.gmra.mrb[0].mxu0 %v811
      %v1563 = vpop.f32.mrb[0].mxu0
      %v1564 = vadd.f32 0.0, %v1563
      %v1565 = vpop.f32.mrb[0].mxu0
      %1566 = vmatprep.mubr.f32.mxu0 0.0
      %1567 = vmatmul.mubr.f32.gmra.mrb[0].mxu0 %v813
      %v1568 = vpop.f32.mrb[0].mxu0
      %v1569 = vadd.f32 0.0, %v1568
      %v1570 = vpop.f32.mrb[0].mxu0
      %1571 = vmatprep.mubr.f32.mxu0 0.0
      %1572 = vmatmul.mubr.f32.gmra.mrb[0].mxu0 %v1430
      %v1573 = vpop.f32.mrb[0].mxu0
      %v1574 = vadd.f32 0.0, %v1573
      %v1575 = vpop.f32.mrb[0].mxu0
      %1576 = vmatprep.mubr.f32.mxu0 0.0
      %1577 = vmatmul.mubr.f32.gmra.mrb[0].mxu0 %v1432
      %v1578 = vpop.f32.mrb[0].mxu0
      %v1579 = vadd.f32 0.0, %v1578
      %v1580 = vpop.f32.mrb[0].mxu0
      %1581 = vdwg.mxu0
      %v1582 = vld [vmem:[#allocation2] sm:$0xff]
      %v1583 = vld [vmem:[#allocation2 + $0x8] sm:$0xff]
      %v1584 = vld [vmem:[#allocation2 + $0x10] sm:$0xff]
      %v1585 = vld [vmem:[#allocation2 + $0x18] sm:$0xff]
      %v1586 = vld [vmem:[#allocation2 + $0x20] sm:$0xff]
      %v1587 = vld [vmem:[#allocation2 + $0x28] sm:$0xff]
      %v1588 = vld [vmem:[#allocation2 + $0x30] sm:$0xff]
      %v1589 = vld [vmem:[#allocation2 + $0x38] sm:$0xff]
      %v1590 = vld [vmem:[#allocation2 + $0x40] sm:$0xff]
      %v1591 = vld [vmem:[#allocation2 + $0x48] sm:$0xff]
      %v1592 = vld [vmem:[#allocation2 + $0x50] sm:$0xff]
      %v1593 = vld [vmem:[#allocation2 + $0x58] sm:$0xff]
      %v1594 = vld [vmem:[#allocation2 + $0x60] sm:$0xff]
      %v1595 = vld [vmem:[#allocation2 + $0x68] sm:$0xff]
      %v1596 = vld [vmem:[#allocation2 + $0x70] sm:$0xff]
      %v1597 = vld [vmem:[#allocation2 + $0x78] sm:$0xff]
      %v1598 = vadd.f32 %v1582, %v1504
      %v1599 = vadd.f32 %v1583, %v1509
      %v1600 = vadd.f32 %v1584, %v1514
      %v1601 = vadd.f32 %v1585, %v1519
      %v1602 = vadd.f32 %v1586, %v1524
      %v1603 = vadd.f32 %v1587, %v1529
      %v1604 = vadd.f32 %v1588, %v1534
      %v1605 = vadd.f32 %v1589, %v1539
      %v1606 = vadd.f32 %v1590, %v1544
      %v1607 = vadd.f32 %v1591, %v1549
      %v1608 = vadd.f32 %v1592, %v1554
      %v1609 = vadd.f32 %v1593, %v1559
      %v1610 = vadd.f32 %v1594, %v1564
      %v1611 = vadd.f32 %v1595, %v1569
      %v1612 = vadd.f32 %v1596, %v1574
      %v1613 = vadd.f32 %v1597, %v1579
      %1614 = vst [vmem:[#allocation2] sm:$0xff] %v1598
      %1615 = vst [vmem:[#allocation2 + $0x8] sm:$0xff] %v1599
      %1616 = vst [vmem:[#allocation2 + $0x10] sm:$0xff] %v1600
      %1617 = vst [vmem:[#allocation2 + $0x18] sm:$0xff] %v1601
      %1618 = vst [vmem:[#allocation2 + $0x20] sm:$0xff] %v1602
      %1619 = vst [vmem:[#allocation2 + $0x28] sm:$0xff] %v1603
      %1620 = vst [vmem:[#allocation2 + $0x30] sm:$0xff] %v1604
      %1621 = vst [vmem:[#allocation2 + $0x38] sm:$0xff] %v1605
      %1622 = vst [vmem:[#allocation2 + $0x40] sm:$0xff] %v1606
      %1623 = vst [vmem:[#allocation2 + $0x48] sm:$0xff] %v1607
      %1624 = vst [vmem:[#allocation2 + $0x50] sm:$0xff] %v1608
      %1625 = vst [vmem:[#allocation2 + $0x58] sm:$0xff] %v1609
      %1626 = vst [vmem:[#allocation2 + $0x60] sm:$0xff] %v1610
      %1627 = vst [vmem:[#allocation2 + $0x68] sm:$0xff] %v1611
      %1628 = vst [vmem:[#allocation2 + $0x70] sm:$0xff] %v1612
      %1629 = vst [vmem:[#allocation2 + $0x78] sm:$0xff] %v1613
      %s1630 = scalar_lea.vmem %s1, 24
      %v1631 = vld [vmem:[%s1630] sm:$0xf]
      %v1633 = vsel %vm247, %v243, 0
      %v1636 = vsel %vm247, %v244, 0
      %v1639 = vsel %vm296, %v1631, 0
      %1641 = vmatprep.subr.mxu0 0.0
      %1642 = vmatpush1.msra.mxu0 %v1639
      %1643 = vmatprep.subr.mxu0 0.0
      %1644 = vmatpush1.msra.mxu0 0.0
      %1645 = vmatprep.subr.mxu0 0.0
      %1646 = vmatpush1.msra.mxu0 0.0
      %1647 = vmatprep.subr.mxu0 0.0
      %1648 = vmatpush1.msra.mxu0 0.0
      %1649 = vmatprep.subr.mxu0 0.0
      %1650 = vmatpush1.msra.mxu0 0.0
      %1651 = vmatprep.subr.mxu0 0.0
      %1652 = vmatpush1.msra.mxu0 0.0
      %1653 = vmatprep.subr.mxu0 0.0
      %1654 = vmatpush1.msra.mxu0 0.0
      %1655 = vmatprep.subr.mxu0 0.0
      %1656 = vmatpush1.msra.mxu0 0.0
      %1657 = vmatprep.subr.mxu0 0.0
      %1658 = vmatpush1.msra.mxu0 0.0
      %1659 = vmatprep.subr.mxu0 0.0
      %1660 = vmatpush1.msra.mxu0 0.0
      %1661 = vmatprep.subr.mxu0 0.0
      %1662 = vmatpush1.msra.mxu0 0.0
      %1663 = vmatprep.subr.mxu0 0.0
      %1664 = vmatpush1.msra.mxu0 0.0
      %1665 = vmatprep.subr.mxu0 0.0
      %1666 = vmatpush1.msra.mxu0 0.0
      %1667 = vmatprep.subr.mxu0 0.0
      %1668 = vmatpush1.msra.mxu0 0.0
      %1669 = vmatprep.subr.mxu0 0.0
      %1670 = vmatpush1.msra.mxu0 0.0
      %1671 = vmatprep.subr.mxu0 0.0
      %1672 = vmatpush1.msra.mxu0 0.0
      %1673 = vmatprep.subr.mxu0 0.0
      %1674 = vmatpush1.msra.mxu0 0.0
      %1675 = vmatprep.subr.mxu0 0.0
      %1676 = vmatpush1.msra.mxu0 0.0
      %1677 = vmatprep.subr.mxu0 0.0
      %1678 = vmatpush1.msra.mxu0 0.0
      %1679 = vmatprep.subr.mxu0 0.0
      %1680 = vmatpush1.msra.mxu0 0.0
      %1681 = vmatprep.subr.mxu0 0.0
      %1682 = vmatpush1.msra.mxu0 0.0
      %1683 = vmatprep.subr.mxu0 0.0
      %1684 = vmatpush1.msra.mxu0 0.0
      %1685 = vmatprep.subr.mxu0 0.0
      %1686 = vmatpush1.msra.mxu0 0.0
      %1687 = vmatprep.subr.mxu0 0.0
      %1688 = vmatpush1.msra.mxu0 0.0
      %1689 = vmatprep.subr.mxu0 0.0
      %1690 = vmatpush1.msra.mxu0 0.0
      %1691 = vmatprep.subr.mxu0 0.0
      %1692 = vmatpush1.msra.mxu0 0.0
      %1693 = vmatprep.subr.mxu0 0.0
      %1694 = vmatpush1.msra.mxu0 0.0
      %1695 = vmatprep.subr.mxu0 0.0
      %1696 = vmatpush1.msra.mxu0 0.0
      %1697 = vmatprep.subr.mxu0 0.0
      %1698 = vmatpush1.msra.mxu0 0.0
      %1699 = vmatprep.subr.mxu0 0.0
      %1700 = vmatpush1.msra.mxu0 0.0
      %1701 = vmatprep.subr.mxu0 0.0
      %1702 = vmatpush1.msra.mxu0 0.0
      %1703 = vmatprep.subr.mxu0 0.0
      %1704 = vmatpush1.msra.mxu0 0.0
      %1705 = vmatprep.mubr.f32.mxu0 0.0
      %1706 = vmatmul.mubr.f32.gmra.mrb[0].mxu0 %v261
      %v1707 = vpop.f32.mrb[0].mxu0
      %v1708 = vadd.f32 0.0, %v1707
      %v1709 = vpop.f32.mrb[0].mxu0
      %1710 = vmatprep.mubr.f32.mxu0 0.0
      %1711 = vmatmul.mubr.f32.gmra.mrb[0].mxu0 %v264
      %v1712 = vpop.f32.mrb[0].mxu0
      %v1713 = vadd.f32 0.0, %v1712
      %v1714 = vpop.f32.mrb[0].mxu0
      %1715 = vmatprep.mubr.f32.mxu0 0.0
      %1716 = vmatmul.mubr.f32.gmra.mrb[0].mxu0 %v267
      %v1717 = vpop.f32.mrb[0].mxu0
      %v1718 = vadd.f32 0.0, %v1717
      %v1719 = vpop.f32.mrb[0].mxu0
      %1720 = vmatprep.mubr.f32.mxu0 0.0
      %1721 = vmatmul.mubr.f32.gmra.mrb[0].mxu0 %v270
      %v1722 = vpop.f32.mrb[0].mxu0
      %v1723 = vadd.f32 0.0, %v1722
      %v1724 = vpop.f32.mrb[0].mxu0
      %1725 = vmatprep.mubr.f32.mxu0 0.0
      %1726 = vmatmul.mubr.f32.gmra.mrb[0].mxu0 %v273
      %v1727 = vpop.f32.mrb[0].mxu0
      %v1728 = vadd.f32 0.0, %v1727
      %v1729 = vpop.f32.mrb[0].mxu0
      %1730 = vmatprep.mubr.f32.mxu0 0.0
      %1731 = vmatmul.mubr.f32.gmra.mrb[0].mxu0 %v276
      %v1732 = vpop.f32.mrb[0].mxu0
      %v1733 = vadd.f32 0.0, %v1732
      %v1734 = vpop.f32.mrb[0].mxu0
      %1735 = vmatprep.mubr.f32.mxu0 0.0
      %1736 = vmatmul.mubr.f32.gmra.mrb[0].mxu0 %v279
      %v1737 = vpop.f32.mrb[0].mxu0
      %v1738 = vadd.f32 0.0, %v1737
      %v1739 = vpop.f32.mrb[0].mxu0
      %1740 = vmatprep.mubr.f32.mxu0 0.0
      %1741 = vmatmul.mubr.f32.gmra.mrb[0].mxu0 %v282
      %v1742 = vpop.f32.mrb[0].mxu0
      %v1743 = vadd.f32 0.0, %v1742
      %v1744 = vpop.f32.mrb[0].mxu0
      %1745 = vmatprep.mubr.f32.mxu0 0.0
      %1746 = vmatmul.mubr.f32.gmra.mrb[0].mxu0 %v285
      %v1747 = vpop.f32.mrb[0].mxu0
      %v1748 = vadd.f32 0.0, %v1747
      %v1749 = vpop.f32.mrb[0].mxu0
      %1750 = vmatprep.mubr.f32.mxu0 0.0
      %1751 = vmatmul.mubr.f32.gmra.mrb[0].mxu0 %v288
      %v1752 = vpop.f32.mrb[0].mxu0
      %v1753 = vadd.f32 0.0, %v1752
      %v1754 = vpop.f32.mrb[0].mxu0
      %1755 = vmatprep.mubr.f32.mxu0 0.0
      %1756 = vmatmul.mubr.f32.gmra.mrb[0].mxu0 %v291
      %v1757 = vpop.f32.mrb[0].mxu0
      %v1758 = vadd.f32 0.0, %v1757
      %v1759 = vpop.f32.mrb[0].mxu0
      %1760 = vmatprep.mubr.f32.mxu0 0.0
      %1761 = vmatmul.mubr.f32.gmra.mrb[0].mxu0 %v294
      %v1762 = vpop.f32.mrb[0].mxu0
      %v1763 = vadd.f32 0.0, %v1762
      %v1764 = vpop.f32.mrb[0].mxu0
      %1765 = vmatprep.mubr.f32.mxu0 0.0
      %1766 = vmatmul.mubr.f32.gmra.mrb[0].mxu0 %v1014
      %v1767 = vpop.f32.mrb[0].mxu0
      %v1768 = vadd.f32 0.0, %v1767
      %v1769 = vpop.f32.mrb[0].mxu0
      %1770 = vmatprep.mubr.f32.mxu0 0.0
      %1771 = vmatmul.mubr.f32.gmra.mrb[0].mxu0 %v1017
      %v1772 = vpop.f32.mrb[0].mxu0
      %v1773 = vadd.f32 0.0, %v1772
      %v1774 = vpop.f32.mrb[0].mxu0
      %1775 = vmatprep.mubr.f32.mxu0 0.0
      %1776 = vmatmul.mubr.f32.gmra.mrb[0].mxu0 %v1633
      %v1777 = vpop.f32.mrb[0].mxu0
      %v1778 = vadd.f32 0.0, %v1777
      %v1779 = vpop.f32.mrb[0].mxu0
      %1780 = vmatprep.mubr.f32.mxu0 0.0
      %1781 = vmatmul.mubr.f32.gmra.mrb[0].mxu0 %v1636
      %v1782 = vpop.f32.mrb[0].mxu0
      %v1783 = vadd.f32 0.0, %v1782
      %v1784 = vpop.f32.mrb[0].mxu0
      %1785 = vdwg.mxu0
      %v1786 = vld [vmem:[#allocation2] sm:$0xff]
      %v1787 = vld [vmem:[#allocation2 + $0x8] sm:$0xff]
      %v1788 = vld [vmem:[#allocation2 + $0x10] sm:$0xff]
      %v1789 = vld [vmem:[#allocation2 + $0x18] sm:$0xff]
      %v1790 = vld [vmem:[#allocation2 + $0x20] sm:$0xff]
      %v1791 = vld [vmem:[#allocation2 + $0x28] sm:$0xff]
      %v1792 = vld [vmem:[#allocation2 + $0x30] sm:$0xff]
      %v1793 = vld [vmem:[#allocation2 + $0x38] sm:$0xff]
      %v1794 = vld [vmem:[#allocation2 + $0x40] sm:$0xff]
      %v1795 = vld [vmem:[#allocation2 + $0x48] sm:$0xff]
      %v1796 = vld [vmem:[#allocation2 + $0x50] sm:$0xff]
      %v1797 = vld [vmem:[#allocation2 + $0x58] sm:$0xff]
      %v1798 = vld [vmem:[#allocation2 + $0x60] sm:$0xff]
      %v1799 = vld [vmem:[#allocation2 + $0x68] sm:$0xff]
      %v1800 = vld [vmem:[#allocation2 + $0x70] sm:$0xff]
      %v1801 = vld [vmem:[#allocation2 + $0x78] sm:$0xff]
      %v1802 = vadd.f32 %v1786, %v1708
      %v1803 = vadd.f32 %v1787, %v1713
      %v1804 = vadd.f32 %v1788, %v1718
      %v1805 = vadd.f32 %v1789, %v1723
      %v1806 = vadd.f32 %v1790, %v1728
      %v1807 = vadd.f32 %v1791, %v1733
      %v1808 = vadd.f32 %v1792, %v1738
      %v1809 = vadd.f32 %v1793, %v1743
      %v1810 = vadd.f32 %v1794, %v1748
      %v1811 = vadd.f32 %v1795, %v1753
      %v1812 = vadd.f32 %v1796, %v1758
      %v1813 = vadd.f32 %v1797, %v1763
      %v1814 = vadd.f32 %v1798, %v1768
      %v1815 = vadd.f32 %v1799, %v1773
      %v1816 = vadd.f32 %v1800, %v1778
      %v1817 = vadd.f32 %v1801, %v1783
      %1818 = vst [vmem:[#allocation2] sm:$0xff] %v1802
      %1819 = vst [vmem:[#allocation2 + $0x8] sm:$0xff] %v1803
      %1820 = vst [vmem:[#allocation2 + $0x10] sm:$0xff] %v1804
      %1821 = vst [vmem:[#allocation2 + $0x18] sm:$0xff] %v1805
      %1822 = vst [vmem:[#allocation2 + $0x20] sm:$0xff] %v1806
      %1823 = vst [vmem:[#allocation2 + $0x28] sm:$0xff] %v1807
      %1824 = vst [vmem:[#allocation2 + $0x30] sm:$0xff] %v1808
      %1825 = vst [vmem:[#allocation2 + $0x38] sm:$0xff] %v1809
      %1826 = vst [vmem:[#allocation2 + $0x40] sm:$0xff] %v1810
      %1827 = vst [vmem:[#allocation2 + $0x48] sm:$0xff] %v1811
      %1828 = vst [vmem:[#allocation2 + $0x50] sm:$0xff] %v1812
      %1829 = vst [vmem:[#allocation2 + $0x58] sm:$0xff] %v1813
      %1830 = vst [vmem:[#allocation2 + $0x60] sm:$0xff] %v1814
      %1831 = vst [vmem:[#allocation2 + $0x68] sm:$0xff] %v1815
      %1832 = vst [vmem:[#allocation2 + $0x70] sm:$0xff] %v1816
      %1833 = vst [vmem:[#allocation2 + $0x78] sm:$0xff] %v1817
      %v1835 = vrot.slane %v243, 1
      %v1836 = vrot.slane %v244, 1
      %v1837 = vsel %vm469, %v1835, %v1836
      %v1838 = vrot.slane %v245, 1
      %v1839 = vsel %vm469, %v1836, %v1838
      %s1840 = scalar_lea.vmem %s1, 28
      %v1841 = vld [vmem:[%s1840] sm:$0xf]
      %v1842 = vsel %vm247, %v1837, 0
      %v1844 = vsel %vm247, %v1839, 0
      %v1847 = vsel %vm296, %v1841, 0
      %1849 = vmatprep.subr.mxu0 0.0
      %1850 = vmatpush1.msra.mxu0 %v1847
      %1851 = vmatprep.subr.mxu0 0.0
      %1852 = vmatpush1.msra.mxu0 0.0
      %1853 = vmatprep.subr.mxu0 0.0
      %1854 = vmatpush1.msra.mxu0 0.0
      %1855 = vmatprep.subr.mxu0 0.0
      %1856 = vmatpush1.msra.mxu0 0.0
      %1857 = vmatprep.subr.mxu0 0.0
      %1858 = vmatpush1.msra.mxu0 0.0
      %1859 = vmatprep.subr.mxu0 0.0
      %1860 = vmatpush1.msra.mxu0 0.0
      %1861 = vmatprep.subr.mxu0 0.0
      %1862 = vmatpush1.msra.mxu0 0.0
      %1863 = vmatprep.subr.mxu0 0.0
      %1864 = vmatpush1.msra.mxu0 0.0
      %1865 = vmatprep.subr.mxu0 0.0
      %1866 = vmatpush1.msra.mxu0 0.0
      %1867 = vmatprep.subr.mxu0 0.0
      %1868 = vmatpush1.msra.mxu0 0.0
      %1869 = vmatprep.subr.mxu0 0.0
      %1870 = vmatpush1.msra.mxu0 0.0
      %1871 = vmatprep.subr.mxu0 0.0
      %1872 = vmatpush1.msra.mxu0 0.0
      %1873 = vmatprep.subr.mxu0 0.0
      %1874 = vmatpush1.msra.mxu0 0.0
      %1875 = vmatprep.subr.mxu0 0.0
      %1876 = vmatpush1.msra.mxu0 0.0
      %1877 = vmatprep.subr.mxu0 0.0
      %1878 = vmatpush1.msra.mxu0 0.0
      %1879 = vmatprep.subr.mxu0 0.0
      %1880 = vmatpush1.msra.mxu0 0.0
      %1881 = vmatprep.subr.mxu0 0.0
      %1882 = vmatpush1.msra.mxu0 0.0
      %1883 = vmatprep.subr.mxu0 0.0
      %1884 = vmatpush1.msra.mxu0 0.0
      %1885 = vmatprep.subr.mxu0 0.0
      %1886 = vmatpush1.msra.mxu0 0.0
      %1887 = vmatprep.subr.mxu0 0.0
      %1888 = vmatpush1.msra.mxu0 0.0
      %1889 = vmatprep.subr.mxu0 0.0
      %1890 = vmatpush1.msra.mxu0 0.0
      %1891 = vmatprep.subr.mxu0 0.0
      %1892 = vmatpush1.msra.mxu0 0.0
      %1893 = vmatprep.subr.mxu0 0.0
      %1894 = vmatpush1.msra.mxu0 0.0
      %1895 = vmatprep.subr.mxu0 0.0
      %1896 = vmatpush1.msra.mxu0 0.0
      %1897 = vmatprep.subr.mxu0 0.0
      %1898 = vmatpush1.msra.mxu0 0.0
      %1899 = vmatprep.subr.mxu0 0.0
      %1900 = vmatpush1.msra.mxu0 0.0
      %1901 = vmatprep.subr.mxu0 0.0
      %1902 = vmatpush1.msra.mxu0 0.0
      %1903 = vmatprep.subr.mxu0 0.0
      %1904 = vmatpush1.msra.mxu0 0.0
      %1905 = vmatprep.subr.mxu0 0.0
      %1906 = vmatpush1.msra.mxu0 0.0
      %1907 = vmatprep.subr.mxu0 0.0
      %1908 = vmatpush1.msra.mxu0 0.0
      %1909 = vmatprep.subr.mxu0 0.0
      %1910 = vmatpush1.msra.mxu0 0.0
      %1911 = vmatprep.subr.mxu0 0.0
      %1912 = vmatpush1.msra.mxu0 0.0
      %1913 = vmatprep.mubr.f32.mxu0 0.0
      %1914 = vmatmul.mubr.f32.gmra.mrb[0].mxu0 %v520
      %v1915 = vpop.f32.mrb[0].mxu0
      %v1916 = vadd.f32 0.0, %v1915
      %v1917 = vpop.f32.mrb[0].mxu0
      %1918 = vmatprep.mubr.f32.mxu0 0.0
      %1919 = vmatmul.mubr.f32.gmra.mrb[0].mxu0 %v522
      %v1920 = vpop.f32.mrb[0].mxu0
      %v1921 = vadd.f32 0.0, %v1920
      %v1922 = vpop.f32.mrb[0].mxu0
      %1923 = vmatprep.mubr.f32.mxu0 0.0
      %1924 = vmatmul.mubr.f32.gmra.mrb[0].mxu0 %v524
      %v1925 = vpop.f32.mrb[0].mxu0
      %v1926 = vadd.f32 0.0, %v1925
      %v1927 = vpop.f32.mrb[0].mxu0
      %1928 = vmatprep.mubr.f32.mxu0 0.0
      %1929 = vmatmul.mubr.f32.gmra.mrb[0].mxu0 %v526
      %v1930 = vpop.f32.mrb[0].mxu0
      %v1931 = vadd.f32 0.0, %v1930
      %v1932 = vpop.f32.mrb[0].mxu0
      %1933 = vmatprep.mubr.f32.mxu0 0.0
      %1934 = vmatmul.mubr.f32.gmra.mrb[0].mxu0 %v528
      %v1935 = vpop.f32.mrb[0].mxu0
      %v1936 = vadd.f32 0.0, %v1935
      %v1937 = vpop.f32.mrb[0].mxu0
      %1938 = vmatprep.mubr.f32.mxu0 0.0
      %1939 = vmatmul.mubr.f32.gmra.mrb[0].mxu0 %v530
      %v1940 = vpop.f32.mrb[0].mxu0
      %v1941 = vadd.f32 0.0, %v1940
      %v1942 = vpop.f32.mrb[0].mxu0
      %1943 = vmatprep.mubr.f32.mxu0 0.0
      %1944 = vmatmul.mubr.f32.gmra.mrb[0].mxu0 %v532
      %v1945 = vpop.f32.mrb[0].mxu0
      %v1946 = vadd.f32 0.0, %v1945
      %v1947 = vpop.f32.mrb[0].mxu0
      %1948 = vmatprep.mubr.f32.mxu0 0.0
      %1949 = vmatmul.mubr.f32.gmra.mrb[0].mxu0 %v534
      %v1950 = vpop.f32.mrb[0].mxu0
      %v1951 = vadd.f32 0.0, %v1950
      %v1952 = vpop.f32.mrb[0].mxu0
      %1953 = vmatprep.mubr.f32.mxu0 0.0
      %1954 = vmatmul.mubr.f32.gmra.mrb[0].mxu0 %v536
      %v1955 = vpop.f32.mrb[0].mxu0
      %v1956 = vadd.f32 0.0, %v1955
      %v1957 = vpop.f32.mrb[0].mxu0
      %1958 = vmatprep.mubr.f32.mxu0 0.0
      %1959 = vmatmul.mubr.f32.gmra.mrb[0].mxu0 %v538
      %v1960 = vpop.f32.mrb[0].mxu0
      %v1961 = vadd.f32 0.0, %v1960
      %v1962 = vpop.f32.mrb[0].mxu0
      %1963 = vmatprep.mubr.f32.mxu0 0.0
      %1964 = vmatmul.mubr.f32.gmra.mrb[0].mxu0 %v540
      %v1965 = vpop.f32.mrb[0].mxu0
      %v1966 = vadd.f32 0.0, %v1965
      %v1967 = vpop.f32.mrb[0].mxu0
      %1968 = vmatprep.mubr.f32.mxu0 0.0
      %1969 = vmatmul.mubr.f32.gmra.mrb[0].mxu0 %v542
      %v1970 = vpop.f32.mrb[0].mxu0
      %v1971 = vadd.f32 0.0, %v1970
      %v1972 = vpop.f32.mrb[0].mxu0
      %1973 = vmatprep.mubr.f32.mxu0 0.0
      %1974 = vmatmul.mubr.f32.gmra.mrb[0].mxu0 %v1223
      %v1975 = vpop.f32.mrb[0].mxu0
      %v1976 = vadd.f32 0.0, %v1975
      %v1977 = vpop.f32.mrb[0].mxu0
      %1978 = vmatprep.mubr.f32.mxu0 0.0
      %1979 = vmatmul.mubr.f32.gmra.mrb[0].mxu0 %v1225
      %v1980 = vpop.f32.mrb[0].mxu0
      %v1981 = vadd.f32 0.0, %v1980
      %v1982 = vpop.f32.mrb[0].mxu0
      %1983 = vmatprep.mubr.f32.mxu0 0.0
      %1984 = vmatmul.mubr.f32.gmra.mrb[0].mxu0 %v1842
      %v1985 = vpop.f32.mrb[0].mxu0
      %v1986 = vadd.f32 0.0, %v1985
      %v1987 = vpop.f32.mrb[0].mxu0
      %1988 = vmatprep.mubr.f32.mxu0 0.0
      %1989 = vmatmul.mubr.f32.gmra.mrb[0].mxu0 %v1844
      %v1990 = vpop.f32.mrb[0].mxu0
      %v1991 = vadd.f32 0.0, %v1990
      %v1992 = vpop.f32.mrb[0].mxu0
      %1993 = vdwg.mxu0
      %v1994 = vld [vmem:[#allocation2] sm:$0xff]
      %v1995 = vld [vmem:[#allocation2 + $0x8] sm:$0xff]
      %v1996 = vld [vmem:[#allocation2 + $0x10] sm:$0xff]
      %v1997 = vld [vmem:[#allocation2 + $0x18] sm:$0xff]
      %v1998 = vld [vmem:[#allocation2 + $0x20] sm:$0xff]
      %v1999 = vld [vmem:[#allocation2 + $0x28] sm:$0xff]
      %v2000 = vld [vmem:[#allocation2 + $0x30] sm:$0xff]
      %v2001 = vld [vmem:[#allocation2 + $0x38] sm:$0xff]
      %v2002 = vld [vmem:[#allocation2 + $0x40] sm:$0xff]
      %v2003 = vld [vmem:[#allocation2 + $0x48] sm:$0xff]
      %v2004 = vld [vmem:[#allocation2 + $0x50] sm:$0xff]
      %v2005 = vld [vmem:[#allocation2 + $0x58] sm:$0xff]
      %v2006 = vld [vmem:[#allocation2 + $0x60] sm:$0xff]
      %v2007 = vld [vmem:[#allocation2 + $0x68] sm:$0xff]
      %v2008 = vld [vmem:[#allocation2 + $0x70] sm:$0xff]
      %v2009 = vld [vmem:[#allocation2 + $0x78] sm:$0xff]
      %v2010 = vadd.f32 %v1994, %v1916
      %v2011 = vadd.f32 %v1995, %v1921
      %v2012 = vadd.f32 %v1996, %v1926
      %v2013 = vadd.f32 %v1997, %v1931
      %v2014 = vadd.f32 %v1998, %v1936
      %v2015 = vadd.f32 %v1999, %v1941
      %v2016 = vadd.f32 %v2000, %v1946
      %v2017 = vadd.f32 %v2001, %v1951
      %v2018 = vadd.f32 %v2002, %v1956
      %v2019 = vadd.f32 %v2003, %v1961
      %v2020 = vadd.f32 %v2004, %v1966
      %v2021 = vadd.f32 %v2005, %v1971
      %v2022 = vadd.f32 %v2006, %v1976
      %v2023 = vadd.f32 %v2007, %v1981
      %v2024 = vadd.f32 %v2008, %v1986
      %v2025 = vadd.f32 %v2009, %v1991
      %2026 = vst [vmem:[#allocation2] sm:$0xff] %v2010
      %2027 = vst [vmem:[#allocation2 + $0x8] sm:$0xff] %v2011
      %2028 = vst [vmem:[#allocation2 + $0x10] sm:$0xff] %v2012
      %2029 = vst [vmem:[#allocation2 + $0x18] sm:$0xff] %v2013
      %2030 = vst [vmem:[#allocation2 + $0x20] sm:$0xff] %v2014
      %2031 = vst [vmem:[#allocation2 + $0x28] sm:$0xff] %v2015
      %2032 = vst [vmem:[#allocation2 + $0x30] sm:$0xff] %v2016
      %2033 = vst [vmem:[#allocation2 + $0x38] sm:$0xff] %v2017
      %2034 = vst [vmem:[#allocation2 + $0x40] sm:$0xff] %v2018
      %2035 = vst [vmem:[#allocation2 + $0x48] sm:$0xff] %v2019
      %2036 = vst [vmem:[#allocation2 + $0x50] sm:$0xff] %v2020
      %2037 = vst [vmem:[#allocation2 + $0x58] sm:$0xff] %v2021
      %2038 = vst [vmem:[#allocation2 + $0x60] sm:$0xff] %v2022
      %2039 = vst [vmem:[#allocation2 + $0x68] sm:$0xff] %v2023
      %2040 = vst [vmem:[#allocation2 + $0x70] sm:$0xff] %v2024
      %2041 = vst [vmem:[#allocation2 + $0x78] sm:$0xff] %v2025
      %v2042 = vrot.slane %v243, 2
      %v2043 = vrot.slane %v244, 2
      %v2044 = vsel %vm740, %v2042, %v2043
      %v2045 = vrot.slane %v245, 2
      %v2046 = vsel %vm740, %v2043, %v2045
      %s2047 = scalar_lea.vmem %s1, 32
      %v2048 = vld [vmem:[%s2047] sm:$0xf]
      %v2049 = vsel %vm247, %v2044, 0
      %v2051 = vsel %vm247, %v2046, 0
      %v2054 = vsel %vm296, %v2048, 0
      %2056 = vmatprep.subr.mxu0 0.0
      %2057 = vmatpush1.msra.mxu0 %v2054
      %2058 = vmatprep.subr.mxu0 0.0
      %2059 = vmatpush1.msra.mxu0 0.0
      %2060 = vmatprep.subr.mxu0 0.0
      %2061 = vmatpush1.msra.mxu0 0.0
      %2062 = vmatprep.subr.mxu0 0.0
      %2063 = vmatpush1.msra.mxu0 0.0
      %2064 = vmatprep.subr.mxu0 0.0
      %2065 = vmatpush1.msra.mxu0 0.0
      %2066 = vmatprep.subr.mxu0 0.0
      %2067 = vmatpush1.msra.mxu0 0.0
      %2068 = vmatprep.subr.mxu0 0.0
      %2069 = vmatpush1.msra.mxu0 0.0
      %2070 = vmatprep.subr.mxu0 0.0
      %2071 = vmatpush1.msra.mxu0 0.0
      %2072 = vmatprep.subr.mxu0 0.0
      %2073 = vmatpush1.msra.mxu0 0.0
      %2074 = vmatprep.subr.mxu0 0.0
      %2075 = vmatpush1.msra.mxu0 0.0
      %2076 = vmatprep.subr.mxu0 0.0
      %2077 = vmatpush1.msra.mxu0 0.0
      %2078 = vmatprep.subr.mxu0 0.0
      %2079 = vmatpush1.msra.mxu0 0.0
      %2080 = vmatprep.subr.mxu0 0.0
      %2081 = vmatpush1.msra.mxu0 0.0
      %2082 = vmatprep.subr.mxu0 0.0
      %2083 = vmatpush1.msra.mxu0 0.0
      %2084 = vmatprep.subr.mxu0 0.0
      %2085 = vmatpush1.msra.mxu0 0.0
      %2086 = vmatprep.subr.mxu0 0.0
      %2087 = vmatpush1.msra.mxu0 0.0
      %2088 = vmatprep.subr.mxu0 0.0
      %2089 = vmatpush1.msra.mxu0 0.0
      %2090 = vmatprep.subr.mxu0 0.0
      %2091 = vmatpush1.msra.mxu0 0.0
      %2092 = vmatprep.subr.mxu0 0.0
      %2093 = vmatpush1.msra.mxu0 0.0
      %2094 = vmatprep.subr.mxu0 0.0
      %2095 = vmatpush1.msra.mxu0 0.0
      %2096 = vmatprep.subr.mxu0 0.0
      %2097 = vmatpush1.msra.mxu0 0.0
      %2098 = vmatprep.subr.mxu0 0.0
      %2099 = vmatpush1.msra.mxu0 0.0
      %2100 = vmatprep.subr.mxu0 0.0
      %2101 = vmatpush1.msra.mxu0 0.0
      %2102 = vmatprep.subr.mxu0 0.0
      %2103 = vmatpush1.msra.mxu0 0.0
      %2104 = vmatprep.subr.mxu0 0.0
      %2105 = vmatpush1.msra.mxu0 0.0
      %2106 = vmatprep.subr.mxu0 0.0
      %2107 = vmatpush1.msra.mxu0 0.0
      %2108 = vmatprep.subr.mxu0 0.0
      %2109 = vmatpush1.msra.mxu0 0.0
      %2110 = vmatprep.subr.mxu0 0.0
      %2111 = vmatpush1.msra.mxu0 0.0
      %2112 = vmatprep.subr.mxu0 0.0
      %2113 = vmatpush1.msra.mxu0 0.0
      %2114 = vmatprep.subr.mxu0 0.0
      %2115 = vmatpush1.msra.mxu0 0.0
      %2116 = vmatprep.subr.mxu0 0.0
      %2117 = vmatpush1.msra.mxu0 0.0
      %2118 = vmatprep.subr.mxu0 0.0
      %2119 = vmatpush1.msra.mxu0 0.0
      %2120 = vmatprep.mubr.f32.mxu0 0.0
      %2121 = vmatmul.mubr.f32.gmra.mrb[0].mxu0 %v791
      %v2122 = vpop.f32.mrb[0].mxu0
      %v2123 = vadd.f32 0.0, %v2122
      %v2124 = vpop.f32.mrb[0].mxu0
      %2125 = vmatprep.mubr.f32.mxu0 0.0
      %2126 = vmatmul.mubr.f32.gmra.mrb[0].mxu0 %v793
      %v2127 = vpop.f32.mrb[0].mxu0
      %v2128 = vadd.f32 0.0, %v2127
      %v2129 = vpop.f32.mrb[0].mxu0
      %2130 = vmatprep.mubr.f32.mxu0 0.0
      %2131 = vmatmul.mubr.f32.gmra.mrb[0].mxu0 %v795
      %v2132 = vpop.f32.mrb[0].mxu0
      %v2133 = vadd.f32 0.0, %v2132
      %v2134 = vpop.f32.mrb[0].mxu0
      %2135 = vmatprep.mubr.f32.mxu0 0.0
      %2136 = vmatmul.mubr.f32.gmra.mrb[0].mxu0 %v797
      %v2137 = vpop.f32.mrb[0].mxu0
      %v2138 = vadd.f32 0.0, %v2137
      %v2139 = vpop.f32.mrb[0].mxu0
      %2140 = vmatprep.mubr.f32.mxu0 0.0
      %2141 = vmatmul.mubr.f32.gmra.mrb[0].mxu0 %v799
      %v2142 = vpop.f32.mrb[0].mxu0
      %v2143 = vadd.f32 0.0, %v2142
      %v2144 = vpop.f32.mrb[0].mxu0
      %2145 = vmatprep.mubr.f32.mxu0 0.0
      %2146 = vmatmul.mubr.f32.gmra.mrb[0].mxu0 %v801
      %v2147 = vpop.f32.mrb[0].mxu0
      %v2148 = vadd.f32 0.0, %v2147
      %v2149 = vpop.f32.mrb[0].mxu0
      %2150 = vmatprep.mubr.f32.mxu0 0.0
      %2151 = vmatmul.mubr.f32.gmra.mrb[0].mxu0 %v803
      %v2152 = vpop.f32.mrb[0].mxu0
      %v2153 = vadd.f32 0.0, %v2152
      %v2154 = vpop.f32.mrb[0].mxu0
      %2155 = vmatprep.mubr.f32.mxu0 0.0
      %2156 = vmatmul.mubr.f32.gmra.mrb[0].mxu0 %v805
      %v2157 = vpop.f32.mrb[0].mxu0
      %v2158 = vadd.f32 0.0, %v2157
      %v2159 = vpop.f32.mrb[0].mxu0
      %2160 = vmatprep.mubr.f32.mxu0 0.0
      %2161 = vmatmul.mubr.f32.gmra.mrb[0].mxu0 %v807
      %v2162 = vpop.f32.mrb[0].mxu0
      %v2163 = vadd.f32 0.0, %v2162
      %v2164 = vpop.f32.mrb[0].mxu0
      %2165 = vmatprep.mubr.f32.mxu0 0.0
      %2166 = vmatmul.mubr.f32.gmra.mrb[0].mxu0 %v809
      %v2167 = vpop.f32.mrb[0].mxu0
      %v2168 = vadd.f32 0.0, %v2167
      %v2169 = vpop.f32.mrb[0].mxu0
      %2170 = vmatprep.mubr.f32.mxu0 0.0
      %2171 = vmatmul.mubr.f32.gmra.mrb[0].mxu0 %v811
      %v2172 = vpop.f32.mrb[0].mxu0
      %v2173 = vadd.f32 0.0, %v2172
      %v2174 = vpop.f32.mrb[0].mxu0
      %2175 = vmatprep.mubr.f32.mxu0 0.0
      %2176 = vmatmul.mubr.f32.gmra.mrb[0].mxu0 %v813
      %v2177 = vpop.f32.mrb[0].mxu0
      %v2178 = vadd.f32 0.0, %v2177
      %v2179 = vpop.f32.mrb[0].mxu0
      %2180 = vmatprep.mubr.f32.mxu0 0.0
      %2181 = vmatmul.mubr.f32.gmra.mrb[0].mxu0 %v1430
      %v2182 = vpop.f32.mrb[0].mxu0
      %v2183 = vadd.f32 0.0, %v2182
      %v2184 = vpop.f32.mrb[0].mxu0
      %2185 = vmatprep.mubr.f32.mxu0 0.0
      %2186 = vmatmul.mubr.f32.gmra.mrb[0].mxu0 %v1432
      %v2187 = vpop.f32.mrb[0].mxu0
      %v2188 = vadd.f32 0.0, %v2187
      %v2189 = vpop.f32.mrb[0].mxu0
      %2190 = vmatprep.mubr.f32.mxu0 0.0
      %2191 = vmatmul.mubr.f32.gmra.mrb[0].mxu0 %v2049
      %v2192 = vpop.f32.mrb[0].mxu0
      %v2193 = vadd.f32 0.0, %v2192
      %v2194 = vpop.f32.mrb[0].mxu0
      %2195 = vmatprep.mubr.f32.mxu0 0.0
      %2196 = vmatmul.mubr.f32.gmra.mrb[0].mxu0 %v2051
      %v2197 = vpop.f32.mrb[0].mxu0
      %v2198 = vadd.f32 0.0, %v2197
      %v2199 = vpop.f32.mrb[0].mxu0
      %2200 = vdwg.mxu0
      %v2201 = vld [vmem:[#allocation2] sm:$0xff]
      %v2202 = vld [vmem:[#allocation2 + $0x8] sm:$0xff]
      %v2203 = vld [vmem:[#allocation2 + $0x10] sm:$0xff]
      %v2204 = vld [vmem:[#allocation2 + $0x18] sm:$0xff]
      %v2205 = vld [vmem:[#allocation2 + $0x20] sm:$0xff]
      %v2206 = vld [vmem:[#allocation2 + $0x28] sm:$0xff]
      %v2207 = vld [vmem:[#allocation2 + $0x30] sm:$0xff]
      %v2208 = vld [vmem:[#allocation2 + $0x38] sm:$0xff]
      %v2209 = vld [vmem:[#allocation2 + $0x40] sm:$0xff]
      %v2210 = vld [vmem:[#allocation2 + $0x48] sm:$0xff]
      %v2211 = vld [vmem:[#allocation2 + $0x50] sm:$0xff]
      %v2212 = vld [vmem:[#allocation2 + $0x58] sm:$0xff]
      %v2213 = vld [vmem:[#allocation2 + $0x60] sm:$0xff]
      %v2214 = vld [vmem:[#allocation2 + $0x68] sm:$0xff]
      %v2215 = vld [vmem:[#allocation2 + $0x70] sm:$0xff]
      %v2216 = vld [vmem:[#allocation2 + $0x78] sm:$0xff]
      %v2217 = vadd.f32 %v2201, %v2123
      %v2218 = vadd.f32 %v2202, %v2128
      %v2219 = vadd.f32 %v2203, %v2133
      %v2220 = vadd.f32 %v2204, %v2138
      %v2221 = vadd.f32 %v2205, %v2143
      %v2222 = vadd.f32 %v2206, %v2148
      %v2223 = vadd.f32 %v2207, %v2153
      %v2224 = vadd.f32 %v2208, %v2158
      %v2225 = vadd.f32 %v2209, %v2163
      %v2226 = vadd.f32 %v2210, %v2168
      %v2227 = vadd.f32 %v2211, %v2173
      %v2228 = vadd.f32 %v2212, %v2178
      %v2229 = vadd.f32 %v2213, %v2183
      %v2230 = vadd.f32 %v2214, %v2188
      %v2231 = vadd.f32 %v2215, %v2193
      %v2232 = vadd.f32 %v2216, %v2198
      %2233 = vst [vmem:[#allocation2] sm:$0xff] %v2217
      %2234 = vst [vmem:[#allocation2 + $0x8] sm:$0xff] %v2218
      %2235 = vst [vmem:[#allocation2 + $0x10] sm:$0xff] %v2219
      %2236 = vst [vmem:[#allocation2 + $0x18] sm:$0xff] %v2220
      %2237 = vst [vmem:[#allocation2 + $0x20] sm:$0xff] %v2221
      %2238 = vst [vmem:[#allocation2 + $0x28] sm:$0xff] %v2222
      %2239 = vst [vmem:[#allocation2 + $0x30] sm:$0xff] %v2223
      %2240 = vst [vmem:[#allocation2 + $0x38] sm:$0xff] %v2224
      %2241 = vst [vmem:[#allocation2 + $0x40] sm:$0xff] %v2225
      %2242 = vst [vmem:[#allocation2 + $0x48] sm:$0xff] %v2226
      %2243 = vst [vmem:[#allocation2 + $0x50] sm:$0xff] %v2227
      %2244 = vst [vmem:[#allocation2 + $0x58] sm:$0xff] %v2228
      %2245 = vst [vmem:[#allocation2 + $0x60] sm:$0xff] %v2229
      %2246 = vst [vmem:[#allocation2 + $0x68] sm:$0xff] %v2230
      %2247 = vst [vmem:[#allocation2 + $0x70] sm:$0xff] %v2231
      %2248 = vst [vmem:[#allocation2 + $0x78] sm:$0xff] %v2232
      %v2249 = vld [vmem:[#allocation2] sm:$0xff]
      %v2250 = vld [vmem:[#allocation2 + $0x8] sm:$0xff]
      %v2251 = vld [vmem:[#allocation2 + $0x10] sm:$0xff]
      %v2252 = vld [vmem:[#allocation2 + $0x18] sm:$0xff]
      %v2253 = vld [vmem:[#allocation2 + $0x20] sm:$0xff]
      %v2254 = vld [vmem:[#allocation2 + $0x28] sm:$0xff]
      %v2255 = vld [vmem:[#allocation2 + $0x30] sm:$0xff]
      %v2256 = vld [vmem:[#allocation2 + $0x38] sm:$0xff]
      %v2257 = vld [vmem:[#allocation2 + $0x40] sm:$0xff]
      %v2258 = vld [vmem:[#allocation2 + $0x48] sm:$0xff]
      %v2259 = vld [vmem:[#allocation2 + $0x50] sm:$0xff]
      %v2260 = vld [vmem:[#allocation2 + $0x58] sm:$0xff]
      %v2261 = vld [vmem:[#allocation2 + $0x60] sm:$0xff]
      %v2262 = vld [vmem:[#allocation2 + $0x68] sm:$0xff]
      %v2263 = vld [vmem:[#allocation2 + $0x70] sm:$0xff]
      %v2264 = vld [vmem:[#allocation2 + $0x78] sm:$0xff]
      %2265 = vst [vmem:[%s208] sm:$0xff] %v2249
      %2266 = vst [vmem:[%s208 + $0x8] sm:$0xff] %v2250
      %2267 = vst [vmem:[%s208 + $0x10] sm:$0xff] %v2251
      %2268 = vst [vmem:[%s208 + $0x18] sm:$0xff] %v2252
      %2269 = vst [vmem:[%s208 + $0x20] sm:$0xff] %v2253
      %2270 = vst [vmem:[%s208 + $0x28] sm:$0xff] %v2254
      %2271 = vst [vmem:[%s208 + $0x30] sm:$0xff] %v2255
      %2272 = vst [vmem:[%s208 + $0x38] sm:$0xff] %v2256
      %2273 = vst [vmem:[%s208 + $0x40] sm:$0xff] %v2257
      %2274 = vst [vmem:[%s208 + $0x48] sm:$0xff] %v2258
      %2275 = vst [vmem:[%s208 + $0x50] sm:$0xff] %v2259
      %2276 = vst [vmem:[%s208 + $0x58] sm:$0xff] %v2260
      %2277 = vst [vmem:[%s208 + $0x60] sm:$0xff] %v2261
      %2278 = vst [vmem:[%s208 + $0x68] sm:$0xff] %v2262
      %2279 = vst [vmem:[%s208 + $0x70] sm:$0xff] %v2263
      %2280 = vst [vmem:[%s208 + $0x78] sm:$0xff] %v2264
      %v2281 = vadd.f32 %v2249, %v2250
      %v2282 = vadd.f32 %v2281, %v2251
      %v2283 = vadd.f32 %v2282, %v2252
      %v2284 = vadd.f32 %v2283, %v2253
      %v2285 = vadd.f32 %v2284, %v2254
      %v2286 = vadd.f32 %v2285, %v2255
      %v2287 = vadd.f32 %v2286, %v2256
      %v2288 = vadd.f32 %v2287, %v2257
      %v2289 = vadd.f32 %v2288, %v2258
      %v2290 = vadd.f32 %v2289, %v2259
      %v2291 = vadd.f32 %v2290, %v2260
      %v2292 = vadd.f32 %v2291, %v2261
      %v2293 = vadd.f32 %v2292, %v2262
      %v2294 = vadd.f32 %v2293, %v2263
      %v2295 = vadd.f32 %v2294, %v2264
      %v2296 = vrot.slane %v2295, 4
      %v2297 = vadd.f32 %v2295, %v2296
      %v2298 = vrot.slane %v2297, 2
      %v2299 = vadd.f32 %v2297, %v2298
      %v2300 = vrot.slane %v2299, 1
      %v2301 = vadd.f32 %v2299, %v2300
      %2302 = vst [vmem:[%s212] sm:$0x1] %v2301
      %v2303 = vmul.f32 %v2249, %v2249
      %v2304 = vmul.f32 %v2250, %v2250
      %v2305 = vmul.f32 %v2251, %v2251
      %v2306 = vmul.f32 %v2252, %v2252
      %v2307 = vmul.f32 %v2253, %v2253
      %v2308 = vmul.f32 %v2254, %v2254
      %v2309 = vmul.f32 %v2255, %v2255
      %v2310 = vmul.f32 %v2256, %v2256
      %v2311 = vmul.f32 %v2257, %v2257
      %v2312 = vmul.f32 %v2258, %v2258
      %v2313 = vmul.f32 %v2259, %v2259
      %v2314 = vmul.f32 %v2260, %v2260
      %v2315 = vmul.f32 %v2261, %v2261
      %v2316 = vmul.f32 %v2262, %v2262
      %v2317 = vmul.f32 %v2263, %v2263
      %v2318 = vmul.f32 %v2264, %v2264
      %v2319 = vadd.f32 %v2303, %v2304
      %v2320 = vadd.f32 %v2319, %v2305
      %v2321 = vadd.f32 %v2320, %v2306
      %v2322 = vadd.f32 %v2321, %v2307
      %v2323 = vadd.f32 %v2322, %v2308
      %v2324 = vadd.f32 %v2323, %v2309
      %v2325 = vadd.f32 %v2324, %v2310
      %v2326 = vadd.f32 %v2325, %v2311
      %v2327 = vadd.f32 %v2326, %v2312
      %v2328 = vadd.f32 %v2327, %v2313
      %v2329 = vadd.f32 %v2328, %v2314
      %v2330 = vadd.f32 %v2329, %v2315
      %v2331 = vadd.f32 %v2330, %v2316
      %v2332 = vadd.f32 %v2331, %v2317
      %v2333 = vadd.f32 %v2332, %v2318
      %v2334 = vrot.slane %v2333, 4
      %v2335 = vadd.f32 %v2333, %v2334
      %v2336 = vrot.slane %v2335, 2
      %v2337 = vadd.f32 %v2335, %v2336
      %v2338 = vrot.slane %v2337, 1
      %v2339 = vadd.f32 %v2337, %v2338
      %2340 = vst [vmem:[%s215] sm:$0x1] %v2339
      %s2341 = smul.u32 16, %s16
      %p2342 = scmp.lt.s32.totalorder %s2341, 63
      %s2343 = scalar_select %p2342, %s2341, 63
      %s2344 = smul.addr %s2343, 8
      %s2345 = scalar_lea.vmem %s2, %s2344
      %p2346 = scmp.lt.s32.totalorder %s16, 3
      %s2347 = scalar_select %p2346, %s16, 3
      %s2348 = scalar_lea.vmem %s3, %s2347
      %p2349 = scmp.lt.s32.totalorder %s16, 3
      %s2350 = scalar_select %p2349, %s16, 3
      %s2351 = scalar_lea.vmem %s4, %s2350
      // Predicated region
      $region29: #{conv_bn_2d.2} parent=27 // pred_check
        %p2352 = pneg %p81
      $region30: #{conv_bn_2d.2} parent=27 // pred_check_branch
        %2354 = sbr.rel (%p2352) target = $region32
      $region31: #{conv_bn_2d.2} parent=27 // pred_region
        %s2355 = smul.u32 16, %s16
      $region32: #{conv_bn_2d.2} parent=27 // pred_fallthru
        _
      // Predicated region
      $region33: #{conv_bn_2d.2} parent=27 // pred_check
        %p2356 = pneg %p107
      $region34: #{conv_bn_2d.2} parent=27 // pred_check_branch
        %2358 = sbr.rel (%p2356) target = $region36
      $region35: #{conv_bn_2d.2} parent=27 // pred_region
        _
      $region36: #{conv_bn_2d.2} parent=27 // pred_fallthru
        _
      // Predicated region
      $region37: #{conv_bn_2d.2} parent=27 // pred_check
        %p2359 = pneg %p133
      $region38: #{conv_bn_2d.2} parent=27 // pred_check_branch
        %2361 = sbr.rel (%p2359) target = $region40
      $region39: #{conv_bn_2d.2} parent=27 // pred_region
        _
      $region40: #{conv_bn_2d.2} parent=27 // pred_fallthru
        _
    $region28: #{conv_bn_2d.2} parent=5 // pred_fallthru
      _
    %p2362 = scmp.le.s32.totalorder 2, %s11
    // Predicated region
    $region41: #{conv_bn_2d.2} parent=5 // pred_check
      %p2363 = pneg %p2362
    $region42: #{conv_bn_2d.2} parent=5 // pred_check_branch
      %2365 = sbr.rel (%p2363) target = $region44
    $region43: #{conv_bn_2d.2} parent=5 // pred_region
      %s2366 = ssub.s32 %s11, 2
      // Predicated region
      $region45: #{conv_bn_2d.2} parent=43 // pred_check
        %p2367 = pneg %p87
      $region46: #{conv_bn_2d.2} parent=43 // pred_check_branch
        %2369 = sbr.rel (%p2367) target = $region48
      $region47: #{conv_bn_2d.2} parent=43 // pred_region
        %s2370 = smul.u32 16, %s17
        %p2371 = scmp.lt.s32.totalorder %s2370, 63
        %s2372 = scalar_select %p2371, %s2370, 63
        %s2373 = smul.addr %s2372, 8
        %s2374 = scalar_lea.vmem %s2, %s2373
      $region48: #{conv_bn_2d.2} parent=43 // pred_fallthru
        _
      // Predicated region
      $region49: #{conv_bn_2d.2} parent=43 // pred_check
        %p2375 = pneg %p113
      $region50: #{conv_bn_2d.2} parent=43 // pred_check_branch
        %2377 = sbr.rel (%p2375) target = $region52
      $region51: #{conv_bn_2d.2} parent=43 // pred_region
        %p2378 = scmp.lt.s32.totalorder %s17, 3
        %s2379 = scalar_select %p2378, %s17, 3
        %s2380 = scalar_lea.vmem %s3, %s2379
      $region52: #{conv_bn_2d.2} parent=43 // pred_fallthru
        _
      // Predicated region
      $region53: #{conv_bn_2d.2} parent=43 // pred_check
        %p2381 = pneg %p139
      $region54: #{conv_bn_2d.2} parent=43 // pred_check_branch
        %2383 = sbr.rel (%p2381) target = $region56
      $region55: #{conv_bn_2d.2} parent=43 // pred_region
        %p2384 = scmp.lt.s32.totalorder %s17, 3
        %s2385 = scalar_select %p2384, %s17, 3
        %s2386 = scalar_lea.vmem %s4, %s2385
      $region56: #{conv_bn_2d.2} parent=43 // pred_fallthru
        _
    $region44: #{conv_bn_2d.2} parent=5 // pred_fallthru
      _
  $region6: #{conv_bn_2d.2} parent=0 // loop_footer
    %s15 = sadd.s32 1, %s11
  $region7: #{conv_bn_2d.2} parent=0 // loop_footer_branch
    %10 = sbr.rel target = $region3
  $region8: #{conv_bn_2d.2} parent=0 // loop_exit
    _

</llo_original>
